<compile_context>
chip_gen: v5e
topology: v5e:2x2
jax: 0.10.0
libtpu: 0.0.40
codegen_flags: <defaults>
</compile_context>

<pallas_src>
import jax
import jax.numpy as jnp
from jax.experimental import pallas as pl
from jax.experimental.pallas import tpu as pltpu


_SUBLANE = 8
_VMEM_BUDGET = 8 * 1024 * 1024        # per-layer live-VMEM target (v7x-safe)


def _round_up(x, m):
    return (x + m - 1) // m * m


def _cdiv(a, b):
    return (a + b - 1) // b


def _make_conv_kernel(ks, s, oh, owp, nb, sc, cout):
    """Implicit-GEMM conv for one batch block (whole spatial extent in VMEM)."""
    m = nb * oh * owp
    w2 = owp + ks - 1                      # columns per phase in the fused axis

    def kernel(x_ref, w_ref, b_ref, o_ref):
        # x_ref: (nb, H2, s*W2, sC) bf16   w_ref: (T, sC, cout) bf16
        # b_ref: (1, cout) f32             o_ref: (nb, oh, owp, cout)
        acc = None
        t = 0
        for ih in range(ks):               # kernel row group
            for ph in range(s):            # row phase within the group
                for jw in range(ks):       # kernel col group (col phase in sC)
                    start = ph * w2 + jw
                    slab = x_ref[:, ih:ih + oh, start:start + owp, :]
                    slab = slab.reshape(m, sc)
                    part = jnp.dot(slab, w_ref[t],
                                   preferred_element_type=jnp.float32)
                    acc = part if acc is None else acc + part
                    t += 1
        acc = jnp.maximum(acc + b_ref[...], 0.0)
        o_ref[...] = acc.reshape(nb, oh, owp, cout).astype(o_ref.dtype)

    return kernel


def _pick_batch_block(n, per_image_bytes):
    """Batch-block size & an even (>=2) block count for the 'parallel' grid."""
    nb = max(1, min(n, _VMEM_BUDGET // max(per_image_bytes, 1)))
    nblocks = _cdiv(n, nb)
    if n > 1:
        nblocks = max(nblocks, 2)          # keep both v7x TensorCores busy
        if nblocks % 2:
            nblocks += 1
    nb = _cdiv(n, nblocks)
    return nb, nblocks


def _conv2d_relu(x, w_taps, b, k, s, out_dtype=jnp.bfloat16):
    """Valid conv (stride s) + bias + ReLU as one implicit-GEMM pallas_call."""
    assert k % s == 0, "stride folding needs k % s == 0"
    n, h, w, c = x.shape
    ks = k // s
    oh = (h - k) // s + 1
    ow = (w - k) // s + 1
    owp = _round_up(ow, _SUBLANE)          # sublane-aligned flatten / stores
    h_need = s * (oh + ks - 1)             # rows read by valid outputs
    w_real = s * (ow + ks - 1)             # cols read by valid outputs
    w_need = s * (owp + ks - 1)            # zero cols feed only padded outputs
    cout = b.shape[0]

    x = x[:, :h_need, :w_real, :]
    if w_need > w_real:
        x = jnp.pad(x, ((0, 0), (0, 0), (0, w_need - w_real), (0, 0)))

    h2 = oh + ks - 1
    w2 = owp + ks - 1
    sc = s * c
    # Free view (pure reshape): stride-s conv -> contiguous slices + sC lanes.
    xv = x.reshape(n, h2, s * w2, sc)

    in_bytes = h_need * w_need * c * xv.dtype.itemsize
    out_bytes = oh * owp * cout * jnp.dtype(out_dtype).itemsize
    acc_bytes = oh * owp * cout * 4
    nb, nblocks = _pick_batch_block(n, 2 * (in_bytes + out_bytes) + acc_bytes)
    n_pad = nb * nblocks
    if n_pad > n:
        xv = jnp.pad(xv, ((0, n_pad - n), (0, 0), (0, 0), (0, 0)))

    t_taps = ks * s * ks
    b2 = b.reshape(1, cout).astype(jnp.float32)
    kernel = _make_conv_kernel(ks, s, oh, owp, nb, sc, cout)

    out = pl.pallas_call(
        kernel,
        out_shape=jax.ShapeDtypeStruct((n_pad, oh, owp, cout), out_dtype),
        grid=(nblocks,),
        in_specs=[
            pl.BlockSpec((nb, h2, s * w2, sc), lambda i: (i, 0, 0, 0)),
            pl.BlockSpec((t_taps, sc, cout), lambda i: (0, 0, 0)),  # resident
            pl.BlockSpec((1, cout), lambda i: (0, 0)),              # resident
        ],
        out_specs=pl.BlockSpec((nb, oh, owp, cout), lambda i: (i, 0, 0, 0)),
        compiler_params=pltpu.CompilerParams(
            dimension_semantics=("parallel",),
            vmem_limit_bytes=32 * 1024 * 1024),
    )(xv, w_taps, b2)

    return out[:n, :, :ow, :]


def _init_conv_params(key, cin, cout, k, s, scale=1.0):
    """PyTorch Conv2d-style init reorganized into the implicit-GEMM tap layout."""
    ks = k // s
    kw_key, kb_key = jax.random.split(key)
    fan_in = cin * k * k
    bound = 1.0 / (fan_in ** 0.5)
    # PyTorch layout (Cout, Cin, kh, kw) -> (kh, kw, cin, cout)
    w_torch = jax.random.uniform(kw_key, (cout, cin, k, k), jnp.float32,
                                 -bound, bound)
    wt = jnp.transpose(w_torch, (2, 3, 1, 0))
    wt = wt.reshape(ks, s, ks, s, cin, cout)        # (ih, ph, jw, pw, cin, cout)
    wt = wt.reshape(ks * s * ks, s * cin, cout)     # (taps, s*cin, cout)
    wt = (wt * scale).astype(jnp.bfloat16)          # fold 1/255 into conv1
    bias = jax.random.uniform(kb_key, (cout,), jnp.float32, -bound, bound)
    return wt, bias


def init_cnn_encoder_params(key, in_channels):
    k1, k2, k3 = jax.random.split(key, 3)
    w1, b1 = _init_conv_params(k1, in_channels, 32, 8, 4, scale=1.0 / 255.0)
    w2, b2 = _init_conv_params(k2, 32, 64, 4, 2)
    w3, b3 = _init_conv_params(k3, 64, 64, 3, 1)
    return dict(w1=w1, b1=b1, w2=w2, b2=b2, w3=w3, b3=b3)


@jax.jit
def cnn_encoder_forward(x, params):
    """x: (N, H, W, C) or (H, W, C) raw pixel values; returns (N, features)."""
    if x.ndim == 3:
        x = x[None]
    x = x.astype(jnp.bfloat16)            # raw pixels; /255 folded into conv1
    h = _conv2d_relu(x, params["w1"], params["b1"], k=8, s=4)
    h = _conv2d_relu(h, params["w2"], params["b2"], k=4, s=2)
    h = _conv2d_relu(h, params["w3"], params["b3"], k=3, s=1,
                     out_dtype=jnp.float32)
    # Flatten exactly like PyTorch (NCHW flatten: channel-major, then H, W).
    h = jnp.transpose(h, (0, 3, 1, 2))
    return h.reshape(h.shape[0], -1)


# ----------------------- pure-JAX reference (for checking) -----------------

def _taps_to_full(w_taps, cin, cout, k, s):
    ks = k // s
    wt = w_taps.astype(jnp.float32).reshape(ks, s, ks, s, cin, cout)
    return wt.reshape(k, k, cin, cout)    # HWIO


def _reference_forward(x, params, in_channels):
    if x.ndim == 3:
        x = x[None]
    h = x.astype(jnp.bfloat16).astype(jnp.float32)
    cfg = [("w1", "b1", in_channels, 32, 8, 4),
           ("w2", "b2", 32, 64, 4, 2),
           ("w3", "b3", 64, 64, 3, 1)]
    for wname, bname, cin, cout, k, s in cfg:
        wf = _taps_to_full(params[wname], cin, cout, k, s)
        h = jax.lax.conv_general_dilated(
            h, wf, window_strides=(s, s), padding="VALID",
            dimension_numbers=("NHWC", "HWIO", "NHWC"))
        h = jnp.maximum(h + params[bname].reshape(1, 1, 1, cout), 0.0)
    h = jnp.transpose(h, (0, 3, 1, 2))
    return h.reshape(h.shape[0], -1)


if __name__ == "__main__":
    # Smallest spatial size that survives the conv stack: 36 -> 8 -> 3 -> 1.
    N, H, W, C = 2, 36, 36, 4
    key = jax.random.PRNGKey(0)
    pkey, xkey = jax.random.split(key)

    params = init_cnn_encoder_params(pkey, in_channels=C)
    x = jax.random.uniform(xkey, (N, H, W, C), jnp.float32, 0.0, 255.0)

    out = jax.block_until_ready(cnn_encoder_forward(x, params))
    assert out.shape == (N, 64 * 1 * 1), out.shape
    assert bool(jnp.all(jnp.isfinite(out)))

    ref = jax.block_until_ready(_reference_forward(x, params, in_channels=C))
    assert bool(jnp.allclose(out, ref, rtol=5e-2, atol=5e-2)), (
        float(jnp.max(jnp.abs(out - ref))))

    print("KERNEL_OK")
</pallas_src>

<mosaic_0001>
module attributes {stable_mosaic.version = 11 : i64} {
  func.func @kernel(%arg0: i32, %arg1: memref<1x9x36x16xbf16, #tpu.memory_space<vmem>>, %arg2: memref<16x16x32xbf16, #tpu.memory_space<vmem>>, %arg3: memref<1x32xf32, #tpu.memory_space<vmem>>, %arg4: memref<1x8x8x32xbf16, #tpu.memory_space<vmem>>) attributes {dimension_semantics = [#tpu.dimension_semantics<parallel>], iteration_bounds = array<i64: 2>, scalar_prefetch = 0 : i64, scratch_operands = 0 : i64, tpu.core_type = #tpu.core_type<tc>, window_params = [{transform_indices = @transform_0, window_bounds = array<i64: 1, 9, 36, 16>}, {pipeline_mode = #tpu.pipeline_mode<synchronous>, transform_indices = @transform_1, window_bounds = array<i64: 16, 16, 32>}, {pipeline_mode = #tpu.pipeline_mode<synchronous>, transform_indices = @transform_2, window_bounds = array<i64: 1, 32>}, {transform_indices = @transform_3, window_bounds = array<i64: 1, 8, 8, 32>}]} {
    %c0 = arith.constant 0 : index
    %c0_0 = arith.constant 0 : index
    %c0_1 = arith.constant 0 : index
    %c0_2 = arith.constant 0 : index
    %0 = vector.load %arg1[%c0, %c0_0, %c0_1, %c0_2] : memref<1x9x36x16xbf16, #tpu.memory_space<vmem>>, vector<1x8x8x16xbf16>
    %1 = vector.shape_cast %0 : vector<1x8x8x16xbf16> to vector<64x16xbf16>
    %c0_3 = arith.constant 0 : index
    %c0_4 = arith.constant 0 : index
    %c0_5 = arith.constant 0 : index
    %2 = vector.load %arg2[%c0_3, %c0_4, %c0_5] : memref<16x16x32xbf16, #tpu.memory_space<vmem>>, vector<1x16x32xbf16>
    %3 = vector.shape_cast %2 : vector<1x16x32xbf16> to vector<16x32xbf16>
    %cst = arith.constant dense<0.000000e+00> : vector<64x32xf32>
    %4 = tpu.matmul %1, %3, %cst {dimension_numbers = #tpu.dot_dimension_numbers<[1], [0], [0], [1], [0, 0, 1, 1], [], []>} : vector<64x16xbf16>, vector<16x32xbf16>, vector<64x32xf32> -> vector<64x32xf32>
    %c0_6 = arith.constant 0 : index
    %c0_7 = arith.constant 0 : index
    %c1 = arith.constant 1 : index
    %c0_8 = arith.constant 0 : index
    %5 = vector.load %arg1[%c0_6, %c0_7, %c1, %c0_8] : memref<1x9x36x16xbf16, #tpu.memory_space<vmem>>, vector<1x8x8x16xbf16>
    %6 = vector.shape_cast %5 : vector<1x8x8x16xbf16> to vector<64x16xbf16>
    %c1_9 = arith.constant 1 : index
    %c0_10 = arith.constant 0 : index
    %c0_11 = arith.constant 0 : index
    %7 = vector.load %arg2[%c1_9, %c0_10, %c0_11] : memref<16x16x32xbf16, #tpu.memory_space<vmem>>, vector<1x16x32xbf16>
    %8 = vector.shape_cast %7 : vector<1x16x32xbf16> to vector<16x32xbf16>
    %cst_12 = arith.constant dense<0.000000e+00> : vector<64x32xf32>
    %9 = tpu.matmul %6, %8, %cst_12 {dimension_numbers = #tpu.dot_dimension_numbers<[1], [0], [0], [1], [0, 0, 1, 1], [], []>} : vector<64x16xbf16>, vector<16x32xbf16>, vector<64x32xf32> -> vector<64x32xf32>
    %10 = arith.addf %4, %9 : vector<64x32xf32>
    %c0_13 = arith.constant 0 : index
    %c0_14 = arith.constant 0 : index
    %c9 = arith.constant 9 : index
    %c0_15 = arith.constant 0 : index
    %11 = vector.load %arg1[%c0_13, %c0_14, %c9, %c0_15] : memref<1x9x36x16xbf16, #tpu.memory_space<vmem>>, vector<1x8x8x16xbf16>
    %12 = vector.shape_cast %11 : vector<1x8x8x16xbf16> to vector<64x16xbf16>
    %c2 = arith.constant 2 : index
    %c0_16 = arith.constant 0 : index
    %c0_17 = arith.constant 0 : index
    %13 = vector.load %arg2[%c2, %c0_16, %c0_17] : memref<16x16x32xbf16, #tpu.memory_space<vmem>>, vector<1x16x32xbf16>
    %14 = vector.shape_cast %13 : vector<1x16x32xbf16> to vector<16x32xbf16>
    %cst_18 = arith.constant dense<0.000000e+00> : vector<64x32xf32>
    %15 = tpu.matmul %12, %14, %cst_18 {dimension_numbers = #tpu.dot_dimension_numbers<[1], [0], [0], [1], [0, 0, 1, 1], [], []>} : vector<64x16xbf16>, vector<16x32xbf16>, vector<64x32xf32> -> vector<64x32xf32>
    %16 = arith.addf %10, %15 : vector<64x32xf32>
    %c0_19 = arith.constant 0 : index
    %c0_20 = arith.constant 0 : index
    %c10 = arith.constant 10 : index
    %c0_21 = arith.constant 0 : index
    %17 = vector.load %arg1[%c0_19, %c0_20, %c10, %c0_21] : memref<1x9x36x16xbf16, #tpu.memory_space<vmem>>, vector<1x8x8x16xbf16>
    %18 = vector.shape_cast %17 : vector<1x8x8x16xbf16> to vector<64x16xbf16>
    %c3 = arith.constant 3 : index
    %c0_22 = arith.constant 0 : index
    %c0_23 = arith.constant 0 : index
    %19 = vector.load %arg2[%c3, %c0_22, %c0_23] : memref<16x16x32xbf16, #tpu.memory_space<vmem>>, vector<1x16x32xbf16>
    %20 = vector.shape_cast %19 : vector<1x16x32xbf16> to vector<16x32xbf16>
    %cst_24 = arith.constant dense<0.000000e+00> : vector<64x32xf32>
    %21 = tpu.matmul %18, %20, %cst_24 {dimension_numbers = #tpu.dot_dimension_numbers<[1], [0], [0], [1], [0, 0, 1, 1], [], []>} : vector<64x16xbf16>, vector<16x32xbf16>, vector<64x32xf32> -> vector<64x32xf32>
    %22 = arith.addf %16, %21 : vector<64x32xf32>
    %c0_25 = arith.constant 0 : index
    %c0_26 = arith.constant 0 : index
    %c18 = arith.constant 18 : index
    %c0_27 = arith.constant 0 : index
    %23 = vector.load %arg1[%c0_25, %c0_26, %c18, %c0_27] : memref<1x9x36x16xbf16, #tpu.memory_space<vmem>>, vector<1x8x8x16xbf16>
    %24 = vector.shape_cast %23 : vector<1x8x8x16xbf16> to vector<64x16xbf16>
    %c4 = arith.constant 4 : index
    %c0_28 = arith.constant 0 : index
    %c0_29 = arith.constant 0 : index
    %25 = vector.load %arg2[%c4, %c0_28, %c0_29] : memref<16x16x32xbf16, #tpu.memory_space<vmem>>, vector<1x16x32xbf16>
    %26 = vector.shape_cast %25 : vector<1x16x32xbf16> to vector<16x32xbf16>
    %cst_30 = arith.constant dense<0.000000e+00> : vector<64x32xf32>
    %27 = tpu.matmul %24, %26, %cst_30 {dimension_numbers = #tpu.dot_dimension_numbers<[1], [0], [0], [1], [0, 0, 1, 1], [], []>} : vector<64x16xbf16>, vector<16x32xbf16>, vector<64x32xf32> -> vector<64x32xf32>
    %28 = arith.addf %22, %27 : vector<64x32xf32>
    %c0_31 = arith.constant 0 : index
    %c0_32 = arith.constant 0 : index
    %c19 = arith.constant 19 : index
    %c0_33 = arith.constant 0 : index
    %29 = vector.load %arg1[%c0_31, %c0_32, %c19, %c0_33] : memref<1x9x36x16xbf16, #tpu.memory_space<vmem>>, vector<1x8x8x16xbf16>
    %30 = vector.shape_cast %29 : vector<1x8x8x16xbf16> to vector<64x16xbf16>
    %c5 = arith.constant 5 : index
    %c0_34 = arith.constant 0 : index
    %c0_35 = arith.constant 0 : index
    %31 = vector.load %arg2[%c5, %c0_34, %c0_35] : memref<16x16x32xbf16, #tpu.memory_space<vmem>>, vector<1x16x32xbf16>
    %32 = vector.shape_cast %31 : vector<1x16x32xbf16> to vector<16x32xbf16>
    %cst_36 = arith.constant dense<0.000000e+00> : vector<64x32xf32>
    %33 = tpu.matmul %30, %32, %cst_36 {dimension_numbers = #tpu.dot_dimension_numbers<[1], [0], [0], [1], [0, 0, 1, 1], [], []>} : vector<64x16xbf16>, vector<16x32xbf16>, vector<64x32xf32> -> vector<64x32xf32>
    %34 = arith.addf %28, %33 : vector<64x32xf32>
    %c0_37 = arith.constant 0 : index
    %c0_38 = arith.constant 0 : index
    %c27 = arith.constant 27 : index
    %c0_39 = arith.constant 0 : index
    %35 = vector.load %arg1[%c0_37, %c0_38, %c27, %c0_39] : memref<1x9x36x16xbf16, #tpu.memory_space<vmem>>, vector<1x8x8x16xbf16>
    %36 = vector.shape_cast %35 : vector<1x8x8x16xbf16> to vector<64x16xbf16>
    %c6 = arith.constant 6 : index
    %c0_40 = arith.constant 0 : index
    %c0_41 = arith.constant 0 : index
    %37 = vector.load %arg2[%c6, %c0_40, %c0_41] : memref<16x16x32xbf16, #tpu.memory_space<vmem>>, vector<1x16x32xbf16>
    %38 = vector.shape_cast %37 : vector<1x16x32xbf16> to vector<16x32xbf16>
    %cst_42 = arith.constant dense<0.000000e+00> : vector<64x32xf32>
    %39 = tpu.matmul %36, %38, %cst_42 {dimension_numbers = #tpu.dot_dimension_numbers<[1], [0], [0], [1], [0, 0, 1, 1], [], []>} : vector<64x16xbf16>, vector<16x32xbf16>, vector<64x32xf32> -> vector<64x32xf32>
    %40 = arith.addf %34, %39 : vector<64x32xf32>
    %c0_43 = arith.constant 0 : index
    %c0_44 = arith.constant 0 : index
    %c28 = arith.constant 28 : index
    %c0_45 = arith.constant 0 : index
    %41 = vector.load %arg1[%c0_43, %c0_44, %c28, %c0_45] : memref<1x9x36x16xbf16, #tpu.memory_space<vmem>>, vector<1x8x8x16xbf16>
    %42 = vector.shape_cast %41 : vector<1x8x8x16xbf16> to vector<64x16xbf16>
    %c7 = arith.constant 7 : index
    %c0_46 = arith.constant 0 : index
    %c0_47 = arith.constant 0 : index
    %43 = vector.load %arg2[%c7, %c0_46, %c0_47] : memref<16x16x32xbf16, #tpu.memory_space<vmem>>, vector<1x16x32xbf16>
    %44 = vector.shape_cast %43 : vector<1x16x32xbf16> to vector<16x32xbf16>
    %cst_48 = arith.constant dense<0.000000e+00> : vector<64x32xf32>
    %45 = tpu.matmul %42, %44, %cst_48 {dimension_numbers = #tpu.dot_dimension_numbers<[1], [0], [0], [1], [0, 0, 1, 1], [], []>} : vector<64x16xbf16>, vector<16x32xbf16>, vector<64x32xf32> -> vector<64x32xf32>
    %46 = arith.addf %40, %45 : vector<64x32xf32>
    %c0_49 = arith.constant 0 : index
    %c1_50 = arith.constant 1 : index
    %c0_51 = arith.constant 0 : index
    %c0_52 = arith.constant 0 : index
    %47 = vector.load %arg1[%c0_49, %c1_50, %c0_51, %c0_52] : memref<1x9x36x16xbf16, #tpu.memory_space<vmem>>, vector<1x8x8x16xbf16>
    %48 = vector.shape_cast %47 : vector<1x8x8x16xbf16> to vector<64x16xbf16>
    %c8 = arith.constant 8 : index
    %c0_53 = arith.constant 0 : index
    %c0_54 = arith.constant 0 : index
    %49 = vector.load %arg2[%c8, %c0_53, %c0_54] : memref<16x16x32xbf16, #tpu.memory_space<vmem>>, vector<1x16x32xbf16>
    %50 = vector.shape_cast %49 : vector<1x16x32xbf16> to vector<16x32xbf16>
    %cst_55 = arith.constant dense<0.000000e+00> : vector<64x32xf32>
    %51 = tpu.matmul %48, %50, %cst_55 {dimension_numbers = #tpu.dot_dimension_numbers<[1], [0], [0], [1], [0, 0, 1, 1], [], []>} : vector<64x16xbf16>, vector<16x32xbf16>, vector<64x32xf32> -> vector<64x32xf32>
    %52 = arith.addf %46, %51 : vector<64x32xf32>
    %c0_56 = arith.constant 0 : index
    %c1_57 = arith.constant 1 : index
    %c1_58 = arith.constant 1 : index
    %c0_59 = arith.constant 0 : index
    %53 = vector.load %arg1[%c0_56, %c1_57, %c1_58, %c0_59] : memref<1x9x36x16xbf16, #tpu.memory_space<vmem>>, vector<1x8x8x16xbf16>
    %54 = vector.shape_cast %53 : vector<1x8x8x16xbf16> to vector<64x16xbf16>
    %c9_60 = arith.constant 9 : index
    %c0_61 = arith.constant 0 : index
    %c0_62 = arith.constant 0 : index
    %55 = vector.load %arg2[%c9_60, %c0_61, %c0_62] : memref<16x16x32xbf16, #tpu.memory_space<vmem>>, vector<1x16x32xbf16>
    %56 = vector.shape_cast %55 : vector<1x16x32xbf16> to vector<16x32xbf16>
    %cst_63 = arith.constant dense<0.000000e+00> : vector<64x32xf32>
    %57 = tpu.matmul %54, %56, %cst_63 {dimension_numbers = #tpu.dot_dimension_numbers<[1], [0], [0], [1], [0, 0, 1, 1], [], []>} : vector<64x16xbf16>, vector<16x32xbf16>, vector<64x32xf32> -> vector<64x32xf32>
    %58 = arith.addf %52, %57 : vector<64x32xf32>
    %c0_64 = arith.constant 0 : index
    %c1_65 = arith.constant 1 : index
    %c9_66 = arith.constant 9 : index
    %c0_67 = arith.constant 0 : index
    %59 = vector.load %arg1[%c0_64, %c1_65, %c9_66, %c0_67] : memref<1x9x36x16xbf16, #tpu.memory_space<vmem>>, vector<1x8x8x16xbf16>
    %60 = vector.shape_cast %59 : vector<1x8x8x16xbf16> to vector<64x16xbf16>
    %c10_68 = arith.constant 10 : index
    %c0_69 = arith.constant 0 : index
    %c0_70 = arith.constant 0 : index
    %61 = vector.load %arg2[%c10_68, %c0_69, %c0_70] : memref<16x16x32xbf16, #tpu.memory_space<vmem>>, vector<1x16x32xbf16>
    %62 = vector.shape_cast %61 : vector<1x16x32xbf16> to vector<16x32xbf16>
    %cst_71 = arith.constant dense<0.000000e+00> : vector<64x32xf32>
    %63 = tpu.matmul %60, %62, %cst_71 {dimension_numbers = #tpu.dot_dimension_numbers<[1], [0], [0], [1], [0, 0, 1, 1], [], []>} : vector<64x16xbf16>, vector<16x32xbf16>, vector<64x32xf32> -> vector<64x32xf32>
    %64 = arith.addf %58, %63 : vector<64x32xf32>
    %c0_72 = arith.constant 0 : index
    %c1_73 = arith.constant 1 : index
    %c10_74 = arith.constant 10 : index
    %c0_75 = arith.constant 0 : index
    %65 = vector.load %arg1[%c0_72, %c1_73, %c10_74, %c0_75] : memref<1x9x36x16xbf16, #tpu.memory_space<vmem>>, vector<1x8x8x16xbf16>
    %66 = vector.shape_cast %65 : vector<1x8x8x16xbf16> to vector<64x16xbf16>
    %c11 = arith.constant 11 : index
    %c0_76 = arith.constant 0 : index
    %c0_77 = arith.constant 0 : index
    %67 = vector.load %arg2[%c11, %c0_76, %c0_77] : memref<16x16x32xbf16, #tpu.memory_space<vmem>>, vector<1x16x32xbf16>
    %68 = vector.shape_cast %67 : vector<1x16x32xbf16> to vector<16x32xbf16>
    %cst_78 = arith.constant dense<0.000000e+00> : vector<64x32xf32>
    %69 = tpu.matmul %66, %68, %cst_78 {dimension_numbers = #tpu.dot_dimension_numbers<[1], [0], [0], [1], [0, 0, 1, 1], [], []>} : vector<64x16xbf16>, vector<16x32xbf16>, vector<64x32xf32> -> vector<64x32xf32>
    %70 = arith.addf %64, %69 : vector<64x32xf32>
    %c0_79 = arith.constant 0 : index
    %c1_80 = arith.constant 1 : index
    %c18_81 = arith.constant 18 : index
    %c0_82 = arith.constant 0 : index
    %71 = vector.load %arg1[%c0_79, %c1_80, %c18_81, %c0_82] : memref<1x9x36x16xbf16, #tpu.memory_space<vmem>>, vector<1x8x8x16xbf16>
    %72 = vector.shape_cast %71 : vector<1x8x8x16xbf16> to vector<64x16xbf16>
    %c12 = arith.constant 12 : index
    %c0_83 = arith.constant 0 : index
    %c0_84 = arith.constant 0 : index
    %73 = vector.load %arg2[%c12, %c0_83, %c0_84] : memref<16x16x32xbf16, #tpu.memory_space<vmem>>, vector<1x16x32xbf16>
    %74 = vector.shape_cast %73 : vector<1x16x32xbf16> to vector<16x32xbf16>
    %cst_85 = arith.constant dense<0.000000e+00> : vector<64x32xf32>
    %75 = tpu.matmul %72, %74, %cst_85 {dimension_numbers = #tpu.dot_dimension_numbers<[1], [0], [0], [1], [0, 0, 1, 1], [], []>} : vector<64x16xbf16>, vector<16x32xbf16>, vector<64x32xf32> -> vector<64x32xf32>
    %76 = arith.addf %70, %75 : vector<64x32xf32>
    %c0_86 = arith.constant 0 : index
    %c1_87 = arith.constant 1 : index
    %c19_88 = arith.constant 19 : index
    %c0_89 = arith.constant 0 : index
    %77 = vector.load %arg1[%c0_86, %c1_87, %c19_88, %c0_89] : memref<1x9x36x16xbf16, #tpu.memory_space<vmem>>, vector<1x8x8x16xbf16>
    %78 = vector.shape_cast %77 : vector<1x8x8x16xbf16> to vector<64x16xbf16>
    %c13 = arith.constant 13 : index
    %c0_90 = arith.constant 0 : index
    %c0_91 = arith.constant 0 : index
    %79 = vector.load %arg2[%c13, %c0_90, %c0_91] : memref<16x16x32xbf16, #tpu.memory_space<vmem>>, vector<1x16x32xbf16>
    %80 = vector.shape_cast %79 : vector<1x16x32xbf16> to vector<16x32xbf16>
    %cst_92 = arith.constant dense<0.000000e+00> : vector<64x32xf32>
    %81 = tpu.matmul %78, %80, %cst_92 {dimension_numbers = #tpu.dot_dimension_numbers<[1], [0], [0], [1], [0, 0, 1, 1], [], []>} : vector<64x16xbf16>, vector<16x32xbf16>, vector<64x32xf32> -> vector<64x32xf32>
    %82 = arith.addf %76, %81 : vector<64x32xf32>
    %c0_93 = arith.constant 0 : index
    %c1_94 = arith.constant 1 : index
    %c27_95 = arith.constant 27 : index
    %c0_96 = arith.constant 0 : index
    %83 = vector.load %arg1[%c0_93, %c1_94, %c27_95, %c0_96] : memref<1x9x36x16xbf16, #tpu.memory_space<vmem>>, vector<1x8x8x16xbf16>
    %84 = vector.shape_cast %83 : vector<1x8x8x16xbf16> to vector<64x16xbf16>
    %c14 = arith.constant 14 : index
    %c0_97 = arith.constant 0 : index
    %c0_98 = arith.constant 0 : index
    %85 = vector.load %arg2[%c14, %c0_97, %c0_98] : memref<16x16x32xbf16, #tpu.memory_space<vmem>>, vector<1x16x32xbf16>
    %86 = vector.shape_cast %85 : vector<1x16x32xbf16> to vector<16x32xbf16>
    %cst_99 = arith.constant dense<0.000000e+00> : vector<64x32xf32>
    %87 = tpu.matmul %84, %86, %cst_99 {dimension_numbers = #tpu.dot_dimension_numbers<[1], [0], [0], [1], [0, 0, 1, 1], [], []>} : vector<64x16xbf16>, vector<16x32xbf16>, vector<64x32xf32> -> vector<64x32xf32>
    %88 = arith.addf %82, %87 : vector<64x32xf32>
    %c0_100 = arith.constant 0 : index
    %c1_101 = arith.constant 1 : index
    %c28_102 = arith.constant 28 : index
    %c0_103 = arith.constant 0 : index
    %89 = vector.load %arg1[%c0_100, %c1_101, %c28_102, %c0_103] : memref<1x9x36x16xbf16, #tpu.memory_space<vmem>>, vector<1x8x8x16xbf16>
    %90 = vector.shape_cast %89 : vector<1x8x8x16xbf16> to vector<64x16xbf16>
    %c15 = arith.constant 15 : index
    %c0_104 = arith.constant 0 : index
    %c0_105 = arith.constant 0 : index
    %91 = vector.load %arg2[%c15, %c0_104, %c0_105] : memref<16x16x32xbf16, #tpu.memory_space<vmem>>, vector<1x16x32xbf16>
    %92 = vector.shape_cast %91 : vector<1x16x32xbf16> to vector<16x32xbf16>
    %cst_106 = arith.constant dense<0.000000e+00> : vector<64x32xf32>
    %93 = tpu.matmul %90, %92, %cst_106 {dimension_numbers = #tpu.dot_dimension_numbers<[1], [0], [0], [1], [0, 0, 1, 1], [], []>} : vector<64x16xbf16>, vector<16x32xbf16>, vector<64x32xf32> -> vector<64x32xf32>
    %94 = arith.addf %88, %93 : vector<64x32xf32>
    %c0_107 = arith.constant 0 : index
    %c0_108 = arith.constant 0 : index
    %95 = vector.load %arg3[%c0_107, %c0_108] : memref<1x32xf32, #tpu.memory_space<vmem>>, vector<1x32xf32>
    %96 = vector.broadcast %95 : vector<1x32xf32> to vector<64x32xf32>
    %97 = arith.addf %94, %96 : vector<64x32xf32>
    %cst_109 = arith.constant 0.000000e+00 : f32
    %98 = vector.broadcast %cst_109 : f32 to vector<64x32xf32>
    %99 = arith.maximumf %97, %98 : vector<64x32xf32>
    %100 = vector.shape_cast %99 : vector<64x32xf32> to vector<1x8x8x32xf32>
    %101 = arith.truncf %100 : vector<1x8x8x32xf32> to vector<1x8x8x32xbf16>
    %c0_110 = arith.constant 0 : index
    %c0_111 = arith.constant 0 : index
    %c0_112 = arith.constant 0 : index
    %c0_113 = arith.constant 0 : index
    %102 = vector.load %arg4[%c0_110, %c0_111, %c0_112, %c0_113] : memref<1x8x8x32xbf16, #tpu.memory_space<vmem>>, vector<1x8x8x32xbf16>
    tpu.vector_store %arg4[%c0_110, %c0_111, %c0_112, %c0_113], %101 {strides = array<i32>} : memref<1x8x8x32xbf16, #tpu.memory_space<vmem>>, vector<1x8x8x32xbf16>,
    return
  }
  func.func @transform_0(%arg0: i32) -> (i32, i32, i32, i32) {
    %c0_i32 = arith.constant 0 : i32
    %c0_i32_0 = arith.constant 0 : i32
    %c0_i32_1 = arith.constant 0 : i32
    %c0_i32_2 = arith.constant 0 : i32
    return %arg0, %c0_i32, %c0_i32_0, %c0_i32_1 : i32, i32, i32, i32
  }
  func.func @transform_1(%arg0: i32) -> (i32, i32, i32) {
    %c0_i32 = arith.constant 0 : i32
    %c0_i32_0 = arith.constant 0 : i32
    %c0_i32_1 = arith.constant 0 : i32
    %c0_i32_2 = arith.constant 0 : i32
    return %c0_i32, %c0_i32_0, %c0_i32_1 : i32, i32, i32
  }
  func.func @transform_2(%arg0: i32) -> (i32, i32) {
    %c0_i32 = arith.constant 0 : i32
    %c0_i32_0 = arith.constant 0 : i32
    %c0_i32_1 = arith.constant 0 : i32
    return %c0_i32, %c0_i32_0 : i32, i32
  }
  func.func @transform_3(%arg0: i32) -> (i32, i32, i32, i32) {
    %c0_i32 = arith.constant 0 : i32
    %c0_i32_0 = arith.constant 0 : i32
    %c0_i32_1 = arith.constant 0 : i32
    %c0_i32_2 = arith.constant 0 : i32
    return %arg0, %c0_i32, %c0_i32_0, %c0_i32_1 : i32, i32, i32, i32
  }
}

module attributes {stable_mosaic.version = 11 : i64} {
  func.func @kernel(%arg0: i32, %arg1: memref<1x4x18x64xbf16, #tpu.memory_space<vmem>>, %arg2: memref<8x64x64xbf16, #tpu.memory_space<vmem>>, %arg3: memref<1x64xf32, #tpu.memory_space<vmem>>, %arg4: memref<1x3x8x64xbf16, #tpu.memory_space<vmem>>) attributes {dimension_semantics = [#tpu.dimension_semantics<parallel>], iteration_bounds = array<i64: 2>, scalar_prefetch = 0 : i64, scratch_operands = 0 : i64, tpu.core_type = #tpu.core_type<tc>, window_params = [{transform_indices = @transform_0, window_bounds = array<i64: 1, 4, 18, 64>}, {pipeline_mode = #tpu.pipeline_mode<synchronous>, transform_indices = @transform_1, window_bounds = array<i64: 8, 64, 64>}, {pipeline_mode = #tpu.pipeline_mode<synchronous>, transform_indices = @transform_2, window_bounds = array<i64: 1, 64>}, {transform_indices = @transform_3, window_bounds = array<i64: 1, 3, 8, 64>}]} {
    %c0 = arith.constant 0 : index
    %c0_0 = arith.constant 0 : index
    %c0_1 = arith.constant 0 : index
    %c0_2 = arith.constant 0 : index
    %0 = vector.load %arg1[%c0, %c0_0, %c0_1, %c0_2] : memref<1x4x18x64xbf16, #tpu.memory_space<vmem>>, vector<1x3x8x64xbf16>
    %1 = vector.shape_cast %0 : vector<1x3x8x64xbf16> to vector<24x64xbf16>
    %c0_3 = arith.constant 0 : index
    %c0_4 = arith.constant 0 : index
    %c0_5 = arith.constant 0 : index
    %2 = vector.load %arg2[%c0_3, %c0_4, %c0_5] : memref<8x64x64xbf16, #tpu.memory_space<vmem>>, vector<1x64x64xbf16>
    %3 = vector.shape_cast %2 : vector<1x64x64xbf16> to vector<64x64xbf16>
    %cst = arith.constant dense<0.000000e+00> : vector<24x64xf32>
    %4 = tpu.matmul %1, %3, %cst {dimension_numbers = #tpu.dot_dimension_numbers<[1], [0], [0], [1], [0, 0, 1, 1], [], []>} : vector<24x64xbf16>, vector<64x64xbf16>, vector<24x64xf32> -> vector<24x64xf32>
    %c0_6 = arith.constant 0 : index
    %c0_7 = arith.constant 0 : index
    %c1 = arith.constant 1 : index
    %c0_8 = arith.constant 0 : index
    %5 = vector.load %arg1[%c0_6, %c0_7, %c1, %c0_8] : memref<1x4x18x64xbf16, #tpu.memory_space<vmem>>, vector<1x3x8x64xbf16>
    %6 = vector.shape_cast %5 : vector<1x3x8x64xbf16> to vector<24x64xbf16>
    %c1_9 = arith.constant 1 : index
    %c0_10 = arith.constant 0 : index
    %c0_11 = arith.constant 0 : index
    %7 = vector.load %arg2[%c1_9, %c0_10, %c0_11] : memref<8x64x64xbf16, #tpu.memory_space<vmem>>, vector<1x64x64xbf16>
    %8 = vector.shape_cast %7 : vector<1x64x64xbf16> to vector<64x64xbf16>
    %cst_12 = arith.constant dense<0.000000e+00> : vector<24x64xf32>
    %9 = tpu.matmul %6, %8, %cst_12 {dimension_numbers = #tpu.dot_dimension_numbers<[1], [0], [0], [1], [0, 0, 1, 1], [], []>} : vector<24x64xbf16>, vector<64x64xbf16>, vector<24x64xf32> -> vector<24x64xf32>
    %10 = arith.addf %4, %9 : vector<24x64xf32>
    %c0_13 = arith.constant 0 : index
    %c0_14 = arith.constant 0 : index
    %c9 = arith.constant 9 : index
    %c0_15 = arith.constant 0 : index
    %11 = vector.load %arg1[%c0_13, %c0_14, %c9, %c0_15] : memref<1x4x18x64xbf16, #tpu.memory_space<vmem>>, vector<1x3x8x64xbf16>
    %12 = vector.shape_cast %11 : vector<1x3x8x64xbf16> to vector<24x64xbf16>
    %c2 = arith.constant 2 : index
    %c0_16 = arith.constant 0 : index
    %c0_17 = arith.constant 0 : index
    %13 = vector.load %arg2[%c2, %c0_16, %c0_17] : memref<8x64x64xbf16, #tpu.memory_space<vmem>>, vector<1x64x64xbf16>
    %14 = vector.shape_cast %13 : vector<1x64x64xbf16> to vector<64x64xbf16>
    %cst_18 = arith.constant dense<0.000000e+00> : vector<24x64xf32>
    %15 = tpu.matmul %12, %14, %cst_18 {dimension_numbers = #tpu.dot_dimension_numbers<[1], [0], [0], [1], [0, 0, 1, 1], [], []>} : vector<24x64xbf16>, vector<64x64xbf16>, vector<24x64xf32> -> vector<24x64xf32>
    %16 = arith.addf %10, %15 : vector<24x64xf32>
    %c0_19 = arith.constant 0 : index
    %c0_20 = arith.constant 0 : index
    %c10 = arith.constant 10 : index
    %c0_21 = arith.constant 0 : index
    %17 = vector.load %arg1[%c0_19, %c0_20, %c10, %c0_21] : memref<1x4x18x64xbf16, #tpu.memory_space<vmem>>, vector<1x3x8x64xbf16>
    %18 = vector.shape_cast %17 : vector<1x3x8x64xbf16> to vector<24x64xbf16>
    %c3 = arith.constant 3 : index
    %c0_22 = arith.constant 0 : index
    %c0_23 = arith.constant 0 : index
    %19 = vector.load %arg2[%c3, %c0_22, %c0_23] : memref<8x64x64xbf16, #tpu.memory_space<vmem>>, vector<1x64x64xbf16>
    %20 = vector.shape_cast %19 : vector<1x64x64xbf16> to vector<64x64xbf16>
    %cst_24 = arith.constant dense<0.000000e+00> : vector<24x64xf32>
    %21 = tpu.matmul %18, %20, %cst_24 {dimension_numbers = #tpu.dot_dimension_numbers<[1], [0], [0], [1], [0, 0, 1, 1], [], []>} : vector<24x64xbf16>, vector<64x64xbf16>, vector<24x64xf32> -> vector<24x64xf32>
    %22 = arith.addf %16, %21 : vector<24x64xf32>
    %c0_25 = arith.constant 0 : index
    %c1_26 = arith.constant 1 : index
    %c0_27 = arith.constant 0 : index
    %c0_28 = arith.constant 0 : index
    %23 = vector.load %arg1[%c0_25, %c1_26, %c0_27, %c0_28] : memref<1x4x18x64xbf16, #tpu.memory_space<vmem>>, vector<1x3x8x64xbf16>
    %24 = vector.shape_cast %23 : vector<1x3x8x64xbf16> to vector<24x64xbf16>
    %c4 = arith.constant 4 : index
    %c0_29 = arith.constant 0 : index
    %c0_30 = arith.constant 0 : index
    %25 = vector.load %arg2[%c4, %c0_29, %c0_30] : memref<8x64x64xbf16, #tpu.memory_space<vmem>>, vector<1x64x64xbf16>
    %26 = vector.shape_cast %25 : vector<1x64x64xbf16> to vector<64x64xbf16>
    %cst_31 = arith.constant dense<0.000000e+00> : vector<24x64xf32>
    %27 = tpu.matmul %24, %26, %cst_31 {dimension_numbers = #tpu.dot_dimension_numbers<[1], [0], [0], [1], [0, 0, 1, 1], [], []>} : vector<24x64xbf16>, vector<64x64xbf16>, vector<24x64xf32> -> vector<24x64xf32>
    %28 = arith.addf %22, %27 : vector<24x64xf32>
    %c0_32 = arith.constant 0 : index
    %c1_33 = arith.constant 1 : index
    %c1_34 = arith.constant 1 : index
    %c0_35 = arith.constant 0 : index
    %29 = vector.load %arg1[%c0_32, %c1_33, %c1_34, %c0_35] : memref<1x4x18x64xbf16, #tpu.memory_space<vmem>>, vector<1x3x8x64xbf16>
    %30 = vector.shape_cast %29 : vector<1x3x8x64xbf16> to vector<24x64xbf16>
    %c5 = arith.constant 5 : index
    %c0_36 = arith.constant 0 : index
    %c0_37 = arith.constant 0 : index
    %31 = vector.load %arg2[%c5, %c0_36, %c0_37] : memref<8x64x64xbf16, #tpu.memory_space<vmem>>, vector<1x64x64xbf16>
    %32 = vector.shape_cast %31 : vector<1x64x64xbf16> to vector<64x64xbf16>
    %cst_38 = arith.constant dense<0.000000e+00> : vector<24x64xf32>
    %33 = tpu.matmul %30, %32, %cst_38 {dimension_numbers = #tpu.dot_dimension_numbers<[1], [0], [0], [1], [0, 0, 1, 1], [], []>} : vector<24x64xbf16>, vector<64x64xbf16>, vector<24x64xf32> -> vector<24x64xf32>
    %34 = arith.addf %28, %33 : vector<24x64xf32>
    %c0_39 = arith.constant 0 : index
    %c1_40 = arith.constant 1 : index
    %c9_41 = arith.constant 9 : index
    %c0_42 = arith.constant 0 : index
    %35 = vector.load %arg1[%c0_39, %c1_40, %c9_41, %c0_42] : memref<1x4x18x64xbf16, #tpu.memory_space<vmem>>, vector<1x3x8x64xbf16>
    %36 = vector.shape_cast %35 : vector<1x3x8x64xbf16> to vector<24x64xbf16>
    %c6 = arith.constant 6 : index
    %c0_43 = arith.constant 0 : index
    %c0_44 = arith.constant 0 : index
    %37 = vector.load %arg2[%c6, %c0_43, %c0_44] : memref<8x64x64xbf16, #tpu.memory_space<vmem>>, vector<1x64x64xbf16>
    %38 = vector.shape_cast %37 : vector<1x64x64xbf16> to vector<64x64xbf16>
    %cst_45 = arith.constant dense<0.000000e+00> : vector<24x64xf32>
    %39 = tpu.matmul %36, %38, %cst_45 {dimension_numbers = #tpu.dot_dimension_numbers<[1], [0], [0], [1], [0, 0, 1, 1], [], []>} : vector<24x64xbf16>, vector<64x64xbf16>, vector<24x64xf32> -> vector<24x64xf32>
    %40 = arith.addf %34, %39 : vector<24x64xf32>
    %c0_46 = arith.constant 0 : index
    %c1_47 = arith.constant 1 : index
    %c10_48 = arith.constant 10 : index
    %c0_49 = arith.constant 0 : index
    %41 = vector.load %arg1[%c0_46, %c1_47, %c10_48, %c0_49] : memref<1x4x18x64xbf16, #tpu.memory_space<vmem>>, vector<1x3x8x64xbf16>
    %42 = vector.shape_cast %41 : vector<1x3x8x64xbf16> to vector<24x64xbf16>
    %c7 = arith.constant 7 : index
    %c0_50 = arith.constant 0 : index
    %c0_51 = arith.constant 0 : index
    %43 = vector.load %arg2[%c7, %c0_50, %c0_51] : memref<8x64x64xbf16, #tpu.memory_space<vmem>>, vector<1x64x64xbf16>
    %44 = vector.shape_cast %43 : vector<1x64x64xbf16> to vector<64x64xbf16>
    %cst_52 = arith.constant dense<0.000000e+00> : vector<24x64xf32>
    %45 = tpu.matmul %42, %44, %cst_52 {dimension_numbers = #tpu.dot_dimension_numbers<[1], [0], [0], [1], [0, 0, 1, 1], [], []>} : vector<24x64xbf16>, vector<64x64xbf16>, vector<24x64xf32> -> vector<24x64xf32>
    %46 = arith.addf %40, %45 : vector<24x64xf32>
    %c0_53 = arith.constant 0 : index
    %c0_54 = arith.constant 0 : index
    %47 = vector.load %arg3[%c0_53, %c0_54] : memref<1x64xf32, #tpu.memory_space<vmem>>, vector<1x64xf32>
    %48 = vector.broadcast %47 : vector<1x64xf32> to vector<24x64xf32>
    %49 = arith.addf %46, %48 : vector<24x64xf32>
    %cst_55 = arith.constant 0.000000e+00 : f32
    %50 = vector.broadcast %cst_55 : f32 to vector<24x64xf32>
    %51 = arith.maximumf %49, %50 : vector<24x64xf32>
    %52 = vector.shape_cast %51 : vector<24x64xf32> to vector<1x3x8x64xf32>
    %53 = arith.truncf %52 : vector<1x3x8x64xf32> to vector<1x3x8x64xbf16>
    %c0_56 = arith.constant 0 : index
    %c0_57 = arith.constant 0 : index
    %c0_58 = arith.constant 0 : index
    %c0_59 = arith.constant 0 : index
    %54 = vector.load %arg4[%c0_56, %c0_57, %c0_58, %c0_59] : memref<1x3x8x64xbf16, #tpu.memory_space<vmem>>, vector<1x3x8x64xbf16>
    tpu.vector_store %arg4[%c0_56, %c0_57, %c0_58, %c0_59], %53 {strides = array<i32>} : memref<1x3x8x64xbf16, #tpu.memory_space<vmem>>, vector<1x3x8x64xbf16>,
    return
  }
  func.func @transform_0(%arg0: i32) -> (i32, i32, i32, i32) {
    %c0_i32 = arith.constant 0 : i32
    %c0_i32_0 = arith.constant 0 : i32
    %c0_i32_1 = arith.constant 0 : i32
    %c0_i32_2 = arith.constant 0 : i32
    return %arg0, %c0_i32, %c0_i32_0, %c0_i32_1 : i32, i32, i32, i32
  }
  func.func @transform_1(%arg0: i32) -> (i32, i32, i32) {
    %c0_i32 = arith.constant 0 : i32
    %c0_i32_0 = arith.constant 0 : i32
    %c0_i32_1 = arith.constant 0 : i32
    %c0_i32_2 = arith.constant 0 : i32
    return %c0_i32, %c0_i32_0, %c0_i32_1 : i32, i32, i32
  }
  func.func @transform_2(%arg0: i32) -> (i32, i32) {
    %c0_i32 = arith.constant 0 : i32
    %c0_i32_0 = arith.constant 0 : i32
    %c0_i32_1 = arith.constant 0 : i32
    return %c0_i32, %c0_i32_0 : i32, i32
  }
  func.func @transform_3(%arg0: i32) -> (i32, i32, i32, i32) {
    %c0_i32 = arith.constant 0 : i32
    %c0_i32_0 = arith.constant 0 : i32
    %c0_i32_1 = arith.constant 0 : i32
    %c0_i32_2 = arith.constant 0 : i32
    return %arg0, %c0_i32, %c0_i32_0, %c0_i32_1 : i32, i32, i32, i32
  }
}

module attributes {stable_mosaic.version = 11 : i64} {
  func.func @kernel(%arg0: i32, %arg1: memref<1x3x10x64xbf16, #tpu.memory_space<vmem>>, %arg2: memref<9x64x64xbf16, #tpu.memory_space<vmem>>, %arg3: memref<1x64xf32, #tpu.memory_space<vmem>>, %arg4: memref<1x1x8x64xf32, #tpu.memory_space<vmem>>) attributes {dimension_semantics = [#tpu.dimension_semantics<parallel>], iteration_bounds = array<i64: 2>, scalar_prefetch = 0 : i64, scratch_operands = 0 : i64, tpu.core_type = #tpu.core_type<tc>, window_params = [{transform_indices = @transform_0, window_bounds = array<i64: 1, 3, 10, 64>}, {pipeline_mode = #tpu.pipeline_mode<synchronous>, transform_indices = @transform_1, window_bounds = array<i64: 9, 64, 64>}, {pipeline_mode = #tpu.pipeline_mode<synchronous>, transform_indices = @transform_2, window_bounds = array<i64: 1, 64>}, {transform_indices = @transform_3, window_bounds = array<i64: 1, 1, 8, 64>}]} {
    %c0 = arith.constant 0 : index
    %c0_0 = arith.constant 0 : index
    %c0_1 = arith.constant 0 : index
    %c0_2 = arith.constant 0 : index
    %0 = vector.load %arg1[%c0, %c0_0, %c0_1, %c0_2] : memref<1x3x10x64xbf16, #tpu.memory_space<vmem>>, vector<1x1x8x64xbf16>
    %1 = vector.shape_cast %0 : vector<1x1x8x64xbf16> to vector<8x64xbf16>
    %c0_3 = arith.constant 0 : index
    %c0_4 = arith.constant 0 : index
    %c0_5 = arith.constant 0 : index
    %2 = vector.load %arg2[%c0_3, %c0_4, %c0_5] : memref<9x64x64xbf16, #tpu.memory_space<vmem>>, vector<1x64x64xbf16>
    %3 = vector.shape_cast %2 : vector<1x64x64xbf16> to vector<64x64xbf16>
    %cst = arith.constant dense<0.000000e+00> : vector<8x64xf32>
    %4 = tpu.matmul %1, %3, %cst {dimension_numbers = #tpu.dot_dimension_numbers<[1], [0], [0], [1], [0, 0, 1, 1], [], []>} : vector<8x64xbf16>, vector<64x64xbf16>, vector<8x64xf32> -> vector<8x64xf32>
    %c0_6 = arith.constant 0 : index
    %c0_7 = arith.constant 0 : index
    %c1 = arith.constant 1 : index
    %c0_8 = arith.constant 0 : index
    %5 = vector.load %arg1[%c0_6, %c0_7, %c1, %c0_8] : memref<1x3x10x64xbf16, #tpu.memory_space<vmem>>, vector<1x1x8x64xbf16>
    %6 = vector.shape_cast %5 : vector<1x1x8x64xbf16> to vector<8x64xbf16>
    %c1_9 = arith.constant 1 : index
    %c0_10 = arith.constant 0 : index
    %c0_11 = arith.constant 0 : index
    %7 = vector.load %arg2[%c1_9, %c0_10, %c0_11] : memref<9x64x64xbf16, #tpu.memory_space<vmem>>, vector<1x64x64xbf16>
    %8 = vector.shape_cast %7 : vector<1x64x64xbf16> to vector<64x64xbf16>
    %cst_12 = arith.constant dense<0.000000e+00> : vector<8x64xf32>
    %9 = tpu.matmul %6, %8, %cst_12 {dimension_numbers = #tpu.dot_dimension_numbers<[1], [0], [0], [1], [0, 0, 1, 1], [], []>} : vector<8x64xbf16>, vector<64x64xbf16>, vector<8x64xf32> -> vector<8x64xf32>
    %10 = arith.addf %4, %9 : vector<8x64xf32>
    %c0_13 = arith.constant 0 : index
    %c0_14 = arith.constant 0 : index
    %c2 = arith.constant 2 : index
    %c0_15 = arith.constant 0 : index
    %11 = vector.load %arg1[%c0_13, %c0_14, %c2, %c0_15] : memref<1x3x10x64xbf16, #tpu.memory_space<vmem>>, vector<1x1x8x64xbf16>
    %12 = vector.shape_cast %11 : vector<1x1x8x64xbf16> to vector<8x64xbf16>
    %c2_16 = arith.constant 2 : index
    %c0_17 = arith.constant 0 : index
    %c0_18 = arith.constant 0 : index
    %13 = vector.load %arg2[%c2_16, %c0_17, %c0_18] : memref<9x64x64xbf16, #tpu.memory_space<vmem>>, vector<1x64x64xbf16>
    %14 = vector.shape_cast %13 : vector<1x64x64xbf16> to vector<64x64xbf16>
    %cst_19 = arith.constant dense<0.000000e+00> : vector<8x64xf32>
    %15 = tpu.matmul %12, %14, %cst_19 {dimension_numbers = #tpu.dot_dimension_numbers<[1], [0], [0], [1], [0, 0, 1, 1], [], []>} : vector<8x64xbf16>, vector<64x64xbf16>, vector<8x64xf32> -> vector<8x64xf32>
    %16 = arith.addf %10, %15 : vector<8x64xf32>
    %c0_20 = arith.constant 0 : index
    %c1_21 = arith.constant 1 : index
    %c0_22 = arith.constant 0 : index
    %c0_23 = arith.constant 0 : index
    %17 = vector.load %arg1[%c0_20, %c1_21, %c0_22, %c0_23] : memref<1x3x10x64xbf16, #tpu.memory_space<vmem>>, vector<1x1x8x64xbf16>
    %18 = vector.shape_cast %17 : vector<1x1x8x64xbf16> to vector<8x64xbf16>
    %c3 = arith.constant 3 : index
    %c0_24 = arith.constant 0 : index
    %c0_25 = arith.constant 0 : index
    %19 = vector.load %arg2[%c3, %c0_24, %c0_25] : memref<9x64x64xbf16, #tpu.memory_space<vmem>>, vector<1x64x64xbf16>
    %20 = vector.shape_cast %19 : vector<1x64x64xbf16> to vector<64x64xbf16>
    %cst_26 = arith.constant dense<0.000000e+00> : vector<8x64xf32>
    %21 = tpu.matmul %18, %20, %cst_26 {dimension_numbers = #tpu.dot_dimension_numbers<[1], [0], [0], [1], [0, 0, 1, 1], [], []>} : vector<8x64xbf16>, vector<64x64xbf16>, vector<8x64xf32> -> vector<8x64xf32>
    %22 = arith.addf %16, %21 : vector<8x64xf32>
    %c0_27 = arith.constant 0 : index
    %c1_28 = arith.constant 1 : index
    %c1_29 = arith.constant 1 : index
    %c0_30 = arith.constant 0 : index
    %23 = vector.load %arg1[%c0_27, %c1_28, %c1_29, %c0_30] : memref<1x3x10x64xbf16, #tpu.memory_space<vmem>>, vector<1x1x8x64xbf16>
    %24 = vector.shape_cast %23 : vector<1x1x8x64xbf16> to vector<8x64xbf16>
    %c4 = arith.constant 4 : index
    %c0_31 = arith.constant 0 : index
    %c0_32 = arith.constant 0 : index
    %25 = vector.load %arg2[%c4, %c0_31, %c0_32] : memref<9x64x64xbf16, #tpu.memory_space<vmem>>, vector<1x64x64xbf16>
    %26 = vector.shape_cast %25 : vector<1x64x64xbf16> to vector<64x64xbf16>
    %cst_33 = arith.constant dense<0.000000e+00> : vector<8x64xf32>
    %27 = tpu.matmul %24, %26, %cst_33 {dimension_numbers = #tpu.dot_dimension_numbers<[1], [0], [0], [1], [0, 0, 1, 1], [], []>} : vector<8x64xbf16>, vector<64x64xbf16>, vector<8x64xf32> -> vector<8x64xf32>
    %28 = arith.addf %22, %27 : vector<8x64xf32>
    %c0_34 = arith.constant 0 : index
    %c1_35 = arith.constant 1 : index
    %c2_36 = arith.constant 2 : index
    %c0_37 = arith.constant 0 : index
    %29 = vector.load %arg1[%c0_34, %c1_35, %c2_36, %c0_37] : memref<1x3x10x64xbf16, #tpu.memory_space<vmem>>, vector<1x1x8x64xbf16>
    %30 = vector.shape_cast %29 : vector<1x1x8x64xbf16> to vector<8x64xbf16>
    %c5 = arith.constant 5 : index
    %c0_38 = arith.constant 0 : index
    %c0_39 = arith.constant 0 : index
    %31 = vector.load %arg2[%c5, %c0_38, %c0_39] : memref<9x64x64xbf16, #tpu.memory_space<vmem>>, vector<1x64x64xbf16>
    %32 = vector.shape_cast %31 : vector<1x64x64xbf16> to vector<64x64xbf16>
    %cst_40 = arith.constant dense<0.000000e+00> : vector<8x64xf32>
    %33 = tpu.matmul %30, %32, %cst_40 {dimension_numbers = #tpu.dot_dimension_numbers<[1], [0], [0], [1], [0, 0, 1, 1], [], []>} : vector<8x64xbf16>, vector<64x64xbf16>, vector<8x64xf32> -> vector<8x64xf32>
    %34 = arith.addf %28, %33 : vector<8x64xf32>
    %c0_41 = arith.constant 0 : index
    %c2_42 = arith.constant 2 : index
    %c0_43 = arith.constant 0 : index
    %c0_44 = arith.constant 0 : index
    %35 = vector.load %arg1[%c0_41, %c2_42, %c0_43, %c0_44] : memref<1x3x10x64xbf16, #tpu.memory_space<vmem>>, vector<1x1x8x64xbf16>
    %36 = vector.shape_cast %35 : vector<1x1x8x64xbf16> to vector<8x64xbf16>
    %c6 = arith.constant 6 : index
    %c0_45 = arith.constant 0 : index
    %c0_46 = arith.constant 0 : index
    %37 = vector.load %arg2[%c6, %c0_45, %c0_46] : memref<9x64x64xbf16, #tpu.memory_space<vmem>>, vector<1x64x64xbf16>
    %38 = vector.shape_cast %37 : vector<1x64x64xbf16> to vector<64x64xbf16>
    %cst_47 = arith.constant dense<0.000000e+00> : vector<8x64xf32>
    %39 = tpu.matmul %36, %38, %cst_47 {dimension_numbers = #tpu.dot_dimension_numbers<[1], [0], [0], [1], [0, 0, 1, 1], [], []>} : vector<8x64xbf16>, vector<64x64xbf16>, vector<8x64xf32> -> vector<8x64xf32>
    %40 = arith.addf %34, %39 : vector<8x64xf32>
    %c0_48 = arith.constant 0 : index
    %c2_49 = arith.constant 2 : index
    %c1_50 = arith.constant 1 : index
    %c0_51 = arith.constant 0 : index
    %41 = vector.load %arg1[%c0_48, %c2_49, %c1_50, %c0_51] : memref<1x3x10x64xbf16, #tpu.memory_space<vmem>>, vector<1x1x8x64xbf16>
    %42 = vector.shape_cast %41 : vector<1x1x8x64xbf16> to vector<8x64xbf16>
    %c7 = arith.constant 7 : index
    %c0_52 = arith.constant 0 : index
    %c0_53 = arith.constant 0 : index
    %43 = vector.load %arg2[%c7, %c0_52, %c0_53] : memref<9x64x64xbf16, #tpu.memory_space<vmem>>, vector<1x64x64xbf16>
    %44 = vector.shape_cast %43 : vector<1x64x64xbf16> to vector<64x64xbf16>
    %cst_54 = arith.constant dense<0.000000e+00> : vector<8x64xf32>
    %45 = tpu.matmul %42, %44, %cst_54 {dimension_numbers = #tpu.dot_dimension_numbers<[1], [0], [0], [1], [0, 0, 1, 1], [], []>} : vector<8x64xbf16>, vector<64x64xbf16>, vector<8x64xf32> -> vector<8x64xf32>
    %46 = arith.addf %40, %45 : vector<8x64xf32>
    %c0_55 = arith.constant 0 : index
    %c2_56 = arith.constant 2 : index
    %c2_57 = arith.constant 2 : index
    %c0_58 = arith.constant 0 : index
    %47 = vector.load %arg1[%c0_55, %c2_56, %c2_57, %c0_58] : memref<1x3x10x64xbf16, #tpu.memory_space<vmem>>, vector<1x1x8x64xbf16>
    %48 = vector.shape_cast %47 : vector<1x1x8x64xbf16> to vector<8x64xbf16>
    %c8 = arith.constant 8 : index
    %c0_59 = arith.constant 0 : index
    %c0_60 = arith.constant 0 : index
    %49 = vector.load %arg2[%c8, %c0_59, %c0_60] : memref<9x64x64xbf16, #tpu.memory_space<vmem>>, vector<1x64x64xbf16>
    %50 = vector.shape_cast %49 : vector<1x64x64xbf16> to vector<64x64xbf16>
    %cst_61 = arith.constant dense<0.000000e+00> : vector<8x64xf32>
    %51 = tpu.matmul %48, %50, %cst_61 {dimension_numbers = #tpu.dot_dimension_numbers<[1], [0], [0], [1], [0, 0, 1, 1], [], []>} : vector<8x64xbf16>, vector<64x64xbf16>, vector<8x64xf32> -> vector<8x64xf32>
    %52 = arith.addf %46, %51 : vector<8x64xf32>
    %c0_62 = arith.constant 0 : index
    %c0_63 = arith.constant 0 : index
    %53 = vector.load %arg3[%c0_62, %c0_63] : memref<1x64xf32, #tpu.memory_space<vmem>>, vector<1x64xf32>
    %54 = vector.broadcast %53 : vector<1x64xf32> to vector<8x64xf32>
    %55 = arith.addf %52, %54 : vector<8x64xf32>
    %cst_64 = arith.constant 0.000000e+00 : f32
    %56 = vector.broadcast %cst_64 : f32 to vector<8x64xf32>
    %57 = arith.maximumf %55, %56 : vector<8x64xf32>
    %58 = vector.shape_cast %57 : vector<8x64xf32> to vector<1x1x8x64xf32>
    %c0_65 = arith.constant 0 : index
    %c0_66 = arith.constant 0 : index
    %c0_67 = arith.constant 0 : index
    %c0_68 = arith.constant 0 : index
    %59 = vector.load %arg4[%c0_65, %c0_66, %c0_67, %c0_68] : memref<1x1x8x64xf32, #tpu.memory_space<vmem>>, vector<1x1x8x64xf32>
    tpu.vector_store %arg4[%c0_65, %c0_66, %c0_67, %c0_68], %58 {strides = array<i32>} : memref<1x1x8x64xf32, #tpu.memory_space<vmem>>, vector<1x1x8x64xf32>,
    return
  }
  func.func @transform_0(%arg0: i32) -> (i32, i32, i32, i32) {
    %c0_i32 = arith.constant 0 : i32
    %c0_i32_0 = arith.constant 0 : i32
    %c0_i32_1 = arith.constant 0 : i32
    %c0_i32_2 = arith.constant 0 : i32
    return %arg0, %c0_i32, %c0_i32_0, %c0_i32_1 : i32, i32, i32, i32
  }
  func.func @transform_1(%arg0: i32) -> (i32, i32, i32) {
    %c0_i32 = arith.constant 0 : i32
    %c0_i32_0 = arith.constant 0 : i32
    %c0_i32_1 = arith.constant 0 : i32
    %c0_i32_2 = arith.constant 0 : i32
    return %c0_i32, %c0_i32_0, %c0_i32_1 : i32, i32, i32
  }
  func.func @transform_2(%arg0: i32) -> (i32, i32) {
    %c0_i32 = arith.constant 0 : i32
    %c0_i32_0 = arith.constant 0 : i32
    %c0_i32_1 = arith.constant 0 : i32
    return %c0_i32, %c0_i32_0 : i32, i32
  }
  func.func @transform_3(%arg0: i32) -> (i32, i32, i32, i32) {
    %c0_i32 = arith.constant 0 : i32
    %c0_i32_0 = arith.constant 0 : i32
    %c0_i32_1 = arith.constant 0 : i32
    %c0_i32_2 = arith.constant 0 : i32
    return %arg0, %c0_i32, %c0_i32_0, %c0_i32_1 : i32, i32, i32, i32
  }
}

</mosaic_0001>

<llo_original>
// kernel: cnn_encoder_forward.4
$region0: #{cnn_encoder_forward.4}
  #allocation0 [shape = 'u32[]', space=smem, size = 0x4, offset = 0x4, fixed_abs, tag = 'smem constant byte address 0x4 - core index']
  #allocation1 [shape = 'u32[72,128]{1,0:T(1,128)}', space=vmem, size = 0x9000, scoped, tag = 'internal scratch']
  %s0 = inlined_call_operand.vmem [shape: bf16[2,4,18,64], index: 0, kind: input, shape index: {}]
  %s1 = inlined_call_operand.vmem [shape: bf16[8,64,64], index: 1, kind: input, shape index: {}]
  %s2 = inlined_call_operand.vmem [shape: f32[1,64], index: 2, kind: input, shape index: {}]
  %s3 = inlined_call_operand.vmem [shape: bf16[2,3,8,64], index: 3, kind: output, shape index: {}]
  %s4 = sld [smem:[#allocation0]]
  $region45: #{cnn_encoder_forward.4} parent=0
    _
  %s6 = ssub.s32 1, %s4
  %s7 = scalar_select 0, %s6, %s4
  loop: start=0, step=1, limit=4
  $region2: #{cnn_encoder_forward.4} parent=0 // loop_pre_header
    _
  $region3: #{cnn_encoder_forward.4} parent=0 // loop_header
    %s9 = sphi 0, %s13
    %p10 = scmp.ge.s32.totalorder %s9, 4
    %s19 = sphi 0, %s21
    %s22 = sphi 0, %s19
    %s23 = sphi 0, %s22
    %s39 = sphi 0, %s23
    %s43 = sphi 0, %s43
    %s45 = sphi 0, %s43
    %s46 = sphi 0, %s45
    %s60 = sphi 0, %s46
    %s64 = sphi 0, %s64
    %s66 = sphi 0, %s64
    %s67 = sphi 0, %s66
    %s81 = sphi 0, %s67
    %s87 = sphi 0, %s89
    %s90 = sphi 0, %s87
    %s91 = sphi 0, %s90
    %s107 = sphi 0, %s91
  $region4: #{cnn_encoder_forward.4} parent=0 // loop_header_branch
    %12 = sbr.rel (%p10) target = $region8
  $region5: #{cnn_encoder_forward.4} parent=0 // loop_body
    %s14 = ssub.s32 %s9, 1
    %s15 = ssub.s32 %s9, 2
    %s16 = sadd.s32 %s9, 1
    %s17 = ssub.s32 %s9, %s16
    %p18 = scmp.eq.s32.totalorder %s17, 0
    %s20 = sadd.s32 %s19, 1
    %s21 = scalar_select %p18, %s19, %s20
    %p24 = pneg %p18
    %p25 = scmp.eq.s32.totalorder %s9, 1
    %p26 = por %p24, %p25
    %p27 = scmp.ne.s32.totalorder %s19, %s22
    %p28 = scmp.eq.s32.totalorder %s9, 0
    %p29 = por %p27, %p28
    %p30 = scmp.ne.s32.totalorder %s19, %s22
    %p31 = scmp.eq.s32.totalorder %s14, 1
    %p32 = por %p30, %p31
    %p33 = scmp.ne.s32.totalorder %s22, %s23
    %p34 = scmp.eq.s32.totalorder %s14, 0
    %p35 = por %p33, %p34
    %p36 = scmp.ne.s32.totalorder %s22, %s23
    %p37 = scmp.eq.s32.totalorder %s15, 1
    %p38 = por %p36, %p37
    %p40 = scmp.ne.s32.totalorder %s23, %s39
    %p41 = scmp.eq.s32.totalorder %s15, 0
    %p42 = por %p40, %p41
    %s44 = sadd.s32 %s43, 1
    %p47 = scmp.eq.s32.totalorder %s9, 1
    %p48 = scmp.ne.s32.totalorder %s43, %s45
    %p49 = scmp.eq.s32.totalorder %s9, 0
    %p50 = por %p48, %p49
    %p51 = scmp.ne.s32.totalorder %s43, %s45
    %p52 = scmp.eq.s32.totalorder %s14, 1
    %p53 = por %p51, %p52
    %p54 = scmp.ne.s32.totalorder %s45, %s46
    %p55 = scmp.eq.s32.totalorder %s14, 0
    %p56 = por %p54, %p55
    %p57 = scmp.ne.s32.totalorder %s45, %s46
    %p58 = scmp.eq.s32.totalorder %s15, 1
    %p59 = por %p57, %p58
    %p61 = scmp.ne.s32.totalorder %s46, %s60
    %p62 = scmp.eq.s32.totalorder %s15, 0
    %p63 = por %p61, %p62
    %s65 = sadd.s32 %s64, 1
    %p68 = scmp.eq.s32.totalorder %s9, 1
    %p69 = scmp.ne.s32.totalorder %s64, %s66
    %p70 = scmp.eq.s32.totalorder %s9, 0
    %p71 = por %p69, %p70
    %p72 = scmp.ne.s32.totalorder %s64, %s66
    %p73 = scmp.eq.s32.totalorder %s14, 1
    %p74 = por %p72, %p73
    %p75 = scmp.ne.s32.totalorder %s66, %s67
    %p76 = scmp.eq.s32.totalorder %s14, 0
    %p77 = por %p75, %p76
    %p78 = scmp.ne.s32.totalorder %s66, %s67
    %p79 = scmp.eq.s32.totalorder %s15, 1
    %p80 = por %p78, %p79
    %p82 = scmp.ne.s32.totalorder %s67, %s81
    %p83 = scmp.eq.s32.totalorder %s15, 0
    %p84 = por %p82, %p83
    %s85 = ssub.s32 %s9, %s16
    %p86 = scmp.eq.s32.totalorder %s85, 0
    %s88 = sadd.s32 %s87, 1
    %s89 = scalar_select %p86, %s87, %s88
    %p92 = pneg %p86
    %p93 = scmp.eq.s32.totalorder %s9, 1
    %p94 = por %p92, %p93
    %p95 = scmp.ne.s32.totalorder %s87, %s90
    %p96 = scmp.eq.s32.totalorder %s9, 0
    %p97 = por %p95, %p96
    %p98 = scmp.ne.s32.totalorder %s87, %s90
    %p99 = scmp.eq.s32.totalorder %s14, 1
    %p100 = por %p98, %p99
    %p101 = scmp.ne.s32.totalorder %s90, %s91
    %p102 = scmp.eq.s32.totalorder %s14, 0
    %p103 = por %p101, %p102
    %p104 = scmp.ne.s32.totalorder %s90, %s91
    %p105 = scmp.eq.s32.totalorder %s15, 1
    %p106 = por %p104, %p105
    %p108 = scmp.ne.s32.totalorder %s91, %s107
    %p109 = scmp.eq.s32.totalorder %s15, 0
    %p110 = por %p108, %p109
    %p111 = scmp.le.s32.totalorder 1, %s9
    %p112 = scmp.lt.s32.totalorder %s9, 3
    %p113 = pnand %p111, %p112
    %p114 = pneg %p113
    // Predicated region
    $region9: #{cnn_encoder_forward.4} parent=5 // pred_check
      _
    $region10: #{cnn_encoder_forward.4} parent=5 // pred_check_branch
      %116 = sbr.rel (%p113) target = $region12
    $region11: #{cnn_encoder_forward.4} parent=5 // pred_region
      %s117 = ssub.s32 %s9, 1
      // Predicated region
      $region13: #{cnn_encoder_forward.4} parent=11 // pred_check
        %p118 = pneg %p56
      $region14: #{cnn_encoder_forward.4} parent=11 // pred_check_branch
        %120 = sbr.rel (%p118) target = $region16
      $region15: #{cnn_encoder_forward.4} parent=11 // pred_region
        _
      $region16: #{cnn_encoder_forward.4} parent=11 // pred_fallthru
        _
      // Predicated region
      $region17: #{cnn_encoder_forward.4} parent=11 // pred_check
        %p121 = pneg %p77
      $region18: #{cnn_encoder_forward.4} parent=11 // pred_check_branch
        %123 = sbr.rel (%p121) target = $region20
      $region19: #{cnn_encoder_forward.4} parent=11 // pred_region
        _
      $region20: #{cnn_encoder_forward.4} parent=11 // pred_fallthru
        _
    $region12: #{cnn_encoder_forward.4} parent=5 // pred_fallthru
      _
    %p124 = scmp.lt.s32.totalorder %s9, 2
    // Predicated region
    $region21: #{cnn_encoder_forward.4} parent=5 // pred_check
      %p125 = pneg %p124
    $region22: #{cnn_encoder_forward.4} parent=5 // pred_check_branch
      %127 = sbr.rel (%p125) target = $region24
    $region23: #{cnn_encoder_forward.4} parent=5 // pred_region
      // Predicated region
      $region25: #{cnn_encoder_forward.4} parent=23 // pred_check
        %p128 = pneg %p29
      $region26: #{cnn_encoder_forward.4} parent=23 // pred_check_branch
        %130 = sbr.rel (%p128) target = $region28
      $region27: #{cnn_encoder_forward.4} parent=23 // pred_region
        %p131 = scmp.lt.s32.totalorder %s9, 1
        %s132 = scalar_select %p131, %s9, 1
        %s133 = smul.addr %s132, 12
        %s134 = smul.addr %s133, 4
        %s135 = scalar_lea.vmem %s0, %s134
      $region28: #{cnn_encoder_forward.4} parent=23 // pred_fallthru
        _
    $region24: #{cnn_encoder_forward.4} parent=5 // pred_fallthru
      _
    %p136 = scmp.le.s32.totalorder 1, %s9
    %p137 = scmp.lt.s32.totalorder %s9, 3
    %p138 = pnand %p136, %p137
    %p139 = pneg %p138
    // Predicated region
    $region29: #{cnn_encoder_forward.4} parent=5 // pred_check
      _
    $region30: #{cnn_encoder_forward.4} parent=5 // pred_check_branch
      %141 = sbr.rel (%p138) target = $region32
    $region31: #{cnn_encoder_forward.4} parent=5 // pred_region
      %s142 = ssub.s32 %s9, 1
      %p143 = scmp.lt.s32.totalorder %s14, 1
      %s144 = scalar_select %p143, %s14, 1
      %s145 = smul.addr %s144, 12
      %s146 = smul.addr %s145, 4
      %s147 = scalar_lea.vmem %s0, %s146
      %p148 = pneg %p35
      %p149 = pneg %p32
      %p150 = pneg %p56
      %p151 = pneg %p53
      %p152 = pneg %p77
      %p153 = pneg %p74
      %p154 = pneg %p103
      %p155 = pneg %p100
      %p156 = scmp.lt.s32.totalorder %s14, 1
      %s157 = scalar_select %p156, %s14, 1
      %s158 = smul.addr %s157, 3
      %s159 = smul.addr %s158, 4
      %s160 = scalar_lea.vmem %s3, %s159
      %p161 = scmp.lt.s32.totalorder %s14, 1
      %s162 = scalar_select %p161, %s14, 1
      %s163 = smul.addr %s162, 12
      %s164 = smul.addr %s163, 4
      %s165 = scalar_lea.vmem %s0, %s164
      %p166 = scmp.lt.s32.totalorder %s14, 1
      %s167 = scalar_select %p166, %s14, 1
      %s168 = smul.addr %s167, 3
      %s169 = smul.addr %s168, 4
      %s170 = scalar_lea.vmem %s3, %s169
      %v172 = vld [vmem:[%s165] sm:$0xf]
      %v173 = vld [vmem:[%s165 + $0xc] sm:$0xf]
      %v174 = vld [vmem:[%s165 + $0x18] sm:$0xf]
      %v175 = vld [vmem:[%s1] sm:$0xf]
      %v176 = vld [vmem:[%s1 + $0x4] sm:$0xf]
      %v177 = vld [vmem:[%s1 + $0x8] sm:$0xf]
      %v178 = vld [vmem:[%s1 + $0xc] sm:$0xf]
      %v179 = vld [vmem:[%s1 + $0x10] sm:$0xf]
      %v180 = vld [vmem:[%s1 + $0x14] sm:$0xf]
      %v181 = vld [vmem:[%s1 + $0x18] sm:$0xf]
      %v182 = vld [vmem:[%s1 + $0x1c] sm:$0xf]
      %v183 = vld [vmem:[%s165 + $0x4] sm:$0x1]
      %v184 = vld [vmem:[%s165 + $0x10] sm:$0x1]
      %v185 = vld [vmem:[%s165 + $0x1c] sm:$0x1]
      %vm186 = vsmask.f32 3328
      %vm187 = vsmask.f32 7440
      %vm188 = vmor %vm186, %vm187
      %v190 = vshrl.u32 %v172, 16
      %v192 = vrot.slane %v190, 4
      %v193 = vshll.u32 %v172, 16
      %v195 = vrot.slane %v193, 5
      %v196 = vor.u32 %v192, %v195
      %v197 = vrot.slane %v196, 4
      %v199 = vshll.u32 %v183, 16
      %v201 = vrot.slane %v199, 5
      %v202 = vsel %vm188, %v197, %v201
      %v204 = vshrl.u32 %v173, 16
      %v206 = vrot.slane %v204, 4
      %v207 = vshll.u32 %v173, 16
      %v209 = vrot.slane %v207, 5
      %v210 = vor.u32 %v206, %v209
      %v211 = vrot.slane %v210, 4
      %v213 = vshll.u32 %v184, 16
      %v215 = vrot.slane %v213, 5
      %v216 = vsel %vm188, %v211, %v215
      %v218 = vshrl.u32 %v174, 16
      %v220 = vrot.slane %v218, 4
      %v221 = vshll.u32 %v174, 16
      %v223 = vrot.slane %v221, 5
      %v224 = vor.u32 %v220, %v223
      %v225 = vrot.slane %v224, 4
      %v227 = vshll.u32 %v185, 16
      %v229 = vrot.slane %v227, 5
      %v230 = vsel %vm188, %v225, %v229
      %s231 = scalar_lea.vmem %s1, 32
      %v232 = vld [vmem:[%s231] sm:$0xf]
      %v233 = vld [vmem:[%s231 + $0x4] sm:$0xf]
      %v234 = vld [vmem:[%s231 + $0x8] sm:$0xf]
      %v235 = vld [vmem:[%s231 + $0xc] sm:$0xf]
      %v236 = vld [vmem:[%s231 + $0x10] sm:$0xf]
      %v237 = vld [vmem:[%s231 + $0x14] sm:$0xf]
      %v238 = vld [vmem:[%s231 + $0x18] sm:$0xf]
      %v239 = vld [vmem:[%s231 + $0x1c] sm:$0xf]
      %v240 = vunpack.c.l.b16 %v202
      %v241 = vunpack.c.l.b16 %v216
      %v242 = vunpack.c.l.b16 %v230
      %v243 = vpack.c.b16 %v241, %v240
      %v244 = vpack.c.b16 %v242, %v242
      %v253 = vunpack.c.l.b16 %v232
      %v254 = vunpack.c.l.b16 %v233
      %v255 = vunpack.c.l.b16 %v234
      %v256 = vunpack.c.l.b16 %v235
      %v257 = vunpack.c.l.b16 %v236
      %v258 = vunpack.c.l.b16 %v237
      %v259 = vunpack.c.l.b16 %v238
      %v260 = vunpack.c.l.b16 %v239
      %v261 = vpack.c.b16 %v254, %v253
      %v262 = vpack.c.b16 %v256, %v255
      %v263 = vpack.c.b16 %v258, %v257
      %v264 = vpack.c.b16 %v260, %v259
      %vm269 = vcmask 523264
      %v271 = vsel %vm269, %v243, 0
      %v274 = vsel %vm269, %v244, 0
      %276 = vmatpush.bf16.msra.mxu0 0
      %277 = vmatpush.bf16.msra.mxu0 0
      %278 = vmatpush.bf16.msra.mxu0 0
      %279 = vmatpush.bf16.msra.mxu0 0
      %280 = vmatpush.bf16.msra.mxu0 %v264
      %281 = vmatpush.bf16.msra.mxu0 %v263
      %282 = vmatpush.bf16.msra.mxu0 %v262
      %283 = vmatpush.bf16.msra.mxu0 %v261
      %284 = vmatmul.bf16.gmra.mxu0 %v271
      %v285 = vpop.f32.mrf.mxu0
      %v286 = vadd.f32 0.0, %v285
      %v287 = vpop.f32.mrf.mxu0
      %v288 = vadd.f32 0.0, %v287
      %289 = vmatmul.bf16.gmra.mxu0 %v274
      %v290 = vpop.f32.mrf.mxu0
      %v291 = vadd.f32 0.0, %v290
      %v292 = vpop.f32.mrf.mxu0
      %293 = vdwg.mxu0
      %v297 = vunpack.c.l.b16 %v172
      %v298 = vunpack.c.l.b16 %v173
      %v299 = vunpack.c.l.b16 %v174
      %v300 = vpack.c.b16 %v298, %v297
      %v301 = vpack.c.b16 %v299, %v299
      %v310 = vunpack.c.l.b16 %v175
      %v311 = vunpack.c.l.b16 %v176
      %v312 = vunpack.c.l.b16 %v177
      %v313 = vunpack.c.l.b16 %v178
      %v314 = vunpack.c.l.b16 %v179
      %v315 = vunpack.c.l.b16 %v180
      %v316 = vunpack.c.l.b16 %v181
      %v317 = vunpack.c.l.b16 %v182
      %v318 = vpack.c.b16 %v311, %v310
      %v319 = vpack.c.b16 %v313, %v312
      %v320 = vpack.c.b16 %v315, %v314
      %v321 = vpack.c.b16 %v317, %v316
      %v327 = vsel %vm269, %v300, 0
      %v330 = vsel %vm269, %v301, 0
      %332 = vmatpush.bf16.msra.mxu0 0
      %333 = vmatpush.bf16.msra.mxu0 0
      %334 = vmatpush.bf16.msra.mxu0 0
      %335 = vmatpush.bf16.msra.mxu0 0
      %336 = vmatpush.bf16.msra.mxu0 %v321
      %337 = vmatpush.bf16.msra.mxu0 %v320
      %338 = vmatpush.bf16.msra.mxu0 %v319
      %339 = vmatpush.bf16.msra.mxu0 %v318
      %340 = vmatmul.bf16.gmra.mxu0 %v327
      %v341 = vpop.f32.mrf.mxu0
      %v342 = vadd.f32 %v286, %v341
      %v343 = vpop.f32.mrf.mxu0
      %v344 = vadd.f32 %v288, %v343
      %345 = vmatmul.bf16.gmra.mxu0 %v330
      %v346 = vpop.f32.mrf.mxu0
      %v347 = vadd.f32 %v291, %v346
      %v348 = vpop.f32.mrf.mxu0
      %349 = vdwg.mxu0
      %v350 = vld [vmem:[%s165 + $0x4] sm:$0xf]
      %v351 = vld [vmem:[%s165 + $0x8] sm:$0x1]
      %v352 = vld [vmem:[%s165 + $0x10] sm:$0xf]
      %v353 = vld [vmem:[%s165 + $0x14] sm:$0x1]
      %v354 = vld [vmem:[%s165 + $0x1c] sm:$0xf]
      %v355 = vld [vmem:[%s165 + $0x20] sm:$0x1]
      %v357 = vshrl.u32 %v350, 16
      %v359 = vrot.slane %v357, 4
      %v360 = vshll.u32 %v350, 16
      %v362 = vrot.slane %v360, 5
      %v363 = vor.u32 %v359, %v362
      %v364 = vrot.slane %v363, 4
      %v366 = vshll.u32 %v351, 16
      %v368 = vrot.slane %v366, 5
      %v369 = vsel %vm188, %v364, %v368
      %v371 = vshrl.u32 %v352, 16
      %v373 = vrot.slane %v371, 4
      %v374 = vshll.u32 %v352, 16
      %v376 = vrot.slane %v374, 5
      %v377 = vor.u32 %v373, %v376
      %v378 = vrot.slane %v377, 4
      %v380 = vshll.u32 %v353, 16
      %v382 = vrot.slane %v380, 5
      %v383 = vsel %vm188, %v378, %v382
      %v385 = vshrl.u32 %v354, 16
      %v387 = vrot.slane %v385, 4
      %v388 = vshll.u32 %v354, 16
      %v390 = vrot.slane %v388, 5
      %v391 = vor.u32 %v387, %v390
      %v392 = vrot.slane %v391, 4
      %v394 = vshll.u32 %v355, 16
      %v396 = vrot.slane %v394, 5
      %v397 = vsel %vm188, %v392, %v396
      %s398 = scalar_lea.vmem %s1, 64
      %v399 = vld [vmem:[%s398] sm:$0xf]
      %v400 = vld [vmem:[%s398 + $0x4] sm:$0xf]
      %v401 = vld [vmem:[%s398 + $0x8] sm:$0xf]
      %v402 = vld [vmem:[%s398 + $0xc] sm:$0xf]
      %v403 = vld [vmem:[%s398 + $0x10] sm:$0xf]
      %v404 = vld [vmem:[%s398 + $0x14] sm:$0xf]
      %v405 = vld [vmem:[%s398 + $0x18] sm:$0xf]
      %v406 = vld [vmem:[%s398 + $0x1c] sm:$0xf]
      %v407 = vunpack.c.l.b16 %v369
      %v408 = vunpack.c.l.b16 %v383
      %v409 = vunpack.c.l.b16 %v397
      %v410 = vpack.c.b16 %v408, %v407
      %v411 = vpack.c.b16 %v409, %v409
      %v420 = vunpack.c.l.b16 %v399
      %v421 = vunpack.c.l.b16 %v400
      %v422 = vunpack.c.l.b16 %v401
      %v423 = vunpack.c.l.b16 %v402
      %v424 = vunpack.c.l.b16 %v403
      %v425 = vunpack.c.l.b16 %v404
      %v426 = vunpack.c.l.b16 %v405
      %v427 = vunpack.c.l.b16 %v406
      %v428 = vpack.c.b16 %v421, %v420
      %v429 = vpack.c.b16 %v423, %v422
      %v430 = vpack.c.b16 %v425, %v424
      %v431 = vpack.c.b16 %v427, %v426
      %v437 = vsel %vm269, %v410, 0
      %v440 = vsel %vm269, %v411, 0
      %442 = vmatpush.bf16.msra.mxu0 0
      %443 = vmatpush.bf16.msra.mxu0 0
      %444 = vmatpush.bf16.msra.mxu0 0
      %445 = vmatpush.bf16.msra.mxu0 0
      %446 = vmatpush.bf16.msra.mxu0 %v431
      %447 = vmatpush.bf16.msra.mxu0 %v430
      %448 = vmatpush.bf16.msra.mxu0 %v429
      %449 = vmatpush.bf16.msra.mxu0 %v428
      %450 = vmatmul.bf16.gmra.mxu0 %v437
      %v451 = vpop.f32.mrf.mxu0
      %v452 = vadd.f32 0.0, %v451
      %v453 = vpop.f32.mrf.mxu0
      %v454 = vadd.f32 0.0, %v453
      %455 = vmatmul.bf16.gmra.mxu0 %v440
      %v456 = vpop.f32.mrf.mxu0
      %v457 = vadd.f32 0.0, %v456
      %v458 = vpop.f32.mrf.mxu0
      %459 = vdwg.mxu0
      %v460 = vadd.f32 %v342, %v452
      %v461 = vadd.f32 %v344, %v454
      %v462 = vadd.f32 %v347, %v457
      %v463 = vld [vmem:[%s165 + $0x4] sm:$0xe]
      %v464 = vld [vmem:[%s165 + $0x10] sm:$0xe]
      %v465 = vld [vmem:[%s165 + $0x1c] sm:$0xe]
      %vm472 = vcmask 1042432
      %vm473 = vcmask 1046532
      %vm474 = vmor %vm472, %vm473
      %v475 = vrot.slane %v463, 5
      %v476 = vrot.slane %v475, 4
      %v477 = vrot.slane %v351, 5
      %v478 = vsel %vm474, %v476, %v477
      %v479 = vrot.slane %v464, 5
      %v480 = vrot.slane %v479, 4
      %v481 = vrot.slane %v353, 5
      %v482 = vsel %vm474, %v480, %v481
      %v483 = vrot.slane %v465, 5
      %v484 = vrot.slane %v483, 4
      %v485 = vrot.slane %v355, 5
      %v486 = vsel %vm474, %v484, %v485
      %s487 = scalar_lea.vmem %s1, 96
      %v488 = vld [vmem:[%s487] sm:$0xf]
      %v489 = vld [vmem:[%s487 + $0x4] sm:$0xf]
      %v490 = vld [vmem:[%s487 + $0x8] sm:$0xf]
      %v491 = vld [vmem:[%s487 + $0xc] sm:$0xf]
      %v492 = vld [vmem:[%s487 + $0x10] sm:$0xf]
      %v493 = vld [vmem:[%s487 + $0x14] sm:$0xf]
      %v494 = vld [vmem:[%s487 + $0x18] sm:$0xf]
      %v495 = vld [vmem:[%s487 + $0x1c] sm:$0xf]
      %v496 = vunpack.c.l.b16 %v478
      %v497 = vunpack.c.l.b16 %v482
      %v498 = vunpack.c.l.b16 %v486
      %v499 = vpack.c.b16 %v497, %v496
      %v500 = vpack.c.b16 %v498, %v498
      %v509 = vunpack.c.l.b16 %v488
      %v510 = vunpack.c.l.b16 %v489
      %v511 = vunpack.c.l.b16 %v490
      %v512 = vunpack.c.l.b16 %v491
      %v513 = vunpack.c.l.b16 %v492
      %v514 = vunpack.c.l.b16 %v493
      %v515 = vunpack.c.l.b16 %v494
      %v516 = vunpack.c.l.b16 %v495
      %v517 = vpack.c.b16 %v510, %v509
      %v518 = vpack.c.b16 %v512, %v511
      %v519 = vpack.c.b16 %v514, %v513
      %v520 = vpack.c.b16 %v516, %v515
      %v526 = vsel %vm269, %v499, 0
      %v529 = vsel %vm269, %v500, 0
      %531 = vmatpush.bf16.msra.mxu0 0
      %532 = vmatpush.bf16.msra.mxu0 0
      %533 = vmatpush.bf16.msra.mxu0 0
      %534 = vmatpush.bf16.msra.mxu0 0
      %535 = vmatpush.bf16.msra.mxu0 %v520
      %536 = vmatpush.bf16.msra.mxu0 %v519
      %537 = vmatpush.bf16.msra.mxu0 %v518
      %538 = vmatpush.bf16.msra.mxu0 %v517
      %539 = vmatmul.bf16.gmra.mxu0 %v526
      %v540 = vpop.f32.mrf.mxu0
      %v541 = vadd.f32 0.0, %v540
      %v542 = vpop.f32.mrf.mxu0
      %v543 = vadd.f32 0.0, %v542
      %544 = vmatmul.bf16.gmra.mxu0 %v529
      %v545 = vpop.f32.mrf.mxu0
      %v546 = vadd.f32 0.0, %v545
      %v547 = vpop.f32.mrf.mxu0
      %548 = vdwg.mxu0
      %v549 = vadd.f32 %v460, %v541
      %v550 = vadd.f32 %v461, %v543
      %v551 = vadd.f32 %v462, %v546
      %s552 = scalar_lea.vmem %s165, 12
      %v553 = vld [vmem:[%s552] sm:$0xf]
      %v554 = vld [vmem:[%s552 + $0xc] sm:$0xf]
      %v555 = vld [vmem:[%s552 + $0x18] sm:$0xf]
      %s556 = scalar_lea.vmem %s1, 128
      %v557 = vld [vmem:[%s556] sm:$0xf]
      %v558 = vld [vmem:[%s556 + $0x4] sm:$0xf]
      %v559 = vld [vmem:[%s556 + $0x8] sm:$0xf]
      %v560 = vld [vmem:[%s556 + $0xc] sm:$0xf]
      %v561 = vld [vmem:[%s556 + $0x10] sm:$0xf]
      %v562 = vld [vmem:[%s556 + $0x14] sm:$0xf]
      %v563 = vld [vmem:[%s556 + $0x18] sm:$0xf]
      %v564 = vld [vmem:[%s556 + $0x1c] sm:$0xf]
      %v568 = vunpack.c.l.b16 %v553
      %v569 = vunpack.c.l.b16 %v554
      %v570 = vunpack.c.l.b16 %v555
      %v571 = vpack.c.b16 %v569, %v568
      %v572 = vpack.c.b16 %v570, %v570
      %v581 = vunpack.c.l.b16 %v557
      %v582 = vunpack.c.l.b16 %v558
      %v583 = vunpack.c.l.b16 %v559
      %v584 = vunpack.c.l.b16 %v560
      %v585 = vunpack.c.l.b16 %v561
      %v586 = vunpack.c.l.b16 %v562
      %v587 = vunpack.c.l.b16 %v563
      %v588 = vunpack.c.l.b16 %v564
      %v589 = vpack.c.b16 %v582, %v581
      %v590 = vpack.c.b16 %v584, %v583
      %v591 = vpack.c.b16 %v586, %v585
      %v592 = vpack.c.b16 %v588, %v587
      %v598 = vsel %vm269, %v571, 0
      %v601 = vsel %vm269, %v572, 0
      %603 = vmatpush.bf16.msra.mxu0 0
      %604 = vmatpush.bf16.msra.mxu0 0
      %605 = vmatpush.bf16.msra.mxu0 0
      %606 = vmatpush.bf16.msra.mxu0 0
      %607 = vmatpush.bf16.msra.mxu0 %v592
      %608 = vmatpush.bf16.msra.mxu0 %v591
      %609 = vmatpush.bf16.msra.mxu0 %v590
      %610 = vmatpush.bf16.msra.mxu0 %v589
      %611 = vmatmul.bf16.gmra.mxu0 %v598
      %v612 = vpop.f32.mrf.mxu0
      %v613 = vadd.f32 0.0, %v612
      %v614 = vpop.f32.mrf.mxu0
      %v615 = vadd.f32 0.0, %v614
      %616 = vmatmul.bf16.gmra.mxu0 %v601
      %v617 = vpop.f32.mrf.mxu0
      %v618 = vadd.f32 0.0, %v617
      %v619 = vpop.f32.mrf.mxu0
      %620 = vdwg.mxu0
      %v621 = vadd.f32 %v549, %v613
      %v622 = vadd.f32 %v550, %v615
      %v623 = vadd.f32 %v551, %v618
      %v624 = vld [vmem:[%s552] sm:$0xf]
      %v625 = vld [vmem:[%s552 + $0x4] sm:$0x1]
      %v626 = vld [vmem:[%s552 + $0xc] sm:$0xf]
      %v627 = vld [vmem:[%s552 + $0x10] sm:$0x1]
      %v628 = vld [vmem:[%s552 + $0x18] sm:$0xf]
      %v629 = vld [vmem:[%s552 + $0x1c] sm:$0x1]
      %v631 = vshrl.u32 %v624, 16
      %v633 = vrot.slane %v631, 4
      %v634 = vshll.u32 %v624, 16
      %v636 = vrot.slane %v634, 5
      %v637 = vor.u32 %v633, %v636
      %v638 = vrot.slane %v637, 4
      %v640 = vshll.u32 %v625, 16
      %v642 = vrot.slane %v640, 5
      %v643 = vsel %vm188, %v638, %v642
      %v645 = vshrl.u32 %v626, 16
      %v647 = vrot.slane %v645, 4
      %v648 = vshll.u32 %v626, 16
      %v650 = vrot.slane %v648, 5
      %v651 = vor.u32 %v647, %v650
      %v652 = vrot.slane %v651, 4
      %v654 = vshll.u32 %v627, 16
      %v656 = vrot.slane %v654, 5
      %v657 = vsel %vm188, %v652, %v656
      %v659 = vshrl.u32 %v628, 16
      %v661 = vrot.slane %v659, 4
      %v662 = vshll.u32 %v628, 16
      %v664 = vrot.slane %v662, 5
      %v665 = vor.u32 %v661, %v664
      %v666 = vrot.slane %v665, 4
      %v668 = vshll.u32 %v629, 16
      %v670 = vrot.slane %v668, 5
      %v671 = vsel %vm188, %v666, %v670
      %s672 = scalar_lea.vmem %s1, 160
      %v673 = vld [vmem:[%s672] sm:$0xf]
      %v674 = vld [vmem:[%s672 + $0x4] sm:$0xf]
      %v675 = vld [vmem:[%s672 + $0x8] sm:$0xf]
      %v676 = vld [vmem:[%s672 + $0xc] sm:$0xf]
      %v677 = vld [vmem:[%s672 + $0x10] sm:$0xf]
      %v678 = vld [vmem:[%s672 + $0x14] sm:$0xf]
      %v679 = vld [vmem:[%s672 + $0x18] sm:$0xf]
      %v680 = vld [vmem:[%s672 + $0x1c] sm:$0xf]
      %v681 = vunpack.c.l.b16 %v643
      %v682 = vunpack.c.l.b16 %v657
      %v683 = vunpack.c.l.b16 %v671
      %v684 = vpack.c.b16 %v682, %v681
      %v685 = vpack.c.b16 %v683, %v683
      %v694 = vunpack.c.l.b16 %v673
      %v695 = vunpack.c.l.b16 %v674
      %v696 = vunpack.c.l.b16 %v675
      %v697 = vunpack.c.l.b16 %v676
      %v698 = vunpack.c.l.b16 %v677
      %v699 = vunpack.c.l.b16 %v678
      %v700 = vunpack.c.l.b16 %v679
      %v701 = vunpack.c.l.b16 %v680
      %v702 = vpack.c.b16 %v695, %v694
      %v703 = vpack.c.b16 %v697, %v696
      %v704 = vpack.c.b16 %v699, %v698
      %v705 = vpack.c.b16 %v701, %v700
      %v711 = vsel %vm269, %v684, 0
      %v714 = vsel %vm269, %v685, 0
      %716 = vmatpush.bf16.msra.mxu0 0
      %717 = vmatpush.bf16.msra.mxu0 0
      %718 = vmatpush.bf16.msra.mxu0 0
      %719 = vmatpush.bf16.msra.mxu0 0
      %720 = vmatpush.bf16.msra.mxu0 %v705
      %721 = vmatpush.bf16.msra.mxu0 %v704
      %722 = vmatpush.bf16.msra.mxu0 %v703
      %723 = vmatpush.bf16.msra.mxu0 %v702
      %724 = vmatmul.bf16.gmra.mxu0 %v711
      %v725 = vpop.f32.mrf.mxu0
      %v726 = vadd.f32 0.0, %v725
      %v727 = vpop.f32.mrf.mxu0
      %v728 = vadd.f32 0.0, %v727
      %729 = vmatmul.bf16.gmra.mxu0 %v714
      %v730 = vpop.f32.mrf.mxu0
      %v731 = vadd.f32 0.0, %v730
      %v732 = vpop.f32.mrf.mxu0
      %733 = vdwg.mxu0
      %v734 = vadd.f32 %v621, %v726
      %v735 = vadd.f32 %v622, %v728
      %v736 = vadd.f32 %v623, %v731
      %v737 = vld [vmem:[%s552 + $0x4] sm:$0xf]
      %v738 = vld [vmem:[%s552 + $0x8] sm:$0x1]
      %v739 = vld [vmem:[%s552 + $0x10] sm:$0xf]
      %v740 = vld [vmem:[%s552 + $0x14] sm:$0x1]
      %v741 = vld [vmem:[%s552 + $0x1c] sm:$0xf]
      %v742 = vld [vmem:[%s552 + $0x20] sm:$0x1]
      %v744 = vshrl.u32 %v737, 16
      %v746 = vrot.slane %v744, 4
      %v747 = vshll.u32 %v737, 16
      %v749 = vrot.slane %v747, 5
      %v750 = vor.u32 %v746, %v749
      %v751 = vrot.slane %v750, 4
      %v753 = vshll.u32 %v738, 16
      %v755 = vrot.slane %v753, 5
      %v756 = vsel %vm188, %v751, %v755
      %v758 = vshrl.u32 %v739, 16
      %v760 = vrot.slane %v758, 4
      %v761 = vshll.u32 %v739, 16
      %v763 = vrot.slane %v761, 5
      %v764 = vor.u32 %v760, %v763
      %v765 = vrot.slane %v764, 4
      %v767 = vshll.u32 %v740, 16
      %v769 = vrot.slane %v767, 5
      %v770 = vsel %vm188, %v765, %v769
      %v772 = vshrl.u32 %v741, 16
      %v774 = vrot.slane %v772, 4
      %v775 = vshll.u32 %v741, 16
      %v777 = vrot.slane %v775, 5
      %v778 = vor.u32 %v774, %v777
      %v779 = vrot.slane %v778, 4
      %v781 = vshll.u32 %v742, 16
      %v783 = vrot.slane %v781, 5
      %v784 = vsel %vm188, %v779, %v783
      %s785 = scalar_lea.vmem %s1, 192
      %v786 = vld [vmem:[%s785] sm:$0xf]
      %v787 = vld [vmem:[%s785 + $0x4] sm:$0xf]
      %v788 = vld [vmem:[%s785 + $0x8] sm:$0xf]
      %v789 = vld [vmem:[%s785 + $0xc] sm:$0xf]
      %v790 = vld [vmem:[%s785 + $0x10] sm:$0xf]
      %v791 = vld [vmem:[%s785 + $0x14] sm:$0xf]
      %v792 = vld [vmem:[%s785 + $0x18] sm:$0xf]
      %v793 = vld [vmem:[%s785 + $0x1c] sm:$0xf]
      %v794 = vunpack.c.l.b16 %v756
      %v795 = vunpack.c.l.b16 %v770
      %v796 = vunpack.c.l.b16 %v784
      %v797 = vpack.c.b16 %v795, %v794
      %v798 = vpack.c.b16 %v796, %v796
      %v807 = vunpack.c.l.b16 %v786
      %v808 = vunpack.c.l.b16 %v787
      %v809 = vunpack.c.l.b16 %v788
      %v810 = vunpack.c.l.b16 %v789
      %v811 = vunpack.c.l.b16 %v790
      %v812 = vunpack.c.l.b16 %v791
      %v813 = vunpack.c.l.b16 %v792
      %v814 = vunpack.c.l.b16 %v793
      %v815 = vpack.c.b16 %v808, %v807
      %v816 = vpack.c.b16 %v810, %v809
      %v817 = vpack.c.b16 %v812, %v811
      %v818 = vpack.c.b16 %v814, %v813
      %v824 = vsel %vm269, %v797, 0
      %v827 = vsel %vm269, %v798, 0
      %829 = vmatpush.bf16.msra.mxu0 0
      %830 = vmatpush.bf16.msra.mxu0 0
      %831 = vmatpush.bf16.msra.mxu0 0
      %832 = vmatpush.bf16.msra.mxu0 0
      %833 = vmatpush.bf16.msra.mxu0 %v818
      %834 = vmatpush.bf16.msra.mxu0 %v817
      %835 = vmatpush.bf16.msra.mxu0 %v816
      %836 = vmatpush.bf16.msra.mxu0 %v815
      %837 = vmatmul.bf16.gmra.mxu0 %v824
      %v838 = vpop.f32.mrf.mxu0
      %v839 = vadd.f32 0.0, %v838
      %v840 = vpop.f32.mrf.mxu0
      %v841 = vadd.f32 0.0, %v840
      %842 = vmatmul.bf16.gmra.mxu0 %v827
      %v843 = vpop.f32.mrf.mxu0
      %v844 = vadd.f32 0.0, %v843
      %v845 = vpop.f32.mrf.mxu0
      %846 = vdwg.mxu0
      %v847 = vadd.f32 %v734, %v839
      %v848 = vadd.f32 %v735, %v841
      %v849 = vadd.f32 %v736, %v844
      %v850 = vld [vmem:[%s552 + $0x4] sm:$0xe]
      %v851 = vld [vmem:[%s552 + $0x10] sm:$0xe]
      %v852 = vld [vmem:[%s552 + $0x1c] sm:$0xe]
      %v859 = vrot.slane %v850, 5
      %v860 = vrot.slane %v859, 4
      %v861 = vrot.slane %v738, 5
      %v862 = vsel %vm474, %v860, %v861
      %v863 = vrot.slane %v851, 5
      %v864 = vrot.slane %v863, 4
      %v865 = vrot.slane %v740, 5
      %v866 = vsel %vm474, %v864, %v865
      %v867 = vrot.slane %v852, 5
      %v868 = vrot.slane %v867, 4
      %v869 = vrot.slane %v742, 5
      %v870 = vsel %vm474, %v868, %v869
      %s871 = scalar_lea.vmem %s1, 224
      %v872 = vld [vmem:[%s871] sm:$0xf]
      %v873 = vld [vmem:[%s871 + $0x4] sm:$0xf]
      %v874 = vld [vmem:[%s871 + $0x8] sm:$0xf]
      %v875 = vld [vmem:[%s871 + $0xc] sm:$0xf]
      %v876 = vld [vmem:[%s871 + $0x10] sm:$0xf]
      %v877 = vld [vmem:[%s871 + $0x14] sm:$0xf]
      %v878 = vld [vmem:[%s871 + $0x18] sm:$0xf]
      %v879 = vld [vmem:[%s871 + $0x1c] sm:$0xf]
      %v880 = vunpack.c.l.b16 %v862
      %v881 = vunpack.c.l.b16 %v866
      %v882 = vunpack.c.l.b16 %v870
      %v883 = vpack.c.b16 %v881, %v880
      %v884 = vpack.c.b16 %v882, %v882
      %v893 = vunpack.c.l.b16 %v872
      %v894 = vunpack.c.l.b16 %v873
      %v895 = vunpack.c.l.b16 %v874
      %v896 = vunpack.c.l.b16 %v875
      %v897 = vunpack.c.l.b16 %v876
      %v898 = vunpack.c.l.b16 %v877
      %v899 = vunpack.c.l.b16 %v878
      %v900 = vunpack.c.l.b16 %v879
      %v901 = vpack.c.b16 %v894, %v893
      %v902 = vpack.c.b16 %v896, %v895
      %v903 = vpack.c.b16 %v898, %v897
      %v904 = vpack.c.b16 %v900, %v899
      %v910 = vsel %vm269, %v883, 0
      %v913 = vsel %vm269, %v884, 0
      %915 = vmatpush.bf16.msra.mxu0 0
      %916 = vmatpush.bf16.msra.mxu0 0
      %917 = vmatpush.bf16.msra.mxu0 0
      %918 = vmatpush.bf16.msra.mxu0 0
      %919 = vmatpush.bf16.msra.mxu0 %v904
      %920 = vmatpush.bf16.msra.mxu0 %v903
      %921 = vmatpush.bf16.msra.mxu0 %v902
      %922 = vmatpush.bf16.msra.mxu0 %v901
      %923 = vmatmul.bf16.gmra.mxu0 %v910
      %v924 = vpop.f32.mrf.mxu0
      %v925 = vadd.f32 0.0, %v924
      %v926 = vpop.f32.mrf.mxu0
      %v927 = vadd.f32 0.0, %v926
      %928 = vmatmul.bf16.gmra.mxu0 %v913
      %v929 = vpop.f32.mrf.mxu0
      %v930 = vadd.f32 0.0, %v929
      %v931 = vpop.f32.mrf.mxu0
      %932 = vdwg.mxu0
      %v933 = vadd.f32 %v847, %v925
      %v934 = vadd.f32 %v848, %v927
      %v935 = vadd.f32 %v849, %v930
      %v936 = vld [vmem:[%s2] sm:$0x1]
      %v938 = vperm.slane %v936, 0
      %v940 = vadd.f32 %v933, %v938
      %v941 = vadd.f32 %v934, %v938
      %v942 = vadd.f32 %v935, %v938
      %v943 = vmax.f32 %v940, 0.0
      %v944 = vmax.f32 %v941, 0.0
      %v945 = vmax.f32 %v942, 0.0
      %v946 = vpack.c.bf16 %v943, %v943
      %v947 = vpack.c.bf16 %v944, %v944
      %v948 = vpack.c.bf16 %v945, %v945
      %vm949 = vcmask 519168
      %950 = vst.msk [vmem:[%s170] sm:$0xf] %vm949, %v946
      %951 = vst.msk [vmem:[%s170 + $0x4] sm:$0xf] %vm949, %v947
      %952 = vst.msk [vmem:[%s170 + $0x8] sm:$0xf] %vm949, %v948
      %p953 = scmp.lt.s32.totalorder %s14, 1
      %s954 = scalar_select %p953, %s14, 1
      %s955 = smul.addr %s954, 3
      %s956 = smul.addr %s955, 4
      %s957 = scalar_lea.vmem %s3, %s956
      // Predicated region
      $region33: #{cnn_encoder_forward.4} parent=31 // pred_check
        %p958 = pneg %p100
      $region34: #{cnn_encoder_forward.4} parent=31 // pred_check_branch
        %960 = sbr.rel (%p958) target = $region36
      $region35: #{cnn_encoder_forward.4} parent=31 // pred_region
        _
      $region36: #{cnn_encoder_forward.4} parent=31 // pred_fallthru
        _
    $region32: #{cnn_encoder_forward.4} parent=5 // pred_fallthru
      _
    %p961 = scmp.le.s32.totalorder 2, %s9
    // Predicated region
    $region37: #{cnn_encoder_forward.4} parent=5 // pred_check
      %p962 = pneg %p961
    $region38: #{cnn_encoder_forward.4} parent=5 // pred_check_branch
      %964 = sbr.rel (%p962) target = $region40
    $region39: #{cnn_encoder_forward.4} parent=5 // pred_region
      %s965 = ssub.s32 %s9, 2
      // Predicated region
      $region41: #{cnn_encoder_forward.4} parent=39 // pred_check
        %p966 = pneg %p106
      $region42: #{cnn_encoder_forward.4} parent=39 // pred_check_branch
        %968 = sbr.rel (%p966) target = $region44
      $region43: #{cnn_encoder_forward.4} parent=39 // pred_region
        %p969 = scmp.lt.s32.totalorder %s15, 1
        %s970 = scalar_select %p969, %s15, 1
        %s971 = smul.addr %s970, 3
        %s972 = smul.addr %s971, 4
        %s973 = scalar_lea.vmem %s3, %s972
      $region44: #{cnn_encoder_forward.4} parent=39 // pred_fallthru
        _
    $region40: #{cnn_encoder_forward.4} parent=5 // pred_fallthru
      _
  $region6: #{cnn_encoder_forward.4} parent=0 // loop_footer
    %s13 = sadd.s32 1, %s9
  $region7: #{cnn_encoder_forward.4} parent=0 // loop_footer_branch
    %8 = sbr.rel target = $region3
  $region8: #{cnn_encoder_forward.4} parent=0 // loop_exit
    _

// kernel: cnn_encoder_forward.3
$region0: #{cnn_encoder_forward.3}
  #allocation0 [shape = 'u32[]', space=smem, size = 0x4, offset = 0x4, fixed_abs, tag = 'smem constant byte address 0x4 - core index']
  #allocation1 [shape = 'u32[72,128]{1,0:T(1,128)}', space=vmem, size = 0x9000, scoped, tag = 'internal scratch']
  %s0 = inlined_call_operand.vmem [shape: bf16[2,9,36,16], index: 0, kind: input, shape index: {}]
  %s1 = inlined_call_operand.vmem [shape: bf16[16,16,32], index: 1, kind: input, shape index: {}]
  %s2 = inlined_call_operand.vmem [shape: f32[1,32], index: 2, kind: input, shape index: {}]
  %s3 = inlined_call_operand.vmem [shape: bf16[2,8,8,32], index: 3, kind: output, shape index: {}]
  %s4 = sld [smem:[#allocation0]]
  $region45: #{cnn_encoder_forward.3} parent=0
    _
  %s6 = ssub.s32 1, %s4
  %s7 = scalar_select 0, %s6, %s4
  loop: start=0, step=1, limit=4
  $region2: #{cnn_encoder_forward.3} parent=0 // loop_pre_header
    _
  $region3: #{cnn_encoder_forward.3} parent=0 // loop_header
    %s9 = sphi 0, %s13
    %p10 = scmp.ge.s32.totalorder %s9, 4
    %s19 = sphi 0, %s21
    %s22 = sphi 0, %s19
    %s23 = sphi 0, %s22
    %s39 = sphi 0, %s23
    %s43 = sphi 0, %s43
    %s45 = sphi 0, %s43
    %s46 = sphi 0, %s45
    %s60 = sphi 0, %s46
    %s64 = sphi 0, %s64
    %s66 = sphi 0, %s64
    %s67 = sphi 0, %s66
    %s81 = sphi 0, %s67
    %s87 = sphi 0, %s89
    %s90 = sphi 0, %s87
    %s91 = sphi 0, %s90
    %s107 = sphi 0, %s91
  $region4: #{cnn_encoder_forward.3} parent=0 // loop_header_branch
    %12 = sbr.rel (%p10) target = $region8
  $region5: #{cnn_encoder_forward.3} parent=0 // loop_body
    %s14 = ssub.s32 %s9, 1
    %s15 = ssub.s32 %s9, 2
    %s16 = sadd.s32 %s9, 1
    %s17 = ssub.s32 %s9, %s16
    %p18 = scmp.eq.s32.totalorder %s17, 0
    %s20 = sadd.s32 %s19, 1
    %s21 = scalar_select %p18, %s19, %s20
    %p24 = pneg %p18
    %p25 = scmp.eq.s32.totalorder %s9, 1
    %p26 = por %p24, %p25
    %p27 = scmp.ne.s32.totalorder %s19, %s22
    %p28 = scmp.eq.s32.totalorder %s9, 0
    %p29 = por %p27, %p28
    %p30 = scmp.ne.s32.totalorder %s19, %s22
    %p31 = scmp.eq.s32.totalorder %s14, 1
    %p32 = por %p30, %p31
    %p33 = scmp.ne.s32.totalorder %s22, %s23
    %p34 = scmp.eq.s32.totalorder %s14, 0
    %p35 = por %p33, %p34
    %p36 = scmp.ne.s32.totalorder %s22, %s23
    %p37 = scmp.eq.s32.totalorder %s15, 1
    %p38 = por %p36, %p37
    %p40 = scmp.ne.s32.totalorder %s23, %s39
    %p41 = scmp.eq.s32.totalorder %s15, 0
    %p42 = por %p40, %p41
    %s44 = sadd.s32 %s43, 1
    %p47 = scmp.eq.s32.totalorder %s9, 1
    %p48 = scmp.ne.s32.totalorder %s43, %s45
    %p49 = scmp.eq.s32.totalorder %s9, 0
    %p50 = por %p48, %p49
    %p51 = scmp.ne.s32.totalorder %s43, %s45
    %p52 = scmp.eq.s32.totalorder %s14, 1
    %p53 = por %p51, %p52
    %p54 = scmp.ne.s32.totalorder %s45, %s46
    %p55 = scmp.eq.s32.totalorder %s14, 0
    %p56 = por %p54, %p55
    %p57 = scmp.ne.s32.totalorder %s45, %s46
    %p58 = scmp.eq.s32.totalorder %s15, 1
    %p59 = por %p57, %p58
    %p61 = scmp.ne.s32.totalorder %s46, %s60
    %p62 = scmp.eq.s32.totalorder %s15, 0
    %p63 = por %p61, %p62
    %s65 = sadd.s32 %s64, 1
    %p68 = scmp.eq.s32.totalorder %s9, 1
    %p69 = scmp.ne.s32.totalorder %s64, %s66
    %p70 = scmp.eq.s32.totalorder %s9, 0
    %p71 = por %p69, %p70
    %p72 = scmp.ne.s32.totalorder %s64, %s66
    %p73 = scmp.eq.s32.totalorder %s14, 1
    %p74 = por %p72, %p73
    %p75 = scmp.ne.s32.totalorder %s66, %s67
    %p76 = scmp.eq.s32.totalorder %s14, 0
    %p77 = por %p75, %p76
    %p78 = scmp.ne.s32.totalorder %s66, %s67
    %p79 = scmp.eq.s32.totalorder %s15, 1
    %p80 = por %p78, %p79
    %p82 = scmp.ne.s32.totalorder %s67, %s81
    %p83 = scmp.eq.s32.totalorder %s15, 0
    %p84 = por %p82, %p83
    %s85 = ssub.s32 %s9, %s16
    %p86 = scmp.eq.s32.totalorder %s85, 0
    %s88 = sadd.s32 %s87, 1
    %s89 = scalar_select %p86, %s87, %s88
    %p92 = pneg %p86
    %p93 = scmp.eq.s32.totalorder %s9, 1
    %p94 = por %p92, %p93
    %p95 = scmp.ne.s32.totalorder %s87, %s90
    %p96 = scmp.eq.s32.totalorder %s9, 0
    %p97 = por %p95, %p96
    %p98 = scmp.ne.s32.totalorder %s87, %s90
    %p99 = scmp.eq.s32.totalorder %s14, 1
    %p100 = por %p98, %p99
    %p101 = scmp.ne.s32.totalorder %s90, %s91
    %p102 = scmp.eq.s32.totalorder %s14, 0
    %p103 = por %p101, %p102
    %p104 = scmp.ne.s32.totalorder %s90, %s91
    %p105 = scmp.eq.s32.totalorder %s15, 1
    %p106 = por %p104, %p105
    %p108 = scmp.ne.s32.totalorder %s91, %s107
    %p109 = scmp.eq.s32.totalorder %s15, 0
    %p110 = por %p108, %p109
    %p111 = scmp.le.s32.totalorder 1, %s9
    %p112 = scmp.lt.s32.totalorder %s9, 3
    %p113 = pnand %p111, %p112
    %p114 = pneg %p113
    // Predicated region
    $region9: #{cnn_encoder_forward.3} parent=5 // pred_check
      _
    $region10: #{cnn_encoder_forward.3} parent=5 // pred_check_branch
      %116 = sbr.rel (%p113) target = $region12
    $region11: #{cnn_encoder_forward.3} parent=5 // pred_region
      %s117 = ssub.s32 %s9, 1
      // Predicated region
      $region13: #{cnn_encoder_forward.3} parent=11 // pred_check
        %p118 = pneg %p56
      $region14: #{cnn_encoder_forward.3} parent=11 // pred_check_branch
        %120 = sbr.rel (%p118) target = $region16
      $region15: #{cnn_encoder_forward.3} parent=11 // pred_region
        _
      $region16: #{cnn_encoder_forward.3} parent=11 // pred_fallthru
        _
      // Predicated region
      $region17: #{cnn_encoder_forward.3} parent=11 // pred_check
        %p121 = pneg %p77
      $region18: #{cnn_encoder_forward.3} parent=11 // pred_check_branch
        %123 = sbr.rel (%p121) target = $region20
      $region19: #{cnn_encoder_forward.3} parent=11 // pred_region
        _
      $region20: #{cnn_encoder_forward.3} parent=11 // pred_fallthru
        _
    $region12: #{cnn_encoder_forward.3} parent=5 // pred_fallthru
      _
    %p124 = scmp.lt.s32.totalorder %s9, 2
    // Predicated region
    $region21: #{cnn_encoder_forward.3} parent=5 // pred_check
      %p125 = pneg %p124
    $region22: #{cnn_encoder_forward.3} parent=5 // pred_check_branch
      %127 = sbr.rel (%p125) target = $region24
    $region23: #{cnn_encoder_forward.3} parent=5 // pred_region
      // Predicated region
      $region25: #{cnn_encoder_forward.3} parent=23 // pred_check
        %p128 = pneg %p29
      $region26: #{cnn_encoder_forward.3} parent=23 // pred_check_branch
        %130 = sbr.rel (%p128) target = $region28
      $region27: #{cnn_encoder_forward.3} parent=23 // pred_region
        %p131 = scmp.lt.s32.totalorder %s9, 1
        %s132 = scalar_select %p131, %s9, 1
        %s133 = smul.addr %s132, 45
        %s134 = smul.addr %s133, 4
        %s135 = scalar_lea.vmem %s0, %s134
      $region28: #{cnn_encoder_forward.3} parent=23 // pred_fallthru
        _
    $region24: #{cnn_encoder_forward.3} parent=5 // pred_fallthru
      _
    %p136 = scmp.le.s32.totalorder 1, %s9
    %p137 = scmp.lt.s32.totalorder %s9, 3
    %p138 = pnand %p136, %p137
    %p139 = pneg %p138
    // Predicated region
    $region29: #{cnn_encoder_forward.3} parent=5 // pred_check
      _
    $region30: #{cnn_encoder_forward.3} parent=5 // pred_check_branch
      %141 = sbr.rel (%p138) target = $region32
    $region31: #{cnn_encoder_forward.3} parent=5 // pred_region
      %s142 = ssub.s32 %s9, 1
      %p143 = scmp.lt.s32.totalorder %s14, 1
      %s144 = scalar_select %p143, %s14, 1
      %s145 = smul.addr %s144, 45
      %s146 = smul.addr %s145, 4
      %s147 = scalar_lea.vmem %s0, %s146
      %p148 = pneg %p35
      %p149 = pneg %p32
      %p150 = pneg %p56
      %p151 = pneg %p53
      %p152 = pneg %p77
      %p153 = pneg %p74
      %p154 = pneg %p103
      %p155 = pneg %p100
      %p156 = scmp.lt.s32.totalorder %s14, 1
      %s157 = scalar_select %p156, %s14, 1
      %s158 = smul.addr %s157, 8
      %s159 = smul.addr %s158, 4
      %s160 = scalar_lea.vmem %s3, %s159
      %p161 = scmp.lt.s32.totalorder %s14, 1
      %s162 = scalar_select %p161, %s14, 1
      %s163 = smul.addr %s162, 45
      %s164 = smul.addr %s163, 4
      %s165 = scalar_lea.vmem %s0, %s164
      %p166 = scmp.lt.s32.totalorder %s14, 1
      %s167 = scalar_select %p166, %s14, 1
      %s168 = smul.addr %s167, 8
      %s169 = smul.addr %s168, 4
      %s170 = scalar_lea.vmem %s3, %s169
      %v172 = vld [vmem:[%s165] sm:$0xf]
      %v173 = vld [vmem:[%s165 + $0x14] sm:$0xf]
      %v174 = vld [vmem:[%s165 + $0x28] sm:$0xf]
      %v175 = vld [vmem:[%s165 + $0x3c] sm:$0xf]
      %v176 = vld [vmem:[%s165 + $0x50] sm:$0xf]
      %v177 = vld [vmem:[%s165 + $0x64] sm:$0xf]
      %v178 = vld [vmem:[%s165 + $0x78] sm:$0xf]
      %v179 = vld [vmem:[%s165 + $0x8c] sm:$0xf]
      %v180 = vld [vmem:[%s1] sm:$0xf]
      %v181 = vld [vmem:[%s1 + $0x4] sm:$0xf]
      %v182 = vld [vmem:[%s165 + $0x4] sm:$0x1]
      %v183 = vld [vmem:[%s165 + $0x18] sm:$0x1]
      %v184 = vld [vmem:[%s165 + $0x2c] sm:$0x1]
      %v185 = vld [vmem:[%s165 + $0x40] sm:$0x1]
      %v186 = vld [vmem:[%s165 + $0x54] sm:$0x1]
      %v187 = vld [vmem:[%s165 + $0x68] sm:$0x1]
      %v188 = vld [vmem:[%s165 + $0x7c] sm:$0x1]
      %v189 = vld [vmem:[%s165 + $0x90] sm:$0x1]
      %vm190 = vsmask.f32 3328
      %vm191 = vsmask.f32 7440
      %vm192 = vmor %vm190, %vm191
      %v194 = vshrl.u32 %v172, 16
      %v196 = vrot.slane %v194, 4
      %v197 = vshll.u32 %v172, 16
      %v199 = vrot.slane %v197, 5
      %v200 = vor.u32 %v196, %v199
      %v201 = vrot.slane %v200, 4
      %v203 = vshll.u32 %v182, 16
      %v205 = vrot.slane %v203, 5
      %v206 = vsel %vm192, %v201, %v205
      %v208 = vshrl.u32 %v173, 16
      %v210 = vrot.slane %v208, 4
      %v211 = vshll.u32 %v173, 16
      %v213 = vrot.slane %v211, 5
      %v214 = vor.u32 %v210, %v213
      %v215 = vrot.slane %v214, 4
      %v217 = vshll.u32 %v183, 16
      %v219 = vrot.slane %v217, 5
      %v220 = vsel %vm192, %v215, %v219
      %v222 = vshrl.u32 %v174, 16
      %v224 = vrot.slane %v222, 4
      %v225 = vshll.u32 %v174, 16
      %v227 = vrot.slane %v225, 5
      %v228 = vor.u32 %v224, %v227
      %v229 = vrot.slane %v228, 4
      %v231 = vshll.u32 %v184, 16
      %v233 = vrot.slane %v231, 5
      %v234 = vsel %vm192, %v229, %v233
      %v236 = vshrl.u32 %v175, 16
      %v238 = vrot.slane %v236, 4
      %v239 = vshll.u32 %v175, 16
      %v241 = vrot.slane %v239, 5
      %v242 = vor.u32 %v238, %v241
      %v243 = vrot.slane %v242, 4
      %v245 = vshll.u32 %v185, 16
      %v247 = vrot.slane %v245, 5
      %v248 = vsel %vm192, %v243, %v247
      %v250 = vshrl.u32 %v176, 16
      %v252 = vrot.slane %v250, 4
      %v253 = vshll.u32 %v176, 16
      %v255 = vrot.slane %v253, 5
      %v256 = vor.u32 %v252, %v255
      %v257 = vrot.slane %v256, 4
      %v259 = vshll.u32 %v186, 16
      %v261 = vrot.slane %v259, 5
      %v262 = vsel %vm192, %v257, %v261
      %v264 = vshrl.u32 %v177, 16
      %v266 = vrot.slane %v264, 4
      %v267 = vshll.u32 %v177, 16
      %v269 = vrot.slane %v267, 5
      %v270 = vor.u32 %v266, %v269
      %v271 = vrot.slane %v270, 4
      %v273 = vshll.u32 %v187, 16
      %v275 = vrot.slane %v273, 5
      %v276 = vsel %vm192, %v271, %v275
      %v278 = vshrl.u32 %v178, 16
      %v280 = vrot.slane %v278, 4
      %v281 = vshll.u32 %v178, 16
      %v283 = vrot.slane %v281, 5
      %v284 = vor.u32 %v280, %v283
      %v285 = vrot.slane %v284, 4
      %v287 = vshll.u32 %v188, 16
      %v289 = vrot.slane %v287, 5
      %v290 = vsel %vm192, %v285, %v289
      %v292 = vshrl.u32 %v179, 16
      %v294 = vrot.slane %v292, 4
      %v295 = vshll.u32 %v179, 16
      %v297 = vrot.slane %v295, 5
      %v298 = vor.u32 %v294, %v297
      %v299 = vrot.slane %v298, 4
      %v301 = vshll.u32 %v189, 16
      %v303 = vrot.slane %v301, 5
      %v304 = vsel %vm192, %v299, %v303
      %s305 = scalar_lea.vmem %s1, 8
      %v306 = vld [vmem:[%s305] sm:$0xf]
      %v307 = vld [vmem:[%s305 + $0x4] sm:$0xf]
      %v308 = vunpack.c.l.b16 %v206
      %v309 = vunpack.c.l.b16 %v220
      %v310 = vunpack.c.l.b16 %v234
      %v311 = vunpack.c.l.b16 %v248
      %v312 = vunpack.c.l.b16 %v262
      %v313 = vunpack.c.l.b16 %v276
      %v314 = vunpack.c.l.b16 %v290
      %v315 = vunpack.c.l.b16 %v304
      %v316 = vpack.c.b16 %v309, %v308
      %v317 = vpack.c.b16 %v311, %v310
      %v318 = vpack.c.b16 %v313, %v312
      %v319 = vpack.c.b16 %v315, %v314
      %v322 = vunpack.c.l.b16 %v306
      %v323 = vunpack.c.l.b16 %v307
      %v324 = vpack.c.b16 %v323, %v322
      %vm326 = vcmask 130048
      %v328 = vsel %vm326, %v316, 0
      %v331 = vsel %vm326, %v317, 0
      %v334 = vsel %vm326, %v318, 0
      %v337 = vsel %vm326, %v319, 0
      %339 = vmatpush.bf16.msra.mxu0 0
      %340 = vmatpush.bf16.msra.mxu0 0
      %341 = vmatpush.bf16.msra.mxu0 0
      %342 = vmatpush.bf16.msra.mxu0 0
      %343 = vmatpush.bf16.msra.mxu0 0
      %344 = vmatpush.bf16.msra.mxu0 0
      %345 = vmatpush.bf16.msra.mxu0 0
      %346 = vmatpush.bf16.msra.mxu0 %v324
      %347 = vmatmul.bf16.gmra.mxu0 %v328
      %v348 = vpop.f32.mrf.mxu0
      %v349 = vadd.f32 0.0, %v348
      %v350 = vpop.f32.mrf.mxu0
      %v351 = vadd.f32 0.0, %v350
      %352 = vmatmul.bf16.gmra.mxu0 %v331
      %v353 = vpop.f32.mrf.mxu0
      %v354 = vadd.f32 0.0, %v353
      %v355 = vpop.f32.mrf.mxu0
      %v356 = vadd.f32 0.0, %v355
      %357 = vmatmul.bf16.gmra.mxu0 %v334
      %v358 = vpop.f32.mrf.mxu0
      %v359 = vadd.f32 0.0, %v358
      %v360 = vpop.f32.mrf.mxu0
      %v361 = vadd.f32 0.0, %v360
      %362 = vmatmul.bf16.gmra.mxu0 %v337
      %v363 = vpop.f32.mrf.mxu0
      %v364 = vadd.f32 0.0, %v363
      %v365 = vpop.f32.mrf.mxu0
      %v366 = vadd.f32 0.0, %v365
      %367 = vdwg.mxu0
      %v376 = vunpack.c.l.b16 %v172
      %v377 = vunpack.c.l.b16 %v173
      %v378 = vunpack.c.l.b16 %v174
      %v379 = vunpack.c.l.b16 %v175
      %v380 = vunpack.c.l.b16 %v176
      %v381 = vunpack.c.l.b16 %v177
      %v382 = vunpack.c.l.b16 %v178
      %v383 = vunpack.c.l.b16 %v179
      %v384 = vpack.c.b16 %v377, %v376
      %v385 = vpack.c.b16 %v379, %v378
      %v386 = vpack.c.b16 %v381, %v380
      %v387 = vpack.c.b16 %v383, %v382
      %v390 = vunpack.c.l.b16 %v180
      %v391 = vunpack.c.l.b16 %v181
      %v392 = vpack.c.b16 %v391, %v390
      %v395 = vsel %vm326, %v384, 0
      %v398 = vsel %vm326, %v385, 0
      %v401 = vsel %vm326, %v386, 0
      %v404 = vsel %vm326, %v387, 0
      %406 = vmatpush.bf16.msra.mxu0 0
      %407 = vmatpush.bf16.msra.mxu0 0
      %408 = vmatpush.bf16.msra.mxu0 0
      %409 = vmatpush.bf16.msra.mxu0 0
      %410 = vmatpush.bf16.msra.mxu0 0
      %411 = vmatpush.bf16.msra.mxu0 0
      %412 = vmatpush.bf16.msra.mxu0 0
      %413 = vmatpush.bf16.msra.mxu0 %v392
      %414 = vmatmul.bf16.gmra.mxu0 %v395
      %v415 = vpop.f32.mrf.mxu0
      %v416 = vadd.f32 %v349, %v415
      %v417 = vpop.f32.mrf.mxu0
      %v418 = vadd.f32 %v351, %v417
      %419 = vmatmul.bf16.gmra.mxu0 %v398
      %v420 = vpop.f32.mrf.mxu0
      %v421 = vadd.f32 %v354, %v420
      %v422 = vpop.f32.mrf.mxu0
      %v423 = vadd.f32 %v356, %v422
      %424 = vmatmul.bf16.gmra.mxu0 %v401
      %v425 = vpop.f32.mrf.mxu0
      %v426 = vadd.f32 %v359, %v425
      %v427 = vpop.f32.mrf.mxu0
      %v428 = vadd.f32 %v361, %v427
      %429 = vmatmul.bf16.gmra.mxu0 %v404
      %v430 = vpop.f32.mrf.mxu0
      %v431 = vadd.f32 %v364, %v430
      %v432 = vpop.f32.mrf.mxu0
      %v433 = vadd.f32 %v366, %v432
      %434 = vdwg.mxu0
      %v435 = vld [vmem:[%s165 + $0x4] sm:$0xf]
      %v436 = vld [vmem:[%s165 + $0x8] sm:$0x1]
      %v437 = vld [vmem:[%s165 + $0x18] sm:$0xf]
      %v438 = vld [vmem:[%s165 + $0x1c] sm:$0x1]
      %v439 = vld [vmem:[%s165 + $0x2c] sm:$0xf]
      %v440 = vld [vmem:[%s165 + $0x30] sm:$0x1]
      %v441 = vld [vmem:[%s165 + $0x40] sm:$0xf]
      %v442 = vld [vmem:[%s165 + $0x44] sm:$0x1]
      %v443 = vld [vmem:[%s165 + $0x54] sm:$0xf]
      %v444 = vld [vmem:[%s165 + $0x58] sm:$0x1]
      %v445 = vld [vmem:[%s165 + $0x68] sm:$0xf]
      %v446 = vld [vmem:[%s165 + $0x6c] sm:$0x1]
      %v447 = vld [vmem:[%s165 + $0x7c] sm:$0xf]
      %v448 = vld [vmem:[%s165 + $0x80] sm:$0x1]
      %v449 = vld [vmem:[%s165 + $0x90] sm:$0xf]
      %v450 = vld [vmem:[%s165 + $0x94] sm:$0x1]
      %v452 = vshrl.u32 %v435, 16
      %v454 = vrot.slane %v452, 4
      %v455 = vshll.u32 %v435, 16
      %v457 = vrot.slane %v455, 5
      %v458 = vor.u32 %v454, %v457
      %v459 = vrot.slane %v458, 4
      %v461 = vshll.u32 %v436, 16
      %v463 = vrot.slane %v461, 5
      %v464 = vsel %vm192, %v459, %v463
      %v466 = vshrl.u32 %v437, 16
      %v468 = vrot.slane %v466, 4
      %v469 = vshll.u32 %v437, 16
      %v471 = vrot.slane %v469, 5
      %v472 = vor.u32 %v468, %v471
      %v473 = vrot.slane %v472, 4
      %v475 = vshll.u32 %v438, 16
      %v477 = vrot.slane %v475, 5
      %v478 = vsel %vm192, %v473, %v477
      %v480 = vshrl.u32 %v439, 16
      %v482 = vrot.slane %v480, 4
      %v483 = vshll.u32 %v439, 16
      %v485 = vrot.slane %v483, 5
      %v486 = vor.u32 %v482, %v485
      %v487 = vrot.slane %v486, 4
      %v489 = vshll.u32 %v440, 16
      %v491 = vrot.slane %v489, 5
      %v492 = vsel %vm192, %v487, %v491
      %v494 = vshrl.u32 %v441, 16
      %v496 = vrot.slane %v494, 4
      %v497 = vshll.u32 %v441, 16
      %v499 = vrot.slane %v497, 5
      %v500 = vor.u32 %v496, %v499
      %v501 = vrot.slane %v500, 4
      %v503 = vshll.u32 %v442, 16
      %v505 = vrot.slane %v503, 5
      %v506 = vsel %vm192, %v501, %v505
      %v508 = vshrl.u32 %v443, 16
      %v510 = vrot.slane %v508, 4
      %v511 = vshll.u32 %v443, 16
      %v513 = vrot.slane %v511, 5
      %v514 = vor.u32 %v510, %v513
      %v515 = vrot.slane %v514, 4
      %v517 = vshll.u32 %v444, 16
      %v519 = vrot.slane %v517, 5
      %v520 = vsel %vm192, %v515, %v519
      %v522 = vshrl.u32 %v445, 16
      %v524 = vrot.slane %v522, 4
      %v525 = vshll.u32 %v445, 16
      %v527 = vrot.slane %v525, 5
      %v528 = vor.u32 %v524, %v527
      %v529 = vrot.slane %v528, 4
      %v531 = vshll.u32 %v446, 16
      %v533 = vrot.slane %v531, 5
      %v534 = vsel %vm192, %v529, %v533
      %v536 = vshrl.u32 %v447, 16
      %v538 = vrot.slane %v536, 4
      %v539 = vshll.u32 %v447, 16
      %v541 = vrot.slane %v539, 5
      %v542 = vor.u32 %v538, %v541
      %v543 = vrot.slane %v542, 4
      %v545 = vshll.u32 %v448, 16
      %v547 = vrot.slane %v545, 5
      %v548 = vsel %vm192, %v543, %v547
      %v550 = vshrl.u32 %v449, 16
      %v552 = vrot.slane %v550, 4
      %v553 = vshll.u32 %v449, 16
      %v555 = vrot.slane %v553, 5
      %v556 = vor.u32 %v552, %v555
      %v557 = vrot.slane %v556, 4
      %v559 = vshll.u32 %v450, 16
      %v561 = vrot.slane %v559, 5
      %v562 = vsel %vm192, %v557, %v561
      %s563 = scalar_lea.vmem %s1, 16
      %v564 = vld [vmem:[%s563] sm:$0xf]
      %v565 = vld [vmem:[%s563 + $0x4] sm:$0xf]
      %v566 = vunpack.c.l.b16 %v464
      %v567 = vunpack.c.l.b16 %v478
      %v568 = vunpack.c.l.b16 %v492
      %v569 = vunpack.c.l.b16 %v506
      %v570 = vunpack.c.l.b16 %v520
      %v571 = vunpack.c.l.b16 %v534
      %v572 = vunpack.c.l.b16 %v548
      %v573 = vunpack.c.l.b16 %v562
      %v574 = vpack.c.b16 %v567, %v566
      %v575 = vpack.c.b16 %v569, %v568
      %v576 = vpack.c.b16 %v571, %v570
      %v577 = vpack.c.b16 %v573, %v572
      %v580 = vunpack.c.l.b16 %v564
      %v581 = vunpack.c.l.b16 %v565
      %v582 = vpack.c.b16 %v581, %v580
      %v585 = vsel %vm326, %v574, 0
      %v588 = vsel %vm326, %v575, 0
      %v591 = vsel %vm326, %v576, 0
      %v594 = vsel %vm326, %v577, 0
      %596 = vmatpush.bf16.msra.mxu0 0
      %597 = vmatpush.bf16.msra.mxu0 0
      %598 = vmatpush.bf16.msra.mxu0 0
      %599 = vmatpush.bf16.msra.mxu0 0
      %600 = vmatpush.bf16.msra.mxu0 0
      %601 = vmatpush.bf16.msra.mxu0 0
      %602 = vmatpush.bf16.msra.mxu0 0
      %603 = vmatpush.bf16.msra.mxu0 %v582
      %604 = vmatmul.bf16.gmra.mxu0 %v585
      %v605 = vpop.f32.mrf.mxu0
      %v606 = vadd.f32 0.0, %v605
      %v607 = vpop.f32.mrf.mxu0
      %v608 = vadd.f32 0.0, %v607
      %609 = vmatmul.bf16.gmra.mxu0 %v588
      %v610 = vpop.f32.mrf.mxu0
      %v611 = vadd.f32 0.0, %v610
      %v612 = vpop.f32.mrf.mxu0
      %v613 = vadd.f32 0.0, %v612
      %614 = vmatmul.bf16.gmra.mxu0 %v591
      %v615 = vpop.f32.mrf.mxu0
      %v616 = vadd.f32 0.0, %v615
      %v617 = vpop.f32.mrf.mxu0
      %v618 = vadd.f32 0.0, %v617
      %619 = vmatmul.bf16.gmra.mxu0 %v594
      %v620 = vpop.f32.mrf.mxu0
      %v621 = vadd.f32 0.0, %v620
      %v622 = vpop.f32.mrf.mxu0
      %v623 = vadd.f32 0.0, %v622
      %624 = vdwg.mxu0
      %v625 = vadd.f32 %v416, %v606
      %v626 = vadd.f32 %v418, %v608
      %v627 = vadd.f32 %v421, %v611
      %v628 = vadd.f32 %v423, %v613
      %v629 = vadd.f32 %v426, %v616
      %v630 = vadd.f32 %v428, %v618
      %v631 = vadd.f32 %v431, %v621
      %v632 = vadd.f32 %v433, %v623
      %v633 = vld [vmem:[%s165 + $0x4] sm:$0xe]
      %v634 = vld [vmem:[%s165 + $0x18] sm:$0xe]
      %v635 = vld [vmem:[%s165 + $0x2c] sm:$0xe]
      %v636 = vld [vmem:[%s165 + $0x40] sm:$0xe]
      %v637 = vld [vmem:[%s165 + $0x54] sm:$0xe]
      %v638 = vld [vmem:[%s165 + $0x68] sm:$0xe]
      %v639 = vld [vmem:[%s165 + $0x7c] sm:$0xe]
      %v640 = vld [vmem:[%s165 + $0x90] sm:$0xe]
      %vm657 = vcmask 1042432
      %vm658 = vcmask 1046532
      %vm659 = vmor %vm657, %vm658
      %v660 = vrot.slane %v633, 5
      %v661 = vrot.slane %v660, 4
      %v662 = vrot.slane %v436, 5
      %v663 = vsel %vm659, %v661, %v662
      %v664 = vrot.slane %v634, 5
      %v665 = vrot.slane %v664, 4
      %v666 = vrot.slane %v438, 5
      %v667 = vsel %vm659, %v665, %v666
      %v668 = vrot.slane %v635, 5
      %v669 = vrot.slane %v668, 4
      %v670 = vrot.slane %v440, 5
      %v671 = vsel %vm659, %v669, %v670
      %v672 = vrot.slane %v636, 5
      %v673 = vrot.slane %v672, 4
      %v674 = vrot.slane %v442, 5
      %v675 = vsel %vm659, %v673, %v674
      %v676 = vrot.slane %v637, 5
      %v677 = vrot.slane %v676, 4
      %v678 = vrot.slane %v444, 5
      %v679 = vsel %vm659, %v677, %v678
      %v680 = vrot.slane %v638, 5
      %v681 = vrot.slane %v680, 4
      %v682 = vrot.slane %v446, 5
      %v683 = vsel %vm659, %v681, %v682
      %v684 = vrot.slane %v639, 5
      %v685 = vrot.slane %v684, 4
      %v686 = vrot.slane %v448, 5
      %v687 = vsel %vm659, %v685, %v686
      %v688 = vrot.slane %v640, 5
      %v689 = vrot.slane %v688, 4
      %v690 = vrot.slane %v450, 5
      %v691 = vsel %vm659, %v689, %v690
      %s692 = scalar_lea.vmem %s1, 24
      %v693 = vld [vmem:[%s692] sm:$0xf]
      %v694 = vld [vmem:[%s692 + $0x4] sm:$0xf]
      %v695 = vunpack.c.l.b16 %v663
      %v696 = vunpack.c.l.b16 %v667
      %v697 = vunpack.c.l.b16 %v671
      %v698 = vunpack.c.l.b16 %v675
      %v699 = vunpack.c.l.b16 %v679
      %v700 = vunpack.c.l.b16 %v683
      %v701 = vunpack.c.l.b16 %v687
      %v702 = vunpack.c.l.b16 %v691
      %v703 = vpack.c.b16 %v696, %v695
      %v704 = vpack.c.b16 %v698, %v697
      %v705 = vpack.c.b16 %v700, %v699
      %v706 = vpack.c.b16 %v702, %v701
      %v709 = vunpack.c.l.b16 %v693
      %v710 = vunpack.c.l.b16 %v694
      %v711 = vpack.c.b16 %v710, %v709
      %v714 = vsel %vm326, %v703, 0
      %v717 = vsel %vm326, %v704, 0
      %v720 = vsel %vm326, %v705, 0
      %v723 = vsel %vm326, %v706, 0
      %725 = vmatpush.bf16.msra.mxu0 0
      %726 = vmatpush.bf16.msra.mxu0 0
      %727 = vmatpush.bf16.msra.mxu0 0
      %728 = vmatpush.bf16.msra.mxu0 0
      %729 = vmatpush.bf16.msra.mxu0 0
      %730 = vmatpush.bf16.msra.mxu0 0
      %731 = vmatpush.bf16.msra.mxu0 0
      %732 = vmatpush.bf16.msra.mxu0 %v711
      %733 = vmatmul.bf16.gmra.mxu0 %v714
      %v734 = vpop.f32.mrf.mxu0
      %v735 = vadd.f32 0.0, %v734
      %v736 = vpop.f32.mrf.mxu0
      %v737 = vadd.f32 0.0, %v736
      %738 = vmatmul.bf16.gmra.mxu0 %v717
      %v739 = vpop.f32.mrf.mxu0
      %v740 = vadd.f32 0.0, %v739
      %v741 = vpop.f32.mrf.mxu0
      %v742 = vadd.f32 0.0, %v741
      %743 = vmatmul.bf16.gmra.mxu0 %v720
      %v744 = vpop.f32.mrf.mxu0
      %v745 = vadd.f32 0.0, %v744
      %v746 = vpop.f32.mrf.mxu0
      %v747 = vadd.f32 0.0, %v746
      %748 = vmatmul.bf16.gmra.mxu0 %v723
      %v749 = vpop.f32.mrf.mxu0
      %v750 = vadd.f32 0.0, %v749
      %v751 = vpop.f32.mrf.mxu0
      %v752 = vadd.f32 0.0, %v751
      %753 = vdwg.mxu0
      %v754 = vadd.f32 %v625, %v735
      %v755 = vadd.f32 %v626, %v737
      %v756 = vadd.f32 %v627, %v740
      %v757 = vadd.f32 %v628, %v742
      %v758 = vadd.f32 %v629, %v745
      %v759 = vadd.f32 %v630, %v747
      %v760 = vadd.f32 %v631, %v750
      %v761 = vadd.f32 %v632, %v752
      %v762 = vld [vmem:[%s165 + $0x8] sm:$0xe]
      %v763 = vld [vmem:[%s165 + $0xc] sm:$0x1]
      %v764 = vld [vmem:[%s165 + $0x1c] sm:$0xe]
      %v765 = vld [vmem:[%s165 + $0x20] sm:$0x1]
      %v766 = vld [vmem:[%s165 + $0x30] sm:$0xe]
      %v767 = vld [vmem:[%s165 + $0x34] sm:$0x1]
      %v768 = vld [vmem:[%s165 + $0x44] sm:$0xe]
      %v769 = vld [vmem:[%s165 + $0x48] sm:$0x1]
      %v770 = vld [vmem:[%s165 + $0x58] sm:$0xe]
      %v771 = vld [vmem:[%s165 + $0x5c] sm:$0x1]
      %v772 = vld [vmem:[%s165 + $0x6c] sm:$0xe]
      %v773 = vld [vmem:[%s165 + $0x70] sm:$0x1]
      %v774 = vld [vmem:[%s165 + $0x80] sm:$0xe]
      %v775 = vld [vmem:[%s165 + $0x84] sm:$0x1]
      %v776 = vld [vmem:[%s165 + $0x94] sm:$0xe]
      %v777 = vld [vmem:[%s165 + $0x98] sm:$0x1]
      %v794 = vrot.slane %v762, 5
      %v795 = vrot.slane %v794, 4
      %v796 = vrot.slane %v763, 5
      %v797 = vsel %vm659, %v795, %v796
      %v798 = vrot.slane %v764, 5
      %v799 = vrot.slane %v798, 4
      %v800 = vrot.slane %v765, 5
      %v801 = vsel %vm659, %v799, %v800
      %v802 = vrot.slane %v766, 5
      %v803 = vrot.slane %v802, 4
      %v804 = vrot.slane %v767, 5
      %v805 = vsel %vm659, %v803, %v804
      %v806 = vrot.slane %v768, 5
      %v807 = vrot.slane %v806, 4
      %v808 = vrot.slane %v769, 5
      %v809 = vsel %vm659, %v807, %v808
      %v810 = vrot.slane %v770, 5
      %v811 = vrot.slane %v810, 4
      %v812 = vrot.slane %v771, 5
      %v813 = vsel %vm659, %v811, %v812
      %v814 = vrot.slane %v772, 5
      %v815 = vrot.slane %v814, 4
      %v816 = vrot.slane %v773, 5
      %v817 = vsel %vm659, %v815, %v816
      %v818 = vrot.slane %v774, 5
      %v819 = vrot.slane %v818, 4
      %v820 = vrot.slane %v775, 5
      %v821 = vsel %vm659, %v819, %v820
      %v822 = vrot.slane %v776, 5
      %v823 = vrot.slane %v822, 4
      %v824 = vrot.slane %v777, 5
      %v825 = vsel %vm659, %v823, %v824
      %s826 = scalar_lea.vmem %s1, 32
      %v827 = vld [vmem:[%s826] sm:$0xf]
      %v828 = vld [vmem:[%s826 + $0x4] sm:$0xf]
      %v829 = vunpack.c.l.b16 %v797
      %v830 = vunpack.c.l.b16 %v801
      %v831 = vunpack.c.l.b16 %v805
      %v832 = vunpack.c.l.b16 %v809
      %v833 = vunpack.c.l.b16 %v813
      %v834 = vunpack.c.l.b16 %v817
      %v835 = vunpack.c.l.b16 %v821
      %v836 = vunpack.c.l.b16 %v825
      %v837 = vpack.c.b16 %v830, %v829
      %v838 = vpack.c.b16 %v832, %v831
      %v839 = vpack.c.b16 %v834, %v833
      %v840 = vpack.c.b16 %v836, %v835
      %v843 = vunpack.c.l.b16 %v827
      %v844 = vunpack.c.l.b16 %v828
      %v845 = vpack.c.b16 %v844, %v843
      %v848 = vsel %vm326, %v837, 0
      %v851 = vsel %vm326, %v838, 0
      %v854 = vsel %vm326, %v839, 0
      %v857 = vsel %vm326, %v840, 0
      %859 = vmatpush.bf16.msra.mxu0 0
      %860 = vmatpush.bf16.msra.mxu0 0
      %861 = vmatpush.bf16.msra.mxu0 0
      %862 = vmatpush.bf16.msra.mxu0 0
      %863 = vmatpush.bf16.msra.mxu0 0
      %864 = vmatpush.bf16.msra.mxu0 0
      %865 = vmatpush.bf16.msra.mxu0 0
      %866 = vmatpush.bf16.msra.mxu0 %v845
      %867 = vmatmul.bf16.gmra.mxu0 %v848
      %v868 = vpop.f32.mrf.mxu0
      %v869 = vadd.f32 0.0, %v868
      %v870 = vpop.f32.mrf.mxu0
      %v871 = vadd.f32 0.0, %v870
      %872 = vmatmul.bf16.gmra.mxu0 %v851
      %v873 = vpop.f32.mrf.mxu0
      %v874 = vadd.f32 0.0, %v873
      %v875 = vpop.f32.mrf.mxu0
      %v876 = vadd.f32 0.0, %v875
      %877 = vmatmul.bf16.gmra.mxu0 %v854
      %v878 = vpop.f32.mrf.mxu0
      %v879 = vadd.f32 0.0, %v878
      %v880 = vpop.f32.mrf.mxu0
      %v881 = vadd.f32 0.0, %v880
      %882 = vmatmul.bf16.gmra.mxu0 %v857
      %v883 = vpop.f32.mrf.mxu0
      %v884 = vadd.f32 0.0, %v883
      %v885 = vpop.f32.mrf.mxu0
      %v886 = vadd.f32 0.0, %v885
      %887 = vdwg.mxu0
      %v888 = vadd.f32 %v754, %v869
      %v889 = vadd.f32 %v755, %v871
      %v890 = vadd.f32 %v756, %v874
      %v891 = vadd.f32 %v757, %v876
      %v892 = vadd.f32 %v758, %v879
      %v893 = vadd.f32 %v759, %v881
      %v894 = vadd.f32 %v760, %v884
      %v895 = vadd.f32 %v761, %v886
      %v896 = vld [vmem:[%s165 + $0xc] sm:$0x3]
      %v897 = vld [vmem:[%s165 + $0x20] sm:$0x3]
      %v898 = vld [vmem:[%s165 + $0x34] sm:$0x3]
      %v899 = vld [vmem:[%s165 + $0x48] sm:$0x3]
      %v900 = vld [vmem:[%s165 + $0x5c] sm:$0x3]
      %v901 = vld [vmem:[%s165 + $0x70] sm:$0x3]
      %v902 = vld [vmem:[%s165 + $0x84] sm:$0x3]
      %v903 = vld [vmem:[%s165 + $0x98] sm:$0x3]
      %vm904 = vsmask.f32 2304
      %vm905 = vsmask.f32 6416
      %vm906 = vmor %vm904, %vm905
      %v908 = vshrl.u32 %v762, 16
      %v910 = vrot.slane %v908, 5
      %v911 = vshll.u32 %v762, 16
      %v913 = vrot.slane %v911, 6
      %v914 = vor.u32 %v910, %v913
      %v915 = vrot.slane %v914, 4
      %v917 = vshrl.u32 %v896, 16
      %v919 = vrot.slane %v917, 5
      %v920 = vshll.u32 %v896, 16
      %v922 = vrot.slane %v920, 6
      %v923 = vor.u32 %v919, %v922
      %v924 = vsel %vm906, %v915, %v923
      %v926 = vshrl.u32 %v764, 16
      %v928 = vrot.slane %v926, 5
      %v929 = vshll.u32 %v764, 16
      %v931 = vrot.slane %v929, 6
      %v932 = vor.u32 %v928, %v931
      %v933 = vrot.slane %v932, 4
      %v935 = vshrl.u32 %v897, 16
      %v937 = vrot.slane %v935, 5
      %v938 = vshll.u32 %v897, 16
      %v940 = vrot.slane %v938, 6
      %v941 = vor.u32 %v937, %v940
      %v942 = vsel %vm906, %v933, %v941
      %v944 = vshrl.u32 %v766, 16
      %v946 = vrot.slane %v944, 5
      %v947 = vshll.u32 %v766, 16
      %v949 = vrot.slane %v947, 6
      %v950 = vor.u32 %v946, %v949
      %v951 = vrot.slane %v950, 4
      %v953 = vshrl.u32 %v898, 16
      %v955 = vrot.slane %v953, 5
      %v956 = vshll.u32 %v898, 16
      %v958 = vrot.slane %v956, 6
      %v959 = vor.u32 %v955, %v958
      %v960 = vsel %vm906, %v951, %v959
      %v962 = vshrl.u32 %v768, 16
      %v964 = vrot.slane %v962, 5
      %v965 = vshll.u32 %v768, 16
      %v967 = vrot.slane %v965, 6
      %v968 = vor.u32 %v964, %v967
      %v969 = vrot.slane %v968, 4
      %v971 = vshrl.u32 %v899, 16
      %v973 = vrot.slane %v971, 5
      %v974 = vshll.u32 %v899, 16
      %v976 = vrot.slane %v974, 6
      %v977 = vor.u32 %v973, %v976
      %v978 = vsel %vm906, %v969, %v977
      %v980 = vshrl.u32 %v770, 16
      %v982 = vrot.slane %v980, 5
      %v983 = vshll.u32 %v770, 16
      %v985 = vrot.slane %v983, 6
      %v986 = vor.u32 %v982, %v985
      %v987 = vrot.slane %v986, 4
      %v989 = vshrl.u32 %v900, 16
      %v991 = vrot.slane %v989, 5
      %v992 = vshll.u32 %v900, 16
      %v994 = vrot.slane %v992, 6
      %v995 = vor.u32 %v991, %v994
      %v996 = vsel %vm906, %v987, %v995
      %v998 = vshrl.u32 %v772, 16
      %v1000 = vrot.slane %v998, 5
      %v1001 = vshll.u32 %v772, 16
      %v1003 = vrot.slane %v1001, 6
      %v1004 = vor.u32 %v1000, %v1003
      %v1005 = vrot.slane %v1004, 4
      %v1007 = vshrl.u32 %v901, 16
      %v1009 = vrot.slane %v1007, 5
      %v1010 = vshll.u32 %v901, 16
      %v1012 = vrot.slane %v1010, 6
      %v1013 = vor.u32 %v1009, %v1012
      %v1014 = vsel %vm906, %v1005, %v1013
      %v1016 = vshrl.u32 %v774, 16
      %v1018 = vrot.slane %v1016, 5
      %v1019 = vshll.u32 %v774, 16
      %v1021 = vrot.slane %v1019, 6
      %v1022 = vor.u32 %v1018, %v1021
      %v1023 = vrot.slane %v1022, 4
      %v1025 = vshrl.u32 %v902, 16
      %v1027 = vrot.slane %v1025, 5
      %v1028 = vshll.u32 %v902, 16
      %v1030 = vrot.slane %v1028, 6
      %v1031 = vor.u32 %v1027, %v1030
      %v1032 = vsel %vm906, %v1023, %v1031
      %v1034 = vshrl.u32 %v776, 16
      %v1036 = vrot.slane %v1034, 5
      %v1037 = vshll.u32 %v776, 16
      %v1039 = vrot.slane %v1037, 6
      %v1040 = vor.u32 %v1036, %v1039
      %v1041 = vrot.slane %v1040, 4
      %v1043 = vshrl.u32 %v903, 16
      %v1045 = vrot.slane %v1043, 5
      %v1046 = vshll.u32 %v903, 16
      %v1048 = vrot.slane %v1046, 6
      %v1049 = vor.u32 %v1045, %v1048
      %v1050 = vsel %vm906, %v1041, %v1049
      %s1051 = scalar_lea.vmem %s1, 40
      %v1052 = vld [vmem:[%s1051] sm:$0xf]
      %v1053 = vld [vmem:[%s1051 + $0x4] sm:$0xf]
      %v1054 = vunpack.c.l.b16 %v924
      %v1055 = vunpack.c.l.b16 %v942
      %v1056 = vunpack.c.l.b16 %v960
      %v1057 = vunpack.c.l.b16 %v978
      %v1058 = vunpack.c.l.b16 %v996
      %v1059 = vunpack.c.l.b16 %v1014
      %v1060 = vunpack.c.l.b16 %v1032
      %v1061 = vunpack.c.l.b16 %v1050
      %v1062 = vpack.c.b16 %v1055, %v1054
      %v1063 = vpack.c.b16 %v1057, %v1056
      %v1064 = vpack.c.b16 %v1059, %v1058
      %v1065 = vpack.c.b16 %v1061, %v1060
      %v1068 = vunpack.c.l.b16 %v1052
      %v1069 = vunpack.c.l.b16 %v1053
      %v1070 = vpack.c.b16 %v1069, %v1068
      %v1073 = vsel %vm326, %v1062, 0
      %v1076 = vsel %vm326, %v1063, 0
      %v1079 = vsel %vm326, %v1064, 0
      %v1082 = vsel %vm326, %v1065, 0
      %1084 = vmatpush.bf16.msra.mxu0 0
      %1085 = vmatpush.bf16.msra.mxu0 0
      %1086 = vmatpush.bf16.msra.mxu0 0
      %1087 = vmatpush.bf16.msra.mxu0 0
      %1088 = vmatpush.bf16.msra.mxu0 0
      %1089 = vmatpush.bf16.msra.mxu0 0
      %1090 = vmatpush.bf16.msra.mxu0 0
      %1091 = vmatpush.bf16.msra.mxu0 %v1070
      %1092 = vmatmul.bf16.gmra.mxu0 %v1073
      %v1093 = vpop.f32.mrf.mxu0
      %v1094 = vadd.f32 0.0, %v1093
      %v1095 = vpop.f32.mrf.mxu0
      %v1096 = vadd.f32 0.0, %v1095
      %1097 = vmatmul.bf16.gmra.mxu0 %v1076
      %v1098 = vpop.f32.mrf.mxu0
      %v1099 = vadd.f32 0.0, %v1098
      %v1100 = vpop.f32.mrf.mxu0
      %v1101 = vadd.f32 0.0, %v1100
      %1102 = vmatmul.bf16.gmra.mxu0 %v1079
      %v1103 = vpop.f32.mrf.mxu0
      %v1104 = vadd.f32 0.0, %v1103
      %v1105 = vpop.f32.mrf.mxu0
      %v1106 = vadd.f32 0.0, %v1105
      %1107 = vmatmul.bf16.gmra.mxu0 %v1082
      %v1108 = vpop.f32.mrf.mxu0
      %v1109 = vadd.f32 0.0, %v1108
      %v1110 = vpop.f32.mrf.mxu0
      %v1111 = vadd.f32 0.0, %v1110
      %1112 = vdwg.mxu0
      %v1113 = vadd.f32 %v888, %v1094
      %v1114 = vadd.f32 %v889, %v1096
      %v1115 = vadd.f32 %v890, %v1099
      %v1116 = vadd.f32 %v891, %v1101
      %v1117 = vadd.f32 %v892, %v1104
      %v1118 = vadd.f32 %v893, %v1106
      %v1119 = vadd.f32 %v894, %v1109
      %v1120 = vadd.f32 %v895, %v1111
      %v1121 = vld [vmem:[%s165 + $0xc] sm:$0xe]
      %v1122 = vld [vmem:[%s165 + $0x10] sm:$0x3]
      %v1123 = vld [vmem:[%s165 + $0x20] sm:$0xe]
      %v1124 = vld [vmem:[%s165 + $0x24] sm:$0x3]
      %v1125 = vld [vmem:[%s165 + $0x34] sm:$0xe]
      %v1126 = vld [vmem:[%s165 + $0x38] sm:$0x3]
      %v1127 = vld [vmem:[%s165 + $0x48] sm:$0xe]
      %v1128 = vld [vmem:[%s165 + $0x4c] sm:$0x3]
      %v1129 = vld [vmem:[%s165 + $0x5c] sm:$0xe]
      %v1130 = vld [vmem:[%s165 + $0x60] sm:$0x3]
      %v1131 = vld [vmem:[%s165 + $0x70] sm:$0xe]
      %v1132 = vld [vmem:[%s165 + $0x74] sm:$0x3]
      %v1133 = vld [vmem:[%s165 + $0x84] sm:$0xe]
      %v1134 = vld [vmem:[%s165 + $0x88] sm:$0x3]
      %v1135 = vld [vmem:[%s165 + $0x98] sm:$0xe]
      %v1136 = vld [vmem:[%s165 + $0x9c] sm:$0x3]
      %v1138 = vshrl.u32 %v1121, 16
      %v1140 = vrot.slane %v1138, 5
      %v1141 = vshll.u32 %v1121, 16
      %v1143 = vrot.slane %v1141, 6
      %v1144 = vor.u32 %v1140, %v1143
      %v1145 = vrot.slane %v1144, 4
      %v1147 = vshrl.u32 %v1122, 16
      %v1149 = vrot.slane %v1147, 5
      %v1150 = vshll.u32 %v1122, 16
      %v1152 = vrot.slane %v1150, 6
      %v1153 = vor.u32 %v1149, %v1152
      %v1154 = vsel %vm906, %v1145, %v1153
      %v1156 = vshrl.u32 %v1123, 16
      %v1158 = vrot.slane %v1156, 5
      %v1159 = vshll.u32 %v1123, 16
      %v1161 = vrot.slane %v1159, 6
      %v1162 = vor.u32 %v1158, %v1161
      %v1163 = vrot.slane %v1162, 4
      %v1165 = vshrl.u32 %v1124, 16
      %v1167 = vrot.slane %v1165, 5
      %v1168 = vshll.u32 %v1124, 16
      %v1170 = vrot.slane %v1168, 6
      %v1171 = vor.u32 %v1167, %v1170
      %v1172 = vsel %vm906, %v1163, %v1171
      %v1174 = vshrl.u32 %v1125, 16
      %v1176 = vrot.slane %v1174, 5
      %v1177 = vshll.u32 %v1125, 16
      %v1179 = vrot.slane %v1177, 6
      %v1180 = vor.u32 %v1176, %v1179
      %v1181 = vrot.slane %v1180, 4
      %v1183 = vshrl.u32 %v1126, 16
      %v1185 = vrot.slane %v1183, 5
      %v1186 = vshll.u32 %v1126, 16
      %v1188 = vrot.slane %v1186, 6
      %v1189 = vor.u32 %v1185, %v1188
      %v1190 = vsel %vm906, %v1181, %v1189
      %v1192 = vshrl.u32 %v1127, 16
      %v1194 = vrot.slane %v1192, 5
      %v1195 = vshll.u32 %v1127, 16
      %v1197 = vrot.slane %v1195, 6
      %v1198 = vor.u32 %v1194, %v1197
      %v1199 = vrot.slane %v1198, 4
      %v1201 = vshrl.u32 %v1128, 16
      %v1203 = vrot.slane %v1201, 5
      %v1204 = vshll.u32 %v1128, 16
      %v1206 = vrot.slane %v1204, 6
      %v1207 = vor.u32 %v1203, %v1206
      %v1208 = vsel %vm906, %v1199, %v1207
      %v1210 = vshrl.u32 %v1129, 16
      %v1212 = vrot.slane %v1210, 5
      %v1213 = vshll.u32 %v1129, 16
      %v1215 = vrot.slane %v1213, 6
      %v1216 = vor.u32 %v1212, %v1215
      %v1217 = vrot.slane %v1216, 4
      %v1219 = vshrl.u32 %v1130, 16
      %v1221 = vrot.slane %v1219, 5
      %v1222 = vshll.u32 %v1130, 16
      %v1224 = vrot.slane %v1222, 6
      %v1225 = vor.u32 %v1221, %v1224
      %v1226 = vsel %vm906, %v1217, %v1225
      %v1228 = vshrl.u32 %v1131, 16
      %v1230 = vrot.slane %v1228, 5
      %v1231 = vshll.u32 %v1131, 16
      %v1233 = vrot.slane %v1231, 6
      %v1234 = vor.u32 %v1230, %v1233
      %v1235 = vrot.slane %v1234, 4
      %v1237 = vshrl.u32 %v1132, 16
      %v1239 = vrot.slane %v1237, 5
      %v1240 = vshll.u32 %v1132, 16
      %v1242 = vrot.slane %v1240, 6
      %v1243 = vor.u32 %v1239, %v1242
      %v1244 = vsel %vm906, %v1235, %v1243
      %v1246 = vshrl.u32 %v1133, 16
      %v1248 = vrot.slane %v1246, 5
      %v1249 = vshll.u32 %v1133, 16
      %v1251 = vrot.slane %v1249, 6
      %v1252 = vor.u32 %v1248, %v1251
      %v1253 = vrot.slane %v1252, 4
      %v1255 = vshrl.u32 %v1134, 16
      %v1257 = vrot.slane %v1255, 5
      %v1258 = vshll.u32 %v1134, 16
      %v1260 = vrot.slane %v1258, 6
      %v1261 = vor.u32 %v1257, %v1260
      %v1262 = vsel %vm906, %v1253, %v1261
      %v1264 = vshrl.u32 %v1135, 16
      %v1266 = vrot.slane %v1264, 5
      %v1267 = vshll.u32 %v1135, 16
      %v1269 = vrot.slane %v1267, 6
      %v1270 = vor.u32 %v1266, %v1269
      %v1271 = vrot.slane %v1270, 4
      %v1273 = vshrl.u32 %v1136, 16
      %v1275 = vrot.slane %v1273, 5
      %v1276 = vshll.u32 %v1136, 16
      %v1278 = vrot.slane %v1276, 6
      %v1279 = vor.u32 %v1275, %v1278
      %v1280 = vsel %vm906, %v1271, %v1279
      %s1281 = scalar_lea.vmem %s1, 48
      %v1282 = vld [vmem:[%s1281] sm:$0xf]
      %v1283 = vld [vmem:[%s1281 + $0x4] sm:$0xf]
      %v1284 = vunpack.c.l.b16 %v1154
      %v1285 = vunpack.c.l.b16 %v1172
      %v1286 = vunpack.c.l.b16 %v1190
      %v1287 = vunpack.c.l.b16 %v1208
      %v1288 = vunpack.c.l.b16 %v1226
      %v1289 = vunpack.c.l.b16 %v1244
      %v1290 = vunpack.c.l.b16 %v1262
      %v1291 = vunpack.c.l.b16 %v1280
      %v1292 = vpack.c.b16 %v1285, %v1284
      %v1293 = vpack.c.b16 %v1287, %v1286
      %v1294 = vpack.c.b16 %v1289, %v1288
      %v1295 = vpack.c.b16 %v1291, %v1290
      %v1298 = vunpack.c.l.b16 %v1282
      %v1299 = vunpack.c.l.b16 %v1283
      %v1300 = vpack.c.b16 %v1299, %v1298
      %v1303 = vsel %vm326, %v1292, 0
      %v1306 = vsel %vm326, %v1293, 0
      %v1309 = vsel %vm326, %v1294, 0
      %v1312 = vsel %vm326, %v1295, 0
      %1314 = vmatpush.bf16.msra.mxu0 0
      %1315 = vmatpush.bf16.msra.mxu0 0
      %1316 = vmatpush.bf16.msra.mxu0 0
      %1317 = vmatpush.bf16.msra.mxu0 0
      %1318 = vmatpush.bf16.msra.mxu0 0
      %1319 = vmatpush.bf16.msra.mxu0 0
      %1320 = vmatpush.bf16.msra.mxu0 0
      %1321 = vmatpush.bf16.msra.mxu0 %v1300
      %1322 = vmatmul.bf16.gmra.mxu0 %v1303
      %v1323 = vpop.f32.mrf.mxu0
      %v1324 = vadd.f32 0.0, %v1323
      %v1325 = vpop.f32.mrf.mxu0
      %v1326 = vadd.f32 0.0, %v1325
      %1327 = vmatmul.bf16.gmra.mxu0 %v1306
      %v1328 = vpop.f32.mrf.mxu0
      %v1329 = vadd.f32 0.0, %v1328
      %v1330 = vpop.f32.mrf.mxu0
      %v1331 = vadd.f32 0.0, %v1330
      %1332 = vmatmul.bf16.gmra.mxu0 %v1309
      %v1333 = vpop.f32.mrf.mxu0
      %v1334 = vadd.f32 0.0, %v1333
      %v1335 = vpop.f32.mrf.mxu0
      %v1336 = vadd.f32 0.0, %v1335
      %1337 = vmatmul.bf16.gmra.mxu0 %v1312
      %v1338 = vpop.f32.mrf.mxu0
      %v1339 = vadd.f32 0.0, %v1338
      %v1340 = vpop.f32.mrf.mxu0
      %v1341 = vadd.f32 0.0, %v1340
      %1342 = vdwg.mxu0
      %v1343 = vadd.f32 %v1113, %v1324
      %v1344 = vadd.f32 %v1114, %v1326
      %v1345 = vadd.f32 %v1115, %v1329
      %v1346 = vadd.f32 %v1116, %v1331
      %v1347 = vadd.f32 %v1117, %v1334
      %v1348 = vadd.f32 %v1118, %v1336
      %v1349 = vadd.f32 %v1119, %v1339
      %v1350 = vadd.f32 %v1120, %v1341
      %v1351 = vld [vmem:[%s165 + $0xc] sm:$0xc]
      %v1352 = vld [vmem:[%s165 + $0x20] sm:$0xc]
      %v1353 = vld [vmem:[%s165 + $0x34] sm:$0xc]
      %v1354 = vld [vmem:[%s165 + $0x48] sm:$0xc]
      %v1355 = vld [vmem:[%s165 + $0x5c] sm:$0xc]
      %v1356 = vld [vmem:[%s165 + $0x70] sm:$0xc]
      %v1357 = vld [vmem:[%s165 + $0x84] sm:$0xc]
      %v1358 = vld [vmem:[%s165 + $0x98] sm:$0xc]
      %vm1375 = vcmask 1041408
      %vm1376 = vcmask 1045508
      %vm1377 = vmor %vm1375, %vm1376
      %v1378 = vrot.slane %v1351, 6
      %v1379 = vrot.slane %v1378, 4
      %v1380 = vrot.slane %v1122, 6
      %v1381 = vsel %vm1377, %v1379, %v1380
      %v1382 = vrot.slane %v1352, 6
      %v1383 = vrot.slane %v1382, 4
      %v1384 = vrot.slane %v1124, 6
      %v1385 = vsel %vm1377, %v1383, %v1384
      %v1386 = vrot.slane %v1353, 6
      %v1387 = vrot.slane %v1386, 4
      %v1388 = vrot.slane %v1126, 6
      %v1389 = vsel %vm1377, %v1387, %v1388
      %v1390 = vrot.slane %v1354, 6
      %v1391 = vrot.slane %v1390, 4
      %v1392 = vrot.slane %v1128, 6
      %v1393 = vsel %vm1377, %v1391, %v1392
      %v1394 = vrot.slane %v1355, 6
      %v1395 = vrot.slane %v1394, 4
      %v1396 = vrot.slane %v1130, 6
      %v1397 = vsel %vm1377, %v1395, %v1396
      %v1398 = vrot.slane %v1356, 6
      %v1399 = vrot.slane %v1398, 4
      %v1400 = vrot.slane %v1132, 6
      %v1401 = vsel %vm1377, %v1399, %v1400
      %v1402 = vrot.slane %v1357, 6
      %v1403 = vrot.slane %v1402, 4
      %v1404 = vrot.slane %v1134, 6
      %v1405 = vsel %vm1377, %v1403, %v1404
      %v1406 = vrot.slane %v1358, 6
      %v1407 = vrot.slane %v1406, 4
      %v1408 = vrot.slane %v1136, 6
      %v1409 = vsel %vm1377, %v1407, %v1408
      %s1410 = scalar_lea.vmem %s1, 56
      %v1411 = vld [vmem:[%s1410] sm:$0xf]
      %v1412 = vld [vmem:[%s1410 + $0x4] sm:$0xf]
      %v1413 = vunpack.c.l.b16 %v1381
      %v1414 = vunpack.c.l.b16 %v1385
      %v1415 = vunpack.c.l.b16 %v1389
      %v1416 = vunpack.c.l.b16 %v1393
      %v1417 = vunpack.c.l.b16 %v1397
      %v1418 = vunpack.c.l.b16 %v1401
      %v1419 = vunpack.c.l.b16 %v1405
      %v1420 = vunpack.c.l.b16 %v1409
      %v1421 = vpack.c.b16 %v1414, %v1413
      %v1422 = vpack.c.b16 %v1416, %v1415
      %v1423 = vpack.c.b16 %v1418, %v1417
      %v1424 = vpack.c.b16 %v1420, %v1419
      %v1427 = vunpack.c.l.b16 %v1411
      %v1428 = vunpack.c.l.b16 %v1412
      %v1429 = vpack.c.b16 %v1428, %v1427
      %v1432 = vsel %vm326, %v1421, 0
      %v1435 = vsel %vm326, %v1422, 0
      %v1438 = vsel %vm326, %v1423, 0
      %v1441 = vsel %vm326, %v1424, 0
      %1443 = vmatpush.bf16.msra.mxu0 0
      %1444 = vmatpush.bf16.msra.mxu0 0
      %1445 = vmatpush.bf16.msra.mxu0 0
      %1446 = vmatpush.bf16.msra.mxu0 0
      %1447 = vmatpush.bf16.msra.mxu0 0
      %1448 = vmatpush.bf16.msra.mxu0 0
      %1449 = vmatpush.bf16.msra.mxu0 0
      %1450 = vmatpush.bf16.msra.mxu0 %v1429
      %1451 = vmatmul.bf16.gmra.mxu0 %v1432
      %v1452 = vpop.f32.mrf.mxu0
      %v1453 = vadd.f32 0.0, %v1452
      %v1454 = vpop.f32.mrf.mxu0
      %v1455 = vadd.f32 0.0, %v1454
      %1456 = vmatmul.bf16.gmra.mxu0 %v1435
      %v1457 = vpop.f32.mrf.mxu0
      %v1458 = vadd.f32 0.0, %v1457
      %v1459 = vpop.f32.mrf.mxu0
      %v1460 = vadd.f32 0.0, %v1459
      %1461 = vmatmul.bf16.gmra.mxu0 %v1438
      %v1462 = vpop.f32.mrf.mxu0
      %v1463 = vadd.f32 0.0, %v1462
      %v1464 = vpop.f32.mrf.mxu0
      %v1465 = vadd.f32 0.0, %v1464
      %1466 = vmatmul.bf16.gmra.mxu0 %v1441
      %v1467 = vpop.f32.mrf.mxu0
      %v1468 = vadd.f32 0.0, %v1467
      %v1469 = vpop.f32.mrf.mxu0
      %v1470 = vadd.f32 0.0, %v1469
      %1471 = vdwg.mxu0
      %v1472 = vadd.f32 %v1343, %v1453
      %v1473 = vadd.f32 %v1344, %v1455
      %v1474 = vadd.f32 %v1345, %v1458
      %v1475 = vadd.f32 %v1346, %v1460
      %v1476 = vadd.f32 %v1347, %v1463
      %v1477 = vadd.f32 %v1348, %v1465
      %v1478 = vadd.f32 %v1349, %v1468
      %v1479 = vadd.f32 %v1350, %v1470
      %s1480 = scalar_lea.vmem %s165, 20
      %v1481 = vld [vmem:[%s1480] sm:$0xf]
      %v1482 = vld [vmem:[%s1480 + $0x14] sm:$0xf]
      %v1483 = vld [vmem:[%s1480 + $0x28] sm:$0xf]
      %v1484 = vld [vmem:[%s1480 + $0x3c] sm:$0xf]
      %v1485 = vld [vmem:[%s1480 + $0x50] sm:$0xf]
      %v1486 = vld [vmem:[%s1480 + $0x64] sm:$0xf]
      %v1487 = vld [vmem:[%s1480 + $0x78] sm:$0xf]
      %v1488 = vld [vmem:[%s1480 + $0x8c] sm:$0xf]
      %s1489 = scalar_lea.vmem %s1, 64
      %v1490 = vld [vmem:[%s1489] sm:$0xf]
      %v1491 = vld [vmem:[%s1489 + $0x4] sm:$0xf]
      %v1500 = vunpack.c.l.b16 %v1481
      %v1501 = vunpack.c.l.b16 %v1482
      %v1502 = vunpack.c.l.b16 %v1483
      %v1503 = vunpack.c.l.b16 %v1484
      %v1504 = vunpack.c.l.b16 %v1485
      %v1505 = vunpack.c.l.b16 %v1486
      %v1506 = vunpack.c.l.b16 %v1487
      %v1507 = vunpack.c.l.b16 %v1488
      %v1508 = vpack.c.b16 %v1501, %v1500
      %v1509 = vpack.c.b16 %v1503, %v1502
      %v1510 = vpack.c.b16 %v1505, %v1504
      %v1511 = vpack.c.b16 %v1507, %v1506
      %v1514 = vunpack.c.l.b16 %v1490
      %v1515 = vunpack.c.l.b16 %v1491
      %v1516 = vpack.c.b16 %v1515, %v1514
      %v1519 = vsel %vm326, %v1508, 0
      %v1522 = vsel %vm326, %v1509, 0
      %v1525 = vsel %vm326, %v1510, 0
      %v1528 = vsel %vm326, %v1511, 0
      %1530 = vmatpush.bf16.msra.mxu0 0
      %1531 = vmatpush.bf16.msra.mxu0 0
      %1532 = vmatpush.bf16.msra.mxu0 0
      %1533 = vmatpush.bf16.msra.mxu0 0
      %1534 = vmatpush.bf16.msra.mxu0 0
      %1535 = vmatpush.bf16.msra.mxu0 0
      %1536 = vmatpush.bf16.msra.mxu0 0
      %1537 = vmatpush.bf16.msra.mxu0 %v1516
      %1538 = vmatmul.bf16.gmra.mxu0 %v1519
      %v1539 = vpop.f32.mrf.mxu0
      %v1540 = vadd.f32 0.0, %v1539
      %v1541 = vpop.f32.mrf.mxu0
      %v1542 = vadd.f32 0.0, %v1541
      %1543 = vmatmul.bf16.gmra.mxu0 %v1522
      %v1544 = vpop.f32.mrf.mxu0
      %v1545 = vadd.f32 0.0, %v1544
      %v1546 = vpop.f32.mrf.mxu0
      %v1547 = vadd.f32 0.0, %v1546
      %1548 = vmatmul.bf16.gmra.mxu0 %v1525
      %v1549 = vpop.f32.mrf.mxu0
      %v1550 = vadd.f32 0.0, %v1549
      %v1551 = vpop.f32.mrf.mxu0
      %v1552 = vadd.f32 0.0, %v1551
      %1553 = vmatmul.bf16.gmra.mxu0 %v1528
      %v1554 = vpop.f32.mrf.mxu0
      %v1555 = vadd.f32 0.0, %v1554
      %v1556 = vpop.f32.mrf.mxu0
      %v1557 = vadd.f32 0.0, %v1556
      %1558 = vdwg.mxu0
      %v1559 = vadd.f32 %v1472, %v1540
      %v1560 = vadd.f32 %v1473, %v1542
      %v1561 = vadd.f32 %v1474, %v1545
      %v1562 = vadd.f32 %v1475, %v1547
      %v1563 = vadd.f32 %v1476, %v1550
      %v1564 = vadd.f32 %v1477, %v1552
      %v1565 = vadd.f32 %v1478, %v1555
      %v1566 = vadd.f32 %v1479, %v1557
      %v1567 = vld [vmem:[%s1480] sm:$0xf]
      %v1568 = vld [vmem:[%s1480 + $0x4] sm:$0x1]
      %v1569 = vld [vmem:[%s1480 + $0x14] sm:$0xf]
      %v1570 = vld [vmem:[%s1480 + $0x18] sm:$0x1]
      %v1571 = vld [vmem:[%s1480 + $0x28] sm:$0xf]
      %v1572 = vld [vmem:[%s1480 + $0x2c] sm:$0x1]
      %v1573 = vld [vmem:[%s1480 + $0x3c] sm:$0xf]
      %v1574 = vld [vmem:[%s1480 + $0x40] sm:$0x1]
      %v1575 = vld [vmem:[%s1480 + $0x50] sm:$0xf]
      %v1576 = vld [vmem:[%s1480 + $0x54] sm:$0x1]
      %v1577 = vld [vmem:[%s1480 + $0x64] sm:$0xf]
      %v1578 = vld [vmem:[%s1480 + $0x68] sm:$0x1]
      %v1579 = vld [vmem:[%s1480 + $0x78] sm:$0xf]
      %v1580 = vld [vmem:[%s1480 + $0x7c] sm:$0x1]
      %v1581 = vld [vmem:[%s1480 + $0x8c] sm:$0xf]
      %v1582 = vld [vmem:[%s1480 + $0x90] sm:$0x1]
      %v1584 = vshrl.u32 %v1567, 16
      %v1586 = vrot.slane %v1584, 4
      %v1587 = vshll.u32 %v1567, 16
      %v1589 = vrot.slane %v1587, 5
      %v1590 = vor.u32 %v1586, %v1589
      %v1591 = vrot.slane %v1590, 4
      %v1593 = vshll.u32 %v1568, 16
      %v1595 = vrot.slane %v1593, 5
      %v1596 = vsel %vm192, %v1591, %v1595
      %v1598 = vshrl.u32 %v1569, 16
      %v1600 = vrot.slane %v1598, 4
      %v1601 = vshll.u32 %v1569, 16
      %v1603 = vrot.slane %v1601, 5
      %v1604 = vor.u32 %v1600, %v1603
      %v1605 = vrot.slane %v1604, 4
      %v1607 = vshll.u32 %v1570, 16
      %v1609 = vrot.slane %v1607, 5
      %v1610 = vsel %vm192, %v1605, %v1609
      %v1612 = vshrl.u32 %v1571, 16
      %v1614 = vrot.slane %v1612, 4
      %v1615 = vshll.u32 %v1571, 16
      %v1617 = vrot.slane %v1615, 5
      %v1618 = vor.u32 %v1614, %v1617
      %v1619 = vrot.slane %v1618, 4
      %v1621 = vshll.u32 %v1572, 16
      %v1623 = vrot.slane %v1621, 5
      %v1624 = vsel %vm192, %v1619, %v1623
      %v1626 = vshrl.u32 %v1573, 16
      %v1628 = vrot.slane %v1626, 4
      %v1629 = vshll.u32 %v1573, 16
      %v1631 = vrot.slane %v1629, 5
      %v1632 = vor.u32 %v1628, %v1631
      %v1633 = vrot.slane %v1632, 4
      %v1635 = vshll.u32 %v1574, 16
      %v1637 = vrot.slane %v1635, 5
      %v1638 = vsel %vm192, %v1633, %v1637
      %v1640 = vshrl.u32 %v1575, 16
      %v1642 = vrot.slane %v1640, 4
      %v1643 = vshll.u32 %v1575, 16
      %v1645 = vrot.slane %v1643, 5
      %v1646 = vor.u32 %v1642, %v1645
      %v1647 = vrot.slane %v1646, 4
      %v1649 = vshll.u32 %v1576, 16
      %v1651 = vrot.slane %v1649, 5
      %v1652 = vsel %vm192, %v1647, %v1651
      %v1654 = vshrl.u32 %v1577, 16
      %v1656 = vrot.slane %v1654, 4
      %v1657 = vshll.u32 %v1577, 16
      %v1659 = vrot.slane %v1657, 5
      %v1660 = vor.u32 %v1656, %v1659
      %v1661 = vrot.slane %v1660, 4
      %v1663 = vshll.u32 %v1578, 16
      %v1665 = vrot.slane %v1663, 5
      %v1666 = vsel %vm192, %v1661, %v1665
      %v1668 = vshrl.u32 %v1579, 16
      %v1670 = vrot.slane %v1668, 4
      %v1671 = vshll.u32 %v1579, 16
      %v1673 = vrot.slane %v1671, 5
      %v1674 = vor.u32 %v1670, %v1673
      %v1675 = vrot.slane %v1674, 4
      %v1677 = vshll.u32 %v1580, 16
      %v1679 = vrot.slane %v1677, 5
      %v1680 = vsel %vm192, %v1675, %v1679
      %v1682 = vshrl.u32 %v1581, 16
      %v1684 = vrot.slane %v1682, 4
      %v1685 = vshll.u32 %v1581, 16
      %v1687 = vrot.slane %v1685, 5
      %v1688 = vor.u32 %v1684, %v1687
      %v1689 = vrot.slane %v1688, 4
      %v1691 = vshll.u32 %v1582, 16
      %v1693 = vrot.slane %v1691, 5
      %v1694 = vsel %vm192, %v1689, %v1693
      %s1695 = scalar_lea.vmem %s1, 72
      %v1696 = vld [vmem:[%s1695] sm:$0xf]
      %v1697 = vld [vmem:[%s1695 + $0x4] sm:$0xf]
      %v1698 = vunpack.c.l.b16 %v1596
      %v1699 = vunpack.c.l.b16 %v1610
      %v1700 = vunpack.c.l.b16 %v1624
      %v1701 = vunpack.c.l.b16 %v1638
      %v1702 = vunpack.c.l.b16 %v1652
      %v1703 = vunpack.c.l.b16 %v1666
      %v1704 = vunpack.c.l.b16 %v1680
      %v1705 = vunpack.c.l.b16 %v1694
      %v1706 = vpack.c.b16 %v1699, %v1698
      %v1707 = vpack.c.b16 %v1701, %v1700
      %v1708 = vpack.c.b16 %v1703, %v1702
      %v1709 = vpack.c.b16 %v1705, %v1704
      %v1712 = vunpack.c.l.b16 %v1696
      %v1713 = vunpack.c.l.b16 %v1697
      %v1714 = vpack.c.b16 %v1713, %v1712
      %v1717 = vsel %vm326, %v1706, 0
      %v1720 = vsel %vm326, %v1707, 0
      %v1723 = vsel %vm326, %v1708, 0
      %v1726 = vsel %vm326, %v1709, 0
      %1728 = vmatpush.bf16.msra.mxu0 0
      %1729 = vmatpush.bf16.msra.mxu0 0
      %1730 = vmatpush.bf16.msra.mxu0 0
      %1731 = vmatpush.bf16.msra.mxu0 0
      %1732 = vmatpush.bf16.msra.mxu0 0
      %1733 = vmatpush.bf16.msra.mxu0 0
      %1734 = vmatpush.bf16.msra.mxu0 0
      %1735 = vmatpush.bf16.msra.mxu0 %v1714
      %1736 = vmatmul.bf16.gmra.mxu0 %v1717
      %v1737 = vpop.f32.mrf.mxu0
      %v1738 = vadd.f32 0.0, %v1737
      %v1739 = vpop.f32.mrf.mxu0
      %v1740 = vadd.f32 0.0, %v1739
      %1741 = vmatmul.bf16.gmra.mxu0 %v1720
      %v1742 = vpop.f32.mrf.mxu0
      %v1743 = vadd.f32 0.0, %v1742
      %v1744 = vpop.f32.mrf.mxu0
      %v1745 = vadd.f32 0.0, %v1744
      %1746 = vmatmul.bf16.gmra.mxu0 %v1723
      %v1747 = vpop.f32.mrf.mxu0
      %v1748 = vadd.f32 0.0, %v1747
      %v1749 = vpop.f32.mrf.mxu0
      %v1750 = vadd.f32 0.0, %v1749
      %1751 = vmatmul.bf16.gmra.mxu0 %v1726
      %v1752 = vpop.f32.mrf.mxu0
      %v1753 = vadd.f32 0.0, %v1752
      %v1754 = vpop.f32.mrf.mxu0
      %v1755 = vadd.f32 0.0, %v1754
      %1756 = vdwg.mxu0
      %v1757 = vadd.f32 %v1559, %v1738
      %v1758 = vadd.f32 %v1560, %v1740
      %v1759 = vadd.f32 %v1561, %v1743
      %v1760 = vadd.f32 %v1562, %v1745
      %v1761 = vadd.f32 %v1563, %v1748
      %v1762 = vadd.f32 %v1564, %v1750
      %v1763 = vadd.f32 %v1565, %v1753
      %v1764 = vadd.f32 %v1566, %v1755
      %v1765 = vld [vmem:[%s1480 + $0x4] sm:$0xf]
      %v1766 = vld [vmem:[%s1480 + $0x8] sm:$0x1]
      %v1767 = vld [vmem:[%s1480 + $0x18] sm:$0xf]
      %v1768 = vld [vmem:[%s1480 + $0x1c] sm:$0x1]
      %v1769 = vld [vmem:[%s1480 + $0x2c] sm:$0xf]
      %v1770 = vld [vmem:[%s1480 + $0x30] sm:$0x1]
      %v1771 = vld [vmem:[%s1480 + $0x40] sm:$0xf]
      %v1772 = vld [vmem:[%s1480 + $0x44] sm:$0x1]
      %v1773 = vld [vmem:[%s1480 + $0x54] sm:$0xf]
      %v1774 = vld [vmem:[%s1480 + $0x58] sm:$0x1]
      %v1775 = vld [vmem:[%s1480 + $0x68] sm:$0xf]
      %v1776 = vld [vmem:[%s1480 + $0x6c] sm:$0x1]
      %v1777 = vld [vmem:[%s1480 + $0x7c] sm:$0xf]
      %v1778 = vld [vmem:[%s1480 + $0x80] sm:$0x1]
      %v1779 = vld [vmem:[%s1480 + $0x90] sm:$0xf]
      %v1780 = vld [vmem:[%s1480 + $0x94] sm:$0x1]
      %v1782 = vshrl.u32 %v1765, 16
      %v1784 = vrot.slane %v1782, 4
      %v1785 = vshll.u32 %v1765, 16
      %v1787 = vrot.slane %v1785, 5
      %v1788 = vor.u32 %v1784, %v1787
      %v1789 = vrot.slane %v1788, 4
      %v1791 = vshll.u32 %v1766, 16
      %v1793 = vrot.slane %v1791, 5
      %v1794 = vsel %vm192, %v1789, %v1793
      %v1796 = vshrl.u32 %v1767, 16
      %v1798 = vrot.slane %v1796, 4
      %v1799 = vshll.u32 %v1767, 16
      %v1801 = vrot.slane %v1799, 5
      %v1802 = vor.u32 %v1798, %v1801
      %v1803 = vrot.slane %v1802, 4
      %v1805 = vshll.u32 %v1768, 16
      %v1807 = vrot.slane %v1805, 5
      %v1808 = vsel %vm192, %v1803, %v1807
      %v1810 = vshrl.u32 %v1769, 16
      %v1812 = vrot.slane %v1810, 4
      %v1813 = vshll.u32 %v1769, 16
      %v1815 = vrot.slane %v1813, 5
      %v1816 = vor.u32 %v1812, %v1815
      %v1817 = vrot.slane %v1816, 4
      %v1819 = vshll.u32 %v1770, 16
      %v1821 = vrot.slane %v1819, 5
      %v1822 = vsel %vm192, %v1817, %v1821
      %v1824 = vshrl.u32 %v1771, 16
      %v1826 = vrot.slane %v1824, 4
      %v1827 = vshll.u32 %v1771, 16
      %v1829 = vrot.slane %v1827, 5
      %v1830 = vor.u32 %v1826, %v1829
      %v1831 = vrot.slane %v1830, 4
      %v1833 = vshll.u32 %v1772, 16
      %v1835 = vrot.slane %v1833, 5
      %v1836 = vsel %vm192, %v1831, %v1835
      %v1838 = vshrl.u32 %v1773, 16
      %v1840 = vrot.slane %v1838, 4
      %v1841 = vshll.u32 %v1773, 16
      %v1843 = vrot.slane %v1841, 5
      %v1844 = vor.u32 %v1840, %v1843
      %v1845 = vrot.slane %v1844, 4
      %v1847 = vshll.u32 %v1774, 16
      %v1849 = vrot.slane %v1847, 5
      %v1850 = vsel %vm192, %v1845, %v1849
      %v1852 = vshrl.u32 %v1775, 16
      %v1854 = vrot.slane %v1852, 4
      %v1855 = vshll.u32 %v1775, 16
      %v1857 = vrot.slane %v1855, 5
      %v1858 = vor.u32 %v1854, %v1857
      %v1859 = vrot.slane %v1858, 4
      %v1861 = vshll.u32 %v1776, 16
      %v1863 = vrot.slane %v1861, 5
      %v1864 = vsel %vm192, %v1859, %v1863
      %v1866 = vshrl.u32 %v1777, 16
      %v1868 = vrot.slane %v1866, 4
      %v1869 = vshll.u32 %v1777, 16
      %v1871 = vrot.slane %v1869, 5
      %v1872 = vor.u32 %v1868, %v1871
      %v1873 = vrot.slane %v1872, 4
      %v1875 = vshll.u32 %v1778, 16
      %v1877 = vrot.slane %v1875, 5
      %v1878 = vsel %vm192, %v1873, %v1877
      %v1880 = vshrl.u32 %v1779, 16
      %v1882 = vrot.slane %v1880, 4
      %v1883 = vshll.u32 %v1779, 16
      %v1885 = vrot.slane %v1883, 5
      %v1886 = vor.u32 %v1882, %v1885
      %v1887 = vrot.slane %v1886, 4
      %v1889 = vshll.u32 %v1780, 16
      %v1891 = vrot.slane %v1889, 5
      %v1892 = vsel %vm192, %v1887, %v1891
      %s1893 = scalar_lea.vmem %s1, 80
      %v1894 = vld [vmem:[%s1893] sm:$0xf]
      %v1895 = vld [vmem:[%s1893 + $0x4] sm:$0xf]
      %v1896 = vunpack.c.l.b16 %v1794
      %v1897 = vunpack.c.l.b16 %v1808
      %v1898 = vunpack.c.l.b16 %v1822
      %v1899 = vunpack.c.l.b16 %v1836
      %v1900 = vunpack.c.l.b16 %v1850
      %v1901 = vunpack.c.l.b16 %v1864
      %v1902 = vunpack.c.l.b16 %v1878
      %v1903 = vunpack.c.l.b16 %v1892
      %v1904 = vpack.c.b16 %v1897, %v1896
      %v1905 = vpack.c.b16 %v1899, %v1898
      %v1906 = vpack.c.b16 %v1901, %v1900
      %v1907 = vpack.c.b16 %v1903, %v1902
      %v1910 = vunpack.c.l.b16 %v1894
      %v1911 = vunpack.c.l.b16 %v1895
      %v1912 = vpack.c.b16 %v1911, %v1910
      %v1915 = vsel %vm326, %v1904, 0
      %v1918 = vsel %vm326, %v1905, 0
      %v1921 = vsel %vm326, %v1906, 0
      %v1924 = vsel %vm326, %v1907, 0
      %1926 = vmatpush.bf16.msra.mxu0 0
      %1927 = vmatpush.bf16.msra.mxu0 0
      %1928 = vmatpush.bf16.msra.mxu0 0
      %1929 = vmatpush.bf16.msra.mxu0 0
      %1930 = vmatpush.bf16.msra.mxu0 0
      %1931 = vmatpush.bf16.msra.mxu0 0
      %1932 = vmatpush.bf16.msra.mxu0 0
      %1933 = vmatpush.bf16.msra.mxu0 %v1912
      %1934 = vmatmul.bf16.gmra.mxu0 %v1915
      %v1935 = vpop.f32.mrf.mxu0
      %v1936 = vadd.f32 0.0, %v1935
      %v1937 = vpop.f32.mrf.mxu0
      %v1938 = vadd.f32 0.0, %v1937
      %1939 = vmatmul.bf16.gmra.mxu0 %v1918
      %v1940 = vpop.f32.mrf.mxu0
      %v1941 = vadd.f32 0.0, %v1940
      %v1942 = vpop.f32.mrf.mxu0
      %v1943 = vadd.f32 0.0, %v1942
      %1944 = vmatmul.bf16.gmra.mxu0 %v1921
      %v1945 = vpop.f32.mrf.mxu0
      %v1946 = vadd.f32 0.0, %v1945
      %v1947 = vpop.f32.mrf.mxu0
      %v1948 = vadd.f32 0.0, %v1947
      %1949 = vmatmul.bf16.gmra.mxu0 %v1924
      %v1950 = vpop.f32.mrf.mxu0
      %v1951 = vadd.f32 0.0, %v1950
      %v1952 = vpop.f32.mrf.mxu0
      %v1953 = vadd.f32 0.0, %v1952
      %1954 = vdwg.mxu0
      %v1955 = vadd.f32 %v1757, %v1936
      %v1956 = vadd.f32 %v1758, %v1938
      %v1957 = vadd.f32 %v1759, %v1941
      %v1958 = vadd.f32 %v1760, %v1943
      %v1959 = vadd.f32 %v1761, %v1946
      %v1960 = vadd.f32 %v1762, %v1948
      %v1961 = vadd.f32 %v1763, %v1951
      %v1962 = vadd.f32 %v1764, %v1953
      %v1963 = vld [vmem:[%s1480 + $0x4] sm:$0xe]
      %v1964 = vld [vmem:[%s1480 + $0x18] sm:$0xe]
      %v1965 = vld [vmem:[%s1480 + $0x2c] sm:$0xe]
      %v1966 = vld [vmem:[%s1480 + $0x40] sm:$0xe]
      %v1967 = vld [vmem:[%s1480 + $0x54] sm:$0xe]
      %v1968 = vld [vmem:[%s1480 + $0x68] sm:$0xe]
      %v1969 = vld [vmem:[%s1480 + $0x7c] sm:$0xe]
      %v1970 = vld [vmem:[%s1480 + $0x90] sm:$0xe]
      %v1987 = vrot.slane %v1963, 5
      %v1988 = vrot.slane %v1987, 4
      %v1989 = vrot.slane %v1766, 5
      %v1990 = vsel %vm659, %v1988, %v1989
      %v1991 = vrot.slane %v1964, 5
      %v1992 = vrot.slane %v1991, 4
      %v1993 = vrot.slane %v1768, 5
      %v1994 = vsel %vm659, %v1992, %v1993
      %v1995 = vrot.slane %v1965, 5
      %v1996 = vrot.slane %v1995, 4
      %v1997 = vrot.slane %v1770, 5
      %v1998 = vsel %vm659, %v1996, %v1997
      %v1999 = vrot.slane %v1966, 5
      %v2000 = vrot.slane %v1999, 4
      %v2001 = vrot.slane %v1772, 5
      %v2002 = vsel %vm659, %v2000, %v2001
      %v2003 = vrot.slane %v1967, 5
      %v2004 = vrot.slane %v2003, 4
      %v2005 = vrot.slane %v1774, 5
      %v2006 = vsel %vm659, %v2004, %v2005
      %v2007 = vrot.slane %v1968, 5
      %v2008 = vrot.slane %v2007, 4
      %v2009 = vrot.slane %v1776, 5
      %v2010 = vsel %vm659, %v2008, %v2009
      %v2011 = vrot.slane %v1969, 5
      %v2012 = vrot.slane %v2011, 4
      %v2013 = vrot.slane %v1778, 5
      %v2014 = vsel %vm659, %v2012, %v2013
      %v2015 = vrot.slane %v1970, 5
      %v2016 = vrot.slane %v2015, 4
      %v2017 = vrot.slane %v1780, 5
      %v2018 = vsel %vm659, %v2016, %v2017
      %s2019 = scalar_lea.vmem %s1, 88
      %v2020 = vld [vmem:[%s2019] sm:$0xf]
      %v2021 = vld [vmem:[%s2019 + $0x4] sm:$0xf]
      %v2022 = vunpack.c.l.b16 %v1990
      %v2023 = vunpack.c.l.b16 %v1994
      %v2024 = vunpack.c.l.b16 %v1998
      %v2025 = vunpack.c.l.b16 %v2002
      %v2026 = vunpack.c.l.b16 %v2006
      %v2027 = vunpack.c.l.b16 %v2010
      %v2028 = vunpack.c.l.b16 %v2014
      %v2029 = vunpack.c.l.b16 %v2018
      %v2030 = vpack.c.b16 %v2023, %v2022
      %v2031 = vpack.c.b16 %v2025, %v2024
      %v2032 = vpack.c.b16 %v2027, %v2026
      %v2033 = vpack.c.b16 %v2029, %v2028
      %v2036 = vunpack.c.l.b16 %v2020
      %v2037 = vunpack.c.l.b16 %v2021
      %v2038 = vpack.c.b16 %v2037, %v2036
      %v2041 = vsel %vm326, %v2030, 0
      %v2044 = vsel %vm326, %v2031, 0
      %v2047 = vsel %vm326, %v2032, 0
      %v2050 = vsel %vm326, %v2033, 0
      %2052 = vmatpush.bf16.msra.mxu0 0
      %2053 = vmatpush.bf16.msra.mxu0 0
      %2054 = vmatpush.bf16.msra.mxu0 0
      %2055 = vmatpush.bf16.msra.mxu0 0
      %2056 = vmatpush.bf16.msra.mxu0 0
      %2057 = vmatpush.bf16.msra.mxu0 0
      %2058 = vmatpush.bf16.msra.mxu0 0
      %2059 = vmatpush.bf16.msra.mxu0 %v2038
      %2060 = vmatmul.bf16.gmra.mxu0 %v2041
      %v2061 = vpop.f32.mrf.mxu0
      %v2062 = vadd.f32 0.0, %v2061
      %v2063 = vpop.f32.mrf.mxu0
      %v2064 = vadd.f32 0.0, %v2063
      %2065 = vmatmul.bf16.gmra.mxu0 %v2044
      %v2066 = vpop.f32.mrf.mxu0
      %v2067 = vadd.f32 0.0, %v2066
      %v2068 = vpop.f32.mrf.mxu0
      %v2069 = vadd.f32 0.0, %v2068
      %2070 = vmatmul.bf16.gmra.mxu0 %v2047
      %v2071 = vpop.f32.mrf.mxu0
      %v2072 = vadd.f32 0.0, %v2071
      %v2073 = vpop.f32.mrf.mxu0
      %v2074 = vadd.f32 0.0, %v2073
      %2075 = vmatmul.bf16.gmra.mxu0 %v2050
      %v2076 = vpop.f32.mrf.mxu0
      %v2077 = vadd.f32 0.0, %v2076
      %v2078 = vpop.f32.mrf.mxu0
      %v2079 = vadd.f32 0.0, %v2078
      %2080 = vdwg.mxu0
      %v2081 = vadd.f32 %v1955, %v2062
      %v2082 = vadd.f32 %v1956, %v2064
      %v2083 = vadd.f32 %v1957, %v2067
      %v2084 = vadd.f32 %v1958, %v2069
      %v2085 = vadd.f32 %v1959, %v2072
      %v2086 = vadd.f32 %v1960, %v2074
      %v2087 = vadd.f32 %v1961, %v2077
      %v2088 = vadd.f32 %v1962, %v2079
      %v2089 = vld [vmem:[%s1480 + $0x8] sm:$0xe]
      %v2090 = vld [vmem:[%s1480 + $0xc] sm:$0x1]
      %v2091 = vld [vmem:[%s1480 + $0x1c] sm:$0xe]
      %v2092 = vld [vmem:[%s1480 + $0x20] sm:$0x1]
      %v2093 = vld [vmem:[%s1480 + $0x30] sm:$0xe]
      %v2094 = vld [vmem:[%s1480 + $0x34] sm:$0x1]
      %v2095 = vld [vmem:[%s1480 + $0x44] sm:$0xe]
      %v2096 = vld [vmem:[%s1480 + $0x48] sm:$0x1]
      %v2097 = vld [vmem:[%s1480 + $0x58] sm:$0xe]
      %v2098 = vld [vmem:[%s1480 + $0x5c] sm:$0x1]
      %v2099 = vld [vmem:[%s1480 + $0x6c] sm:$0xe]
      %v2100 = vld [vmem:[%s1480 + $0x70] sm:$0x1]
      %v2101 = vld [vmem:[%s1480 + $0x80] sm:$0xe]
      %v2102 = vld [vmem:[%s1480 + $0x84] sm:$0x1]
      %v2103 = vld [vmem:[%s1480 + $0x94] sm:$0xe]
      %v2104 = vld [vmem:[%s1480 + $0x98] sm:$0x1]
      %v2121 = vrot.slane %v2089, 5
      %v2122 = vrot.slane %v2121, 4
      %v2123 = vrot.slane %v2090, 5
      %v2124 = vsel %vm659, %v2122, %v2123
      %v2125 = vrot.slane %v2091, 5
      %v2126 = vrot.slane %v2125, 4
      %v2127 = vrot.slane %v2092, 5
      %v2128 = vsel %vm659, %v2126, %v2127
      %v2129 = vrot.slane %v2093, 5
      %v2130 = vrot.slane %v2129, 4
      %v2131 = vrot.slane %v2094, 5
      %v2132 = vsel %vm659, %v2130, %v2131
      %v2133 = vrot.slane %v2095, 5
      %v2134 = vrot.slane %v2133, 4
      %v2135 = vrot.slane %v2096, 5
      %v2136 = vsel %vm659, %v2134, %v2135
      %v2137 = vrot.slane %v2097, 5
      %v2138 = vrot.slane %v2137, 4
      %v2139 = vrot.slane %v2098, 5
      %v2140 = vsel %vm659, %v2138, %v2139
      %v2141 = vrot.slane %v2099, 5
      %v2142 = vrot.slane %v2141, 4
      %v2143 = vrot.slane %v2100, 5
      %v2144 = vsel %vm659, %v2142, %v2143
      %v2145 = vrot.slane %v2101, 5
      %v2146 = vrot.slane %v2145, 4
      %v2147 = vrot.slane %v2102, 5
      %v2148 = vsel %vm659, %v2146, %v2147
      %v2149 = vrot.slane %v2103, 5
      %v2150 = vrot.slane %v2149, 4
      %v2151 = vrot.slane %v2104, 5
      %v2152 = vsel %vm659, %v2150, %v2151
      %s2153 = scalar_lea.vmem %s1, 96
      %v2154 = vld [vmem:[%s2153] sm:$0xf]
      %v2155 = vld [vmem:[%s2153 + $0x4] sm:$0xf]
      %v2156 = vunpack.c.l.b16 %v2124
      %v2157 = vunpack.c.l.b16 %v2128
      %v2158 = vunpack.c.l.b16 %v2132
      %v2159 = vunpack.c.l.b16 %v2136
      %v2160 = vunpack.c.l.b16 %v2140
      %v2161 = vunpack.c.l.b16 %v2144
      %v2162 = vunpack.c.l.b16 %v2148
      %v2163 = vunpack.c.l.b16 %v2152
      %v2164 = vpack.c.b16 %v2157, %v2156
      %v2165 = vpack.c.b16 %v2159, %v2158
      %v2166 = vpack.c.b16 %v2161, %v2160
      %v2167 = vpack.c.b16 %v2163, %v2162
      %v2170 = vunpack.c.l.b16 %v2154
      %v2171 = vunpack.c.l.b16 %v2155
      %v2172 = vpack.c.b16 %v2171, %v2170
      %v2175 = vsel %vm326, %v2164, 0
      %v2178 = vsel %vm326, %v2165, 0
      %v2181 = vsel %vm326, %v2166, 0
      %v2184 = vsel %vm326, %v2167, 0
      %2186 = vmatpush.bf16.msra.mxu0 0
      %2187 = vmatpush.bf16.msra.mxu0 0
      %2188 = vmatpush.bf16.msra.mxu0 0
      %2189 = vmatpush.bf16.msra.mxu0 0
      %2190 = vmatpush.bf16.msra.mxu0 0
      %2191 = vmatpush.bf16.msra.mxu0 0
      %2192 = vmatpush.bf16.msra.mxu0 0
      %2193 = vmatpush.bf16.msra.mxu0 %v2172
      %2194 = vmatmul.bf16.gmra.mxu0 %v2175
      %v2195 = vpop.f32.mrf.mxu0
      %v2196 = vadd.f32 0.0, %v2195
      %v2197 = vpop.f32.mrf.mxu0
      %v2198 = vadd.f32 0.0, %v2197
      %2199 = vmatmul.bf16.gmra.mxu0 %v2178
      %v2200 = vpop.f32.mrf.mxu0
      %v2201 = vadd.f32 0.0, %v2200
      %v2202 = vpop.f32.mrf.mxu0
      %v2203 = vadd.f32 0.0, %v2202
      %2204 = vmatmul.bf16.gmra.mxu0 %v2181
      %v2205 = vpop.f32.mrf.mxu0
      %v2206 = vadd.f32 0.0, %v2205
      %v2207 = vpop.f32.mrf.mxu0
      %v2208 = vadd.f32 0.0, %v2207
      %2209 = vmatmul.bf16.gmra.mxu0 %v2184
      %v2210 = vpop.f32.mrf.mxu0
      %v2211 = vadd.f32 0.0, %v2210
      %v2212 = vpop.f32.mrf.mxu0
      %v2213 = vadd.f32 0.0, %v2212
      %2214 = vdwg.mxu0
      %v2215 = vadd.f32 %v2081, %v2196
      %v2216 = vadd.f32 %v2082, %v2198
      %v2217 = vadd.f32 %v2083, %v2201
      %v2218 = vadd.f32 %v2084, %v2203
      %v2219 = vadd.f32 %v2085, %v2206
      %v2220 = vadd.f32 %v2086, %v2208
      %v2221 = vadd.f32 %v2087, %v2211
      %v2222 = vadd.f32 %v2088, %v2213
      %v2223 = vld [vmem:[%s1480 + $0xc] sm:$0x3]
      %v2224 = vld [vmem:[%s1480 + $0x20] sm:$0x3]
      %v2225 = vld [vmem:[%s1480 + $0x34] sm:$0x3]
      %v2226 = vld [vmem:[%s1480 + $0x48] sm:$0x3]
      %v2227 = vld [vmem:[%s1480 + $0x5c] sm:$0x3]
      %v2228 = vld [vmem:[%s1480 + $0x70] sm:$0x3]
      %v2229 = vld [vmem:[%s1480 + $0x84] sm:$0x3]
      %v2230 = vld [vmem:[%s1480 + $0x98] sm:$0x3]
      %v2232 = vshrl.u32 %v2089, 16
      %v2234 = vrot.slane %v2232, 5
      %v2235 = vshll.u32 %v2089, 16
      %v2237 = vrot.slane %v2235, 6
      %v2238 = vor.u32 %v2234, %v2237
      %v2239 = vrot.slane %v2238, 4
      %v2241 = vshrl.u32 %v2223, 16
      %v2243 = vrot.slane %v2241, 5
      %v2244 = vshll.u32 %v2223, 16
      %v2246 = vrot.slane %v2244, 6
      %v2247 = vor.u32 %v2243, %v2246
      %v2248 = vsel %vm906, %v2239, %v2247
      %v2250 = vshrl.u32 %v2091, 16
      %v2252 = vrot.slane %v2250, 5
      %v2253 = vshll.u32 %v2091, 16
      %v2255 = vrot.slane %v2253, 6
      %v2256 = vor.u32 %v2252, %v2255
      %v2257 = vrot.slane %v2256, 4
      %v2259 = vshrl.u32 %v2224, 16
      %v2261 = vrot.slane %v2259, 5
      %v2262 = vshll.u32 %v2224, 16
      %v2264 = vrot.slane %v2262, 6
      %v2265 = vor.u32 %v2261, %v2264
      %v2266 = vsel %vm906, %v2257, %v2265
      %v2268 = vshrl.u32 %v2093, 16
      %v2270 = vrot.slane %v2268, 5
      %v2271 = vshll.u32 %v2093, 16
      %v2273 = vrot.slane %v2271, 6
      %v2274 = vor.u32 %v2270, %v2273
      %v2275 = vrot.slane %v2274, 4
      %v2277 = vshrl.u32 %v2225, 16
      %v2279 = vrot.slane %v2277, 5
      %v2280 = vshll.u32 %v2225, 16
      %v2282 = vrot.slane %v2280, 6
      %v2283 = vor.u32 %v2279, %v2282
      %v2284 = vsel %vm906, %v2275, %v2283
      %v2286 = vshrl.u32 %v2095, 16
      %v2288 = vrot.slane %v2286, 5
      %v2289 = vshll.u32 %v2095, 16
      %v2291 = vrot.slane %v2289, 6
      %v2292 = vor.u32 %v2288, %v2291
      %v2293 = vrot.slane %v2292, 4
      %v2295 = vshrl.u32 %v2226, 16
      %v2297 = vrot.slane %v2295, 5
      %v2298 = vshll.u32 %v2226, 16
      %v2300 = vrot.slane %v2298, 6
      %v2301 = vor.u32 %v2297, %v2300
      %v2302 = vsel %vm906, %v2293, %v2301
      %v2304 = vshrl.u32 %v2097, 16
      %v2306 = vrot.slane %v2304, 5
      %v2307 = vshll.u32 %v2097, 16
      %v2309 = vrot.slane %v2307, 6
      %v2310 = vor.u32 %v2306, %v2309
      %v2311 = vrot.slane %v2310, 4
      %v2313 = vshrl.u32 %v2227, 16
      %v2315 = vrot.slane %v2313, 5
      %v2316 = vshll.u32 %v2227, 16
      %v2318 = vrot.slane %v2316, 6
      %v2319 = vor.u32 %v2315, %v2318
      %v2320 = vsel %vm906, %v2311, %v2319
      %v2322 = vshrl.u32 %v2099, 16
      %v2324 = vrot.slane %v2322, 5
      %v2325 = vshll.u32 %v2099, 16
      %v2327 = vrot.slane %v2325, 6
      %v2328 = vor.u32 %v2324, %v2327
      %v2329 = vrot.slane %v2328, 4
      %v2331 = vshrl.u32 %v2228, 16
      %v2333 = vrot.slane %v2331, 5
      %v2334 = vshll.u32 %v2228, 16
      %v2336 = vrot.slane %v2334, 6
      %v2337 = vor.u32 %v2333, %v2336
      %v2338 = vsel %vm906, %v2329, %v2337
      %v2340 = vshrl.u32 %v2101, 16
      %v2342 = vrot.slane %v2340, 5
      %v2343 = vshll.u32 %v2101, 16
      %v2345 = vrot.slane %v2343, 6
      %v2346 = vor.u32 %v2342, %v2345
      %v2347 = vrot.slane %v2346, 4
      %v2349 = vshrl.u32 %v2229, 16
      %v2351 = vrot.slane %v2349, 5
      %v2352 = vshll.u32 %v2229, 16
      %v2354 = vrot.slane %v2352, 6
      %v2355 = vor.u32 %v2351, %v2354
      %v2356 = vsel %vm906, %v2347, %v2355
      %v2358 = vshrl.u32 %v2103, 16
      %v2360 = vrot.slane %v2358, 5
      %v2361 = vshll.u32 %v2103, 16
      %v2363 = vrot.slane %v2361, 6
      %v2364 = vor.u32 %v2360, %v2363
      %v2365 = vrot.slane %v2364, 4
      %v2367 = vshrl.u32 %v2230, 16
      %v2369 = vrot.slane %v2367, 5
      %v2370 = vshll.u32 %v2230, 16
      %v2372 = vrot.slane %v2370, 6
      %v2373 = vor.u32 %v2369, %v2372
      %v2374 = vsel %vm906, %v2365, %v2373
      %s2375 = scalar_lea.vmem %s1, 104
      %v2376 = vld [vmem:[%s2375] sm:$0xf]
      %v2377 = vld [vmem:[%s2375 + $0x4] sm:$0xf]
      %v2378 = vunpack.c.l.b16 %v2248
      %v2379 = vunpack.c.l.b16 %v2266
      %v2380 = vunpack.c.l.b16 %v2284
      %v2381 = vunpack.c.l.b16 %v2302
      %v2382 = vunpack.c.l.b16 %v2320
      %v2383 = vunpack.c.l.b16 %v2338
      %v2384 = vunpack.c.l.b16 %v2356
      %v2385 = vunpack.c.l.b16 %v2374
      %v2386 = vpack.c.b16 %v2379, %v2378
      %v2387 = vpack.c.b16 %v2381, %v2380
      %v2388 = vpack.c.b16 %v2383, %v2382
      %v2389 = vpack.c.b16 %v2385, %v2384
      %v2392 = vunpack.c.l.b16 %v2376
      %v2393 = vunpack.c.l.b16 %v2377
      %v2394 = vpack.c.b16 %v2393, %v2392
      %v2397 = vsel %vm326, %v2386, 0
      %v2400 = vsel %vm326, %v2387, 0
      %v2403 = vsel %vm326, %v2388, 0
      %v2406 = vsel %vm326, %v2389, 0
      %2408 = vmatpush.bf16.msra.mxu0 0
      %2409 = vmatpush.bf16.msra.mxu0 0
      %2410 = vmatpush.bf16.msra.mxu0 0
      %2411 = vmatpush.bf16.msra.mxu0 0
      %2412 = vmatpush.bf16.msra.mxu0 0
      %2413 = vmatpush.bf16.msra.mxu0 0
      %2414 = vmatpush.bf16.msra.mxu0 0
      %2415 = vmatpush.bf16.msra.mxu0 %v2394
      %2416 = vmatmul.bf16.gmra.mxu0 %v2397
      %v2417 = vpop.f32.mrf.mxu0
      %v2418 = vadd.f32 0.0, %v2417
      %v2419 = vpop.f32.mrf.mxu0
      %v2420 = vadd.f32 0.0, %v2419
      %2421 = vmatmul.bf16.gmra.mxu0 %v2400
      %v2422 = vpop.f32.mrf.mxu0
      %v2423 = vadd.f32 0.0, %v2422
      %v2424 = vpop.f32.mrf.mxu0
      %v2425 = vadd.f32 0.0, %v2424
      %2426 = vmatmul.bf16.gmra.mxu0 %v2403
      %v2427 = vpop.f32.mrf.mxu0
      %v2428 = vadd.f32 0.0, %v2427
      %v2429 = vpop.f32.mrf.mxu0
      %v2430 = vadd.f32 0.0, %v2429
      %2431 = vmatmul.bf16.gmra.mxu0 %v2406
      %v2432 = vpop.f32.mrf.mxu0
      %v2433 = vadd.f32 0.0, %v2432
      %v2434 = vpop.f32.mrf.mxu0
      %v2435 = vadd.f32 0.0, %v2434
      %2436 = vdwg.mxu0
      %v2437 = vadd.f32 %v2215, %v2418
      %v2438 = vadd.f32 %v2216, %v2420
      %v2439 = vadd.f32 %v2217, %v2423
      %v2440 = vadd.f32 %v2218, %v2425
      %v2441 = vadd.f32 %v2219, %v2428
      %v2442 = vadd.f32 %v2220, %v2430
      %v2443 = vadd.f32 %v2221, %v2433
      %v2444 = vadd.f32 %v2222, %v2435
      %v2445 = vld [vmem:[%s1480 + $0xc] sm:$0xe]
      %v2446 = vld [vmem:[%s1480 + $0x10] sm:$0x3]
      %v2447 = vld [vmem:[%s1480 + $0x20] sm:$0xe]
      %v2448 = vld [vmem:[%s1480 + $0x24] sm:$0x3]
      %v2449 = vld [vmem:[%s1480 + $0x34] sm:$0xe]
      %v2450 = vld [vmem:[%s1480 + $0x38] sm:$0x3]
      %v2451 = vld [vmem:[%s1480 + $0x48] sm:$0xe]
      %v2452 = vld [vmem:[%s1480 + $0x4c] sm:$0x3]
      %v2453 = vld [vmem:[%s1480 + $0x5c] sm:$0xe]
      %v2454 = vld [vmem:[%s1480 + $0x60] sm:$0x3]
      %v2455 = vld [vmem:[%s1480 + $0x70] sm:$0xe]
      %v2456 = vld [vmem:[%s1480 + $0x74] sm:$0x3]
      %v2457 = vld [vmem:[%s1480 + $0x84] sm:$0xe]
      %v2458 = vld [vmem:[%s1480 + $0x88] sm:$0x3]
      %v2459 = vld [vmem:[%s1480 + $0x98] sm:$0xe]
      %v2460 = vld [vmem:[%s1480 + $0x9c] sm:$0x3]
      %v2462 = vshrl.u32 %v2445, 16
      %v2464 = vrot.slane %v2462, 5
      %v2465 = vshll.u32 %v2445, 16
      %v2467 = vrot.slane %v2465, 6
      %v2468 = vor.u32 %v2464, %v2467
      %v2469 = vrot.slane %v2468, 4
      %v2471 = vshrl.u32 %v2446, 16
      %v2473 = vrot.slane %v2471, 5
      %v2474 = vshll.u32 %v2446, 16
      %v2476 = vrot.slane %v2474, 6
      %v2477 = vor.u32 %v2473, %v2476
      %v2478 = vsel %vm906, %v2469, %v2477
      %v2480 = vshrl.u32 %v2447, 16
      %v2482 = vrot.slane %v2480, 5
      %v2483 = vshll.u32 %v2447, 16
      %v2485 = vrot.slane %v2483, 6
      %v2486 = vor.u32 %v2482, %v2485
      %v2487 = vrot.slane %v2486, 4
      %v2489 = vshrl.u32 %v2448, 16
      %v2491 = vrot.slane %v2489, 5
      %v2492 = vshll.u32 %v2448, 16
      %v2494 = vrot.slane %v2492, 6
      %v2495 = vor.u32 %v2491, %v2494
      %v2496 = vsel %vm906, %v2487, %v2495
      %v2498 = vshrl.u32 %v2449, 16
      %v2500 = vrot.slane %v2498, 5
      %v2501 = vshll.u32 %v2449, 16
      %v2503 = vrot.slane %v2501, 6
      %v2504 = vor.u32 %v2500, %v2503
      %v2505 = vrot.slane %v2504, 4
      %v2507 = vshrl.u32 %v2450, 16
      %v2509 = vrot.slane %v2507, 5
      %v2510 = vshll.u32 %v2450, 16
      %v2512 = vrot.slane %v2510, 6
      %v2513 = vor.u32 %v2509, %v2512
      %v2514 = vsel %vm906, %v2505, %v2513
      %v2516 = vshrl.u32 %v2451, 16
      %v2518 = vrot.slane %v2516, 5
      %v2519 = vshll.u32 %v2451, 16
      %v2521 = vrot.slane %v2519, 6
      %v2522 = vor.u32 %v2518, %v2521
      %v2523 = vrot.slane %v2522, 4
      %v2525 = vshrl.u32 %v2452, 16
      %v2527 = vrot.slane %v2525, 5
      %v2528 = vshll.u32 %v2452, 16
      %v2530 = vrot.slane %v2528, 6
      %v2531 = vor.u32 %v2527, %v2530
      %v2532 = vsel %vm906, %v2523, %v2531
      %v2534 = vshrl.u32 %v2453, 16
      %v2536 = vrot.slane %v2534, 5
      %v2537 = vshll.u32 %v2453, 16
      %v2539 = vrot.slane %v2537, 6
      %v2540 = vor.u32 %v2536, %v2539
      %v2541 = vrot.slane %v2540, 4
      %v2543 = vshrl.u32 %v2454, 16
      %v2545 = vrot.slane %v2543, 5
      %v2546 = vshll.u32 %v2454, 16
      %v2548 = vrot.slane %v2546, 6
      %v2549 = vor.u32 %v2545, %v2548
      %v2550 = vsel %vm906, %v2541, %v2549
      %v2552 = vshrl.u32 %v2455, 16
      %v2554 = vrot.slane %v2552, 5
      %v2555 = vshll.u32 %v2455, 16
      %v2557 = vrot.slane %v2555, 6
      %v2558 = vor.u32 %v2554, %v2557
      %v2559 = vrot.slane %v2558, 4
      %v2561 = vshrl.u32 %v2456, 16
      %v2563 = vrot.slane %v2561, 5
      %v2564 = vshll.u32 %v2456, 16
      %v2566 = vrot.slane %v2564, 6
      %v2567 = vor.u32 %v2563, %v2566
      %v2568 = vsel %vm906, %v2559, %v2567
      %v2570 = vshrl.u32 %v2457, 16
      %v2572 = vrot.slane %v2570, 5
      %v2573 = vshll.u32 %v2457, 16
      %v2575 = vrot.slane %v2573, 6
      %v2576 = vor.u32 %v2572, %v2575
      %v2577 = vrot.slane %v2576, 4
      %v2579 = vshrl.u32 %v2458, 16
      %v2581 = vrot.slane %v2579, 5
      %v2582 = vshll.u32 %v2458, 16
      %v2584 = vrot.slane %v2582, 6
      %v2585 = vor.u32 %v2581, %v2584
      %v2586 = vsel %vm906, %v2577, %v2585
      %v2588 = vshrl.u32 %v2459, 16
      %v2590 = vrot.slane %v2588, 5
      %v2591 = vshll.u32 %v2459, 16
      %v2593 = vrot.slane %v2591, 6
      %v2594 = vor.u32 %v2590, %v2593
      %v2595 = vrot.slane %v2594, 4
      %v2597 = vshrl.u32 %v2460, 16
      %v2599 = vrot.slane %v2597, 5
      %v2600 = vshll.u32 %v2460, 16
      %v2602 = vrot.slane %v2600, 6
      %v2603 = vor.u32 %v2599, %v2602
      %v2604 = vsel %vm906, %v2595, %v2603
      %s2605 = scalar_lea.vmem %s1, 112
      %v2606 = vld [vmem:[%s2605] sm:$0xf]
      %v2607 = vld [vmem:[%s2605 + $0x4] sm:$0xf]
      %v2608 = vunpack.c.l.b16 %v2478
      %v2609 = vunpack.c.l.b16 %v2496
      %v2610 = vunpack.c.l.b16 %v2514
      %v2611 = vunpack.c.l.b16 %v2532
      %v2612 = vunpack.c.l.b16 %v2550
      %v2613 = vunpack.c.l.b16 %v2568
      %v2614 = vunpack.c.l.b16 %v2586
      %v2615 = vunpack.c.l.b16 %v2604
      %v2616 = vpack.c.b16 %v2609, %v2608
      %v2617 = vpack.c.b16 %v2611, %v2610
      %v2618 = vpack.c.b16 %v2613, %v2612
      %v2619 = vpack.c.b16 %v2615, %v2614
      %v2622 = vunpack.c.l.b16 %v2606
      %v2623 = vunpack.c.l.b16 %v2607
      %v2624 = vpack.c.b16 %v2623, %v2622
      %v2627 = vsel %vm326, %v2616, 0
      %v2630 = vsel %vm326, %v2617, 0
      %v2633 = vsel %vm326, %v2618, 0
      %v2636 = vsel %vm326, %v2619, 0
      %2638 = vmatpush.bf16.msra.mxu0 0
      %2639 = vmatpush.bf16.msra.mxu0 0
      %2640 = vmatpush.bf16.msra.mxu0 0
      %2641 = vmatpush.bf16.msra.mxu0 0
      %2642 = vmatpush.bf16.msra.mxu0 0
      %2643 = vmatpush.bf16.msra.mxu0 0
      %2644 = vmatpush.bf16.msra.mxu0 0
      %2645 = vmatpush.bf16.msra.mxu0 %v2624
      %2646 = vmatmul.bf16.gmra.mxu0 %v2627
      %v2647 = vpop.f32.mrf.mxu0
      %v2648 = vadd.f32 0.0, %v2647
      %v2649 = vpop.f32.mrf.mxu0
      %v2650 = vadd.f32 0.0, %v2649
      %2651 = vmatmul.bf16.gmra.mxu0 %v2630
      %v2652 = vpop.f32.mrf.mxu0
      %v2653 = vadd.f32 0.0, %v2652
      %v2654 = vpop.f32.mrf.mxu0
      %v2655 = vadd.f32 0.0, %v2654
      %2656 = vmatmul.bf16.gmra.mxu0 %v2633
      %v2657 = vpop.f32.mrf.mxu0
      %v2658 = vadd.f32 0.0, %v2657
      %v2659 = vpop.f32.mrf.mxu0
      %v2660 = vadd.f32 0.0, %v2659
      %2661 = vmatmul.bf16.gmra.mxu0 %v2636
      %v2662 = vpop.f32.mrf.mxu0
      %v2663 = vadd.f32 0.0, %v2662
      %v2664 = vpop.f32.mrf.mxu0
      %v2665 = vadd.f32 0.0, %v2664
      %2666 = vdwg.mxu0
      %v2667 = vadd.f32 %v2437, %v2648
      %v2668 = vadd.f32 %v2438, %v2650
      %v2669 = vadd.f32 %v2439, %v2653
      %v2670 = vadd.f32 %v2440, %v2655
      %v2671 = vadd.f32 %v2441, %v2658
      %v2672 = vadd.f32 %v2442, %v2660
      %v2673 = vadd.f32 %v2443, %v2663
      %v2674 = vadd.f32 %v2444, %v2665
      %v2675 = vld [vmem:[%s1480 + $0xc] sm:$0xc]
      %v2676 = vld [vmem:[%s1480 + $0x20] sm:$0xc]
      %v2677 = vld [vmem:[%s1480 + $0x34] sm:$0xc]
      %v2678 = vld [vmem:[%s1480 + $0x48] sm:$0xc]
      %v2679 = vld [vmem:[%s1480 + $0x5c] sm:$0xc]
      %v2680 = vld [vmem:[%s1480 + $0x70] sm:$0xc]
      %v2681 = vld [vmem:[%s1480 + $0x84] sm:$0xc]
      %v2682 = vld [vmem:[%s1480 + $0x98] sm:$0xc]
      %v2699 = vrot.slane %v2675, 6
      %v2700 = vrot.slane %v2699, 4
      %v2701 = vrot.slane %v2446, 6
      %v2702 = vsel %vm1377, %v2700, %v2701
      %v2703 = vrot.slane %v2676, 6
      %v2704 = vrot.slane %v2703, 4
      %v2705 = vrot.slane %v2448, 6
      %v2706 = vsel %vm1377, %v2704, %v2705
      %v2707 = vrot.slane %v2677, 6
      %v2708 = vrot.slane %v2707, 4
      %v2709 = vrot.slane %v2450, 6
      %v2710 = vsel %vm1377, %v2708, %v2709
      %v2711 = vrot.slane %v2678, 6
      %v2712 = vrot.slane %v2711, 4
      %v2713 = vrot.slane %v2452, 6
      %v2714 = vsel %vm1377, %v2712, %v2713
      %v2715 = vrot.slane %v2679, 6
      %v2716 = vrot.slane %v2715, 4
      %v2717 = vrot.slane %v2454, 6
      %v2718 = vsel %vm1377, %v2716, %v2717
      %v2719 = vrot.slane %v2680, 6
      %v2720 = vrot.slane %v2719, 4
      %v2721 = vrot.slane %v2456, 6
      %v2722 = vsel %vm1377, %v2720, %v2721
      %v2723 = vrot.slane %v2681, 6
      %v2724 = vrot.slane %v2723, 4
      %v2725 = vrot.slane %v2458, 6
      %v2726 = vsel %vm1377, %v2724, %v2725
      %v2727 = vrot.slane %v2682, 6
      %v2728 = vrot.slane %v2727, 4
      %v2729 = vrot.slane %v2460, 6
      %v2730 = vsel %vm1377, %v2728, %v2729
      %s2731 = scalar_lea.vmem %s1, 120
      %v2732 = vld [vmem:[%s2731] sm:$0xf]
      %v2733 = vld [vmem:[%s2731 + $0x4] sm:$0xf]
      %v2734 = vunpack.c.l.b16 %v2702
      %v2735 = vunpack.c.l.b16 %v2706
      %v2736 = vunpack.c.l.b16 %v2710
      %v2737 = vunpack.c.l.b16 %v2714
      %v2738 = vunpack.c.l.b16 %v2718
      %v2739 = vunpack.c.l.b16 %v2722
      %v2740 = vunpack.c.l.b16 %v2726
      %v2741 = vunpack.c.l.b16 %v2730
      %v2742 = vpack.c.b16 %v2735, %v2734
      %v2743 = vpack.c.b16 %v2737, %v2736
      %v2744 = vpack.c.b16 %v2739, %v2738
      %v2745 = vpack.c.b16 %v2741, %v2740
      %v2748 = vunpack.c.l.b16 %v2732
      %v2749 = vunpack.c.l.b16 %v2733
      %v2750 = vpack.c.b16 %v2749, %v2748
      %v2753 = vsel %vm326, %v2742, 0
      %v2756 = vsel %vm326, %v2743, 0
      %v2759 = vsel %vm326, %v2744, 0
      %v2762 = vsel %vm326, %v2745, 0
      %2764 = vmatpush.bf16.msra.mxu0 0
      %2765 = vmatpush.bf16.msra.mxu0 0
      %2766 = vmatpush.bf16.msra.mxu0 0
      %2767 = vmatpush.bf16.msra.mxu0 0
      %2768 = vmatpush.bf16.msra.mxu0 0
      %2769 = vmatpush.bf16.msra.mxu0 0
      %2770 = vmatpush.bf16.msra.mxu0 0
      %2771 = vmatpush.bf16.msra.mxu0 %v2750
      %2772 = vmatmul.bf16.gmra.mxu0 %v2753
      %v2773 = vpop.f32.mrf.mxu0
      %v2774 = vadd.f32 0.0, %v2773
      %v2775 = vpop.f32.mrf.mxu0
      %v2776 = vadd.f32 0.0, %v2775
      %2777 = vmatmul.bf16.gmra.mxu0 %v2756
      %v2778 = vpop.f32.mrf.mxu0
      %v2779 = vadd.f32 0.0, %v2778
      %v2780 = vpop.f32.mrf.mxu0
      %v2781 = vadd.f32 0.0, %v2780
      %2782 = vmatmul.bf16.gmra.mxu0 %v2759
      %v2783 = vpop.f32.mrf.mxu0
      %v2784 = vadd.f32 0.0, %v2783
      %v2785 = vpop.f32.mrf.mxu0
      %v2786 = vadd.f32 0.0, %v2785
      %2787 = vmatmul.bf16.gmra.mxu0 %v2762
      %v2788 = vpop.f32.mrf.mxu0
      %v2789 = vadd.f32 0.0, %v2788
      %v2790 = vpop.f32.mrf.mxu0
      %v2791 = vadd.f32 0.0, %v2790
      %2792 = vdwg.mxu0
      %v2793 = vadd.f32 %v2667, %v2774
      %v2794 = vadd.f32 %v2668, %v2776
      %v2795 = vadd.f32 %v2669, %v2779
      %v2796 = vadd.f32 %v2670, %v2781
      %v2797 = vadd.f32 %v2671, %v2784
      %v2798 = vadd.f32 %v2672, %v2786
      %v2799 = vadd.f32 %v2673, %v2789
      %v2800 = vadd.f32 %v2674, %v2791
      %v2801 = vld [vmem:[%s2] sm:$0x1]
      %v2803 = vperm.slane %v2801, 0
      %v2805 = vadd.f32 %v2793, %v2803
      %v2806 = vadd.f32 %v2794, %v2803
      %v2807 = vadd.f32 %v2795, %v2803
      %v2808 = vadd.f32 %v2796, %v2803
      %v2809 = vadd.f32 %v2797, %v2803
      %v2810 = vadd.f32 %v2798, %v2803
      %v2811 = vadd.f32 %v2799, %v2803
      %v2812 = vadd.f32 %v2800, %v2803
      %v2813 = vmax.f32 %v2805, 0.0
      %v2814 = vmax.f32 %v2806, 0.0
      %v2815 = vmax.f32 %v2807, 0.0
      %v2816 = vmax.f32 %v2808, 0.0
      %v2817 = vmax.f32 %v2809, 0.0
      %v2818 = vmax.f32 %v2810, 0.0
      %v2819 = vmax.f32 %v2811, 0.0
      %v2820 = vmax.f32 %v2812, 0.0
      %v2821 = vpack.c.bf16 %v2813, %v2813
      %v2822 = vpack.c.bf16 %v2814, %v2814
      %v2823 = vpack.c.bf16 %v2815, %v2815
      %v2824 = vpack.c.bf16 %v2816, %v2816
      %v2825 = vpack.c.bf16 %v2817, %v2817
      %v2826 = vpack.c.bf16 %v2818, %v2818
      %v2827 = vpack.c.bf16 %v2819, %v2819
      %v2828 = vpack.c.bf16 %v2820, %v2820
      %vm2829 = vcmask 257024
      %2830 = vst.msk [vmem:[%s170] sm:$0xf] %vm2829, %v2821
      %2831 = vst.msk [vmem:[%s170 + $0x4] sm:$0xf] %vm2829, %v2822
      %2832 = vst.msk [vmem:[%s170 + $0x8] sm:$0xf] %vm2829, %v2823
      %2833 = vst.msk [vmem:[%s170 + $0xc] sm:$0xf] %vm2829, %v2824
      %2834 = vst.msk [vmem:[%s170 + $0x10] sm:$0xf] %vm2829, %v2825
      %2835 = vst.msk [vmem:[%s170 + $0x14] sm:$0xf] %vm2829, %v2826
      %2836 = vst.msk [vmem:[%s170 + $0x18] sm:$0xf] %vm2829, %v2827
      %2837 = vst.msk [vmem:[%s170 + $0x1c] sm:$0xf] %vm2829, %v2828
      %p2838 = scmp.lt.s32.totalorder %s14, 1
      %s2839 = scalar_select %p2838, %s14, 1
      %s2840 = smul.addr %s2839, 8
      %s2841 = smul.addr %s2840, 4
      %s2842 = scalar_lea.vmem %s3, %s2841
      // Predicated region
      $region33: #{cnn_encoder_forward.3} parent=31 // pred_check
        %p2843 = pneg %p100
      $region34: #{cnn_encoder_forward.3} parent=31 // pred_check_branch
        %2845 = sbr.rel (%p2843) target = $region36
      $region35: #{cnn_encoder_forward.3} parent=31 // pred_region
        _
      $region36: #{cnn_encoder_forward.3} parent=31 // pred_fallthru
        _
    $region32: #{cnn_encoder_forward.3} parent=5 // pred_fallthru
      _
    %p2846 = scmp.le.s32.totalorder 2, %s9
    // Predicated region
    $region37: #{cnn_encoder_forward.3} parent=5 // pred_check
      %p2847 = pneg %p2846
    $region38: #{cnn_encoder_forward.3} parent=5 // pred_check_branch
      %2849 = sbr.rel (%p2847) target = $region40
    $region39: #{cnn_encoder_forward.3} parent=5 // pred_region
      %s2850 = ssub.s32 %s9, 2
      // Predicated region
      $region41: #{cnn_encoder_forward.3} parent=39 // pred_check
        %p2851 = pneg %p106
      $region42: #{cnn_encoder_forward.3} parent=39 // pred_check_branch
        %2853 = sbr.rel (%p2851) target = $region44
      $region43: #{cnn_encoder_forward.3} parent=39 // pred_region
        %p2854 = scmp.lt.s32.totalorder %s15, 1
        %s2855 = scalar_select %p2854, %s15, 1
        %s2856 = smul.addr %s2855, 8
        %s2857 = smul.addr %s2856, 4
        %s2858 = scalar_lea.vmem %s3, %s2857
      $region44: #{cnn_encoder_forward.3} parent=39 // pred_fallthru
        _
    $region40: #{cnn_encoder_forward.3} parent=5 // pred_fallthru
      _
  $region6: #{cnn_encoder_forward.3} parent=0 // loop_footer
    %s13 = sadd.s32 1, %s9
  $region7: #{cnn_encoder_forward.3} parent=0 // loop_footer_branch
    %8 = sbr.rel target = $region3
  $region8: #{cnn_encoder_forward.3} parent=0 // loop_exit
    _

// kernel: cnn_encoder_forward.5
$region0: #{cnn_encoder_forward.5}
  #allocation0 [shape = 'u32[]', space=smem, size = 0x4, offset = 0x4, fixed_abs, tag = 'smem constant byte address 0x4 - core index']
  #allocation1 [shape = 'u32[72,128]{1,0:T(1,128)}', space=vmem, size = 0x9000, scoped, tag = 'internal scratch']
  %s0 = inlined_call_operand.vmem [shape: bf16[2,3,10,64], index: 0, kind: input, shape index: {}]
  %s1 = inlined_call_operand.vmem [shape: bf16[9,64,64], index: 1, kind: input, shape index: {}]
  %s2 = inlined_call_operand.vmem [shape: f32[1,64], index: 2, kind: input, shape index: {}]
  %s3 = inlined_call_operand.vmem [shape: f32[2,1,8,64], index: 3, kind: output, shape index: {}]
  %s4 = sld [smem:[#allocation0]]
  $region45: #{cnn_encoder_forward.5} parent=0
    _
  %s6 = ssub.s32 1, %s4
  %s7 = scalar_select 0, %s6, %s4
  loop: start=0, step=1, limit=4
  $region2: #{cnn_encoder_forward.5} parent=0 // loop_pre_header
    _
  $region3: #{cnn_encoder_forward.5} parent=0 // loop_header
    %s9 = sphi 0, %s13
    %p10 = scmp.ge.s32.totalorder %s9, 4
    %s19 = sphi 0, %s21
    %s22 = sphi 0, %s19
    %s23 = sphi 0, %s22
    %s39 = sphi 0, %s23
    %s43 = sphi 0, %s43
    %s45 = sphi 0, %s43
    %s46 = sphi 0, %s45
    %s60 = sphi 0, %s46
    %s64 = sphi 0, %s64
    %s66 = sphi 0, %s64
    %s67 = sphi 0, %s66
    %s81 = sphi 0, %s67
    %s87 = sphi 0, %s89
    %s90 = sphi 0, %s87
    %s91 = sphi 0, %s90
    %s107 = sphi 0, %s91
  $region4: #{cnn_encoder_forward.5} parent=0 // loop_header_branch
    %12 = sbr.rel (%p10) target = $region8
  $region5: #{cnn_encoder_forward.5} parent=0 // loop_body
    %s14 = ssub.s32 %s9, 1
    %s15 = ssub.s32 %s9, 2
    %s16 = sadd.s32 %s9, 1
    %s17 = ssub.s32 %s9, %s16
    %p18 = scmp.eq.s32.totalorder %s17, 0
    %s20 = sadd.s32 %s19, 1
    %s21 = scalar_select %p18, %s19, %s20
    %p24 = pneg %p18
    %p25 = scmp.eq.s32.totalorder %s9, 1
    %p26 = por %p24, %p25
    %p27 = scmp.ne.s32.totalorder %s19, %s22
    %p28 = scmp.eq.s32.totalorder %s9, 0
    %p29 = por %p27, %p28
    %p30 = scmp.ne.s32.totalorder %s19, %s22
    %p31 = scmp.eq.s32.totalorder %s14, 1
    %p32 = por %p30, %p31
    %p33 = scmp.ne.s32.totalorder %s22, %s23
    %p34 = scmp.eq.s32.totalorder %s14, 0
    %p35 = por %p33, %p34
    %p36 = scmp.ne.s32.totalorder %s22, %s23
    %p37 = scmp.eq.s32.totalorder %s15, 1
    %p38 = por %p36, %p37
    %p40 = scmp.ne.s32.totalorder %s23, %s39
    %p41 = scmp.eq.s32.totalorder %s15, 0
    %p42 = por %p40, %p41
    %s44 = sadd.s32 %s43, 1
    %p47 = scmp.eq.s32.totalorder %s9, 1
    %p48 = scmp.ne.s32.totalorder %s43, %s45
    %p49 = scmp.eq.s32.totalorder %s9, 0
    %p50 = por %p48, %p49
    %p51 = scmp.ne.s32.totalorder %s43, %s45
    %p52 = scmp.eq.s32.totalorder %s14, 1
    %p53 = por %p51, %p52
    %p54 = scmp.ne.s32.totalorder %s45, %s46
    %p55 = scmp.eq.s32.totalorder %s14, 0
    %p56 = por %p54, %p55
    %p57 = scmp.ne.s32.totalorder %s45, %s46
    %p58 = scmp.eq.s32.totalorder %s15, 1
    %p59 = por %p57, %p58
    %p61 = scmp.ne.s32.totalorder %s46, %s60
    %p62 = scmp.eq.s32.totalorder %s15, 0
    %p63 = por %p61, %p62
    %s65 = sadd.s32 %s64, 1
    %p68 = scmp.eq.s32.totalorder %s9, 1
    %p69 = scmp.ne.s32.totalorder %s64, %s66
    %p70 = scmp.eq.s32.totalorder %s9, 0
    %p71 = por %p69, %p70
    %p72 = scmp.ne.s32.totalorder %s64, %s66
    %p73 = scmp.eq.s32.totalorder %s14, 1
    %p74 = por %p72, %p73
    %p75 = scmp.ne.s32.totalorder %s66, %s67
    %p76 = scmp.eq.s32.totalorder %s14, 0
    %p77 = por %p75, %p76
    %p78 = scmp.ne.s32.totalorder %s66, %s67
    %p79 = scmp.eq.s32.totalorder %s15, 1
    %p80 = por %p78, %p79
    %p82 = scmp.ne.s32.totalorder %s67, %s81
    %p83 = scmp.eq.s32.totalorder %s15, 0
    %p84 = por %p82, %p83
    %s85 = ssub.s32 %s9, %s16
    %p86 = scmp.eq.s32.totalorder %s85, 0
    %s88 = sadd.s32 %s87, 1
    %s89 = scalar_select %p86, %s87, %s88
    %p92 = pneg %p86
    %p93 = scmp.eq.s32.totalorder %s9, 1
    %p94 = por %p92, %p93
    %p95 = scmp.ne.s32.totalorder %s87, %s90
    %p96 = scmp.eq.s32.totalorder %s9, 0
    %p97 = por %p95, %p96
    %p98 = scmp.ne.s32.totalorder %s87, %s90
    %p99 = scmp.eq.s32.totalorder %s14, 1
    %p100 = por %p98, %p99
    %p101 = scmp.ne.s32.totalorder %s90, %s91
    %p102 = scmp.eq.s32.totalorder %s14, 0
    %p103 = por %p101, %p102
    %p104 = scmp.ne.s32.totalorder %s90, %s91
    %p105 = scmp.eq.s32.totalorder %s15, 1
    %p106 = por %p104, %p105
    %p108 = scmp.ne.s32.totalorder %s91, %s107
    %p109 = scmp.eq.s32.totalorder %s15, 0
    %p110 = por %p108, %p109
    %p111 = scmp.le.s32.totalorder 1, %s9
    %p112 = scmp.lt.s32.totalorder %s9, 3
    %p113 = pnand %p111, %p112
    %p114 = pneg %p113
    // Predicated region
    $region9: #{cnn_encoder_forward.5} parent=5 // pred_check
      _
    $region10: #{cnn_encoder_forward.5} parent=5 // pred_check_branch
      %116 = sbr.rel (%p113) target = $region12
    $region11: #{cnn_encoder_forward.5} parent=5 // pred_region
      %s117 = ssub.s32 %s9, 1
      // Predicated region
      $region13: #{cnn_encoder_forward.5} parent=11 // pred_check
        %p118 = pneg %p56
      $region14: #{cnn_encoder_forward.5} parent=11 // pred_check_branch
        %120 = sbr.rel (%p118) target = $region16
      $region15: #{cnn_encoder_forward.5} parent=11 // pred_region
        _
      $region16: #{cnn_encoder_forward.5} parent=11 // pred_fallthru
        _
      // Predicated region
      $region17: #{cnn_encoder_forward.5} parent=11 // pred_check
        %p121 = pneg %p77
      $region18: #{cnn_encoder_forward.5} parent=11 // pred_check_branch
        %123 = sbr.rel (%p121) target = $region20
      $region19: #{cnn_encoder_forward.5} parent=11 // pred_region
        _
      $region20: #{cnn_encoder_forward.5} parent=11 // pred_fallthru
        _
    $region12: #{cnn_encoder_forward.5} parent=5 // pred_fallthru
      _
    %p124 = scmp.lt.s32.totalorder %s9, 2
    // Predicated region
    $region21: #{cnn_encoder_forward.5} parent=5 // pred_check
      %p125 = pneg %p124
    $region22: #{cnn_encoder_forward.5} parent=5 // pred_check_branch
      %127 = sbr.rel (%p125) target = $region24
    $region23: #{cnn_encoder_forward.5} parent=5 // pred_region
      // Predicated region
      $region25: #{cnn_encoder_forward.5} parent=23 // pred_check
        %p128 = pneg %p29
      $region26: #{cnn_encoder_forward.5} parent=23 // pred_check_branch
        %130 = sbr.rel (%p128) target = $region28
      $region27: #{cnn_encoder_forward.5} parent=23 // pred_region
        %p131 = scmp.lt.s32.totalorder %s9, 1
        %s132 = scalar_select %p131, %s9, 1
        %s133 = smul.addr %s132, 6
        %s134 = smul.addr %s133, 4
        %s135 = scalar_lea.vmem %s0, %s134
      $region28: #{cnn_encoder_forward.5} parent=23 // pred_fallthru
        _
    $region24: #{cnn_encoder_forward.5} parent=5 // pred_fallthru
      _
    %p136 = scmp.le.s32.totalorder 1, %s9
    %p137 = scmp.lt.s32.totalorder %s9, 3
    %p138 = pnand %p136, %p137
    %p139 = pneg %p138
    // Predicated region
    $region29: #{cnn_encoder_forward.5} parent=5 // pred_check
      _
    $region30: #{cnn_encoder_forward.5} parent=5 // pred_check_branch
      %141 = sbr.rel (%p138) target = $region32
    $region31: #{cnn_encoder_forward.5} parent=5 // pred_region
      %s142 = ssub.s32 %s9, 1
      %p143 = scmp.lt.s32.totalorder %s14, 1
      %s144 = scalar_select %p143, %s14, 1
      %s145 = smul.addr %s144, 6
      %s146 = smul.addr %s145, 4
      %s147 = scalar_lea.vmem %s0, %s146
      %p148 = pneg %p35
      %p149 = pneg %p32
      %p150 = pneg %p56
      %p151 = pneg %p53
      %p152 = pneg %p77
      %p153 = pneg %p74
      %p154 = pneg %p103
      %p155 = pneg %p100
      %p156 = scmp.lt.s32.totalorder %s14, 1
      %s157 = scalar_select %p156, %s14, 1
      %s158 = smul.addr %s157, 8
      %s159 = scalar_lea.vmem %s3, %s158
      %p160 = scmp.lt.s32.totalorder %s14, 1
      %s161 = scalar_select %p160, %s14, 1
      %s162 = smul.addr %s161, 6
      %s163 = smul.addr %s162, 4
      %s164 = scalar_lea.vmem %s0, %s163
      %p165 = scmp.lt.s32.totalorder %s14, 1
      %s166 = scalar_select %p165, %s14, 1
      %s167 = smul.addr %s166, 8
      %s168 = scalar_lea.vmem %s3, %s167
      %v170 = vld [vmem:[%s164] sm:$0xf]
      %v171 = vld [vmem:[%s1] sm:$0xf]
      %v172 = vld [vmem:[%s1 + $0x4] sm:$0xf]
      %v173 = vld [vmem:[%s1 + $0x8] sm:$0xf]
      %v174 = vld [vmem:[%s1 + $0xc] sm:$0xf]
      %v175 = vld [vmem:[%s1 + $0x10] sm:$0xf]
      %v176 = vld [vmem:[%s1 + $0x14] sm:$0xf]
      %v177 = vld [vmem:[%s1 + $0x18] sm:$0xf]
      %v178 = vld [vmem:[%s1 + $0x1c] sm:$0xf]
      %v179 = vld [vmem:[%s164 + $0x4] sm:$0x1]
      %s180 = scalar_lea.vmem %s1, 32
      %v181 = vld [vmem:[%s180] sm:$0xf]
      %v182 = vld [vmem:[%s180 + $0x4] sm:$0xf]
      %v183 = vld [vmem:[%s180 + $0x8] sm:$0xf]
      %v184 = vld [vmem:[%s180 + $0xc] sm:$0xf]
      %v185 = vld [vmem:[%s180 + $0x10] sm:$0xf]
      %v186 = vld [vmem:[%s180 + $0x14] sm:$0xf]
      %v187 = vld [vmem:[%s180 + $0x18] sm:$0xf]
      %v188 = vld [vmem:[%s180 + $0x1c] sm:$0xf]
      %v191 = vunpack.c.l.b16 %v170
      %v192 = vunpack.c.l.b16 %v179
      %v193 = vpack.c.b16 %v192, %v191
      %v195 = vshrl.u32 %v193, 16
      %v197 = vshll.u32 %v193, 16
      %v199 = vrot.slane %v197, 1
      %v200 = vor.u32 %v195, %v199
      %v209 = vunpack.c.l.b16 %v181
      %v210 = vunpack.c.l.b16 %v182
      %v211 = vunpack.c.l.b16 %v183
      %v212 = vunpack.c.l.b16 %v184
      %v213 = vunpack.c.l.b16 %v185
      %v214 = vunpack.c.l.b16 %v186
      %v215 = vunpack.c.l.b16 %v187
      %v216 = vunpack.c.l.b16 %v188
      %v217 = vpack.c.b16 %v210, %v209
      %v218 = vpack.c.b16 %v212, %v211
      %v219 = vpack.c.b16 %v214, %v213
      %v220 = vpack.c.b16 %v216, %v215
      %vm225 = vcmask 523264
      %v227 = vsel %vm225, %v200, 0
      %229 = vmatpush.bf16.msra.mxu0 0
      %230 = vmatpush.bf16.msra.mxu0 0
      %231 = vmatpush.bf16.msra.mxu0 0
      %232 = vmatpush.bf16.msra.mxu0 0
      %233 = vmatpush.bf16.msra.mxu0 %v220
      %234 = vmatpush.bf16.msra.mxu0 %v219
      %235 = vmatpush.bf16.msra.mxu0 %v218
      %236 = vmatpush.bf16.msra.mxu0 %v217
      %237 = vmatmul.bf16.gmra.mxu0 %v227
      %v238 = vpop.f32.mrf.mxu0
      %v239 = vadd.f32 0.0, %v238
      %v240 = vpop.f32.mrf.mxu0
      %241 = vdwg.mxu0
      %v250 = vunpack.c.l.b16 %v171
      %v251 = vunpack.c.l.b16 %v172
      %v252 = vunpack.c.l.b16 %v173
      %v253 = vunpack.c.l.b16 %v174
      %v254 = vunpack.c.l.b16 %v175
      %v255 = vunpack.c.l.b16 %v176
      %v256 = vunpack.c.l.b16 %v177
      %v257 = vunpack.c.l.b16 %v178
      %v258 = vpack.c.b16 %v251, %v250
      %v259 = vpack.c.b16 %v253, %v252
      %v260 = vpack.c.b16 %v255, %v254
      %v261 = vpack.c.b16 %v257, %v256
      %v267 = vsel %vm225, %v170, 0
      %269 = vmatpush.bf16.msra.mxu0 0
      %270 = vmatpush.bf16.msra.mxu0 0
      %271 = vmatpush.bf16.msra.mxu0 0
      %272 = vmatpush.bf16.msra.mxu0 0
      %273 = vmatpush.bf16.msra.mxu0 %v261
      %274 = vmatpush.bf16.msra.mxu0 %v260
      %275 = vmatpush.bf16.msra.mxu0 %v259
      %276 = vmatpush.bf16.msra.mxu0 %v258
      %277 = vmatmul.bf16.gmra.mxu0 %v267
      %v278 = vpop.f32.mrf.mxu0
      %v279 = vadd.f32 %v239, %v278
      %v280 = vpop.f32.mrf.mxu0
      %281 = vdwg.mxu0
      %v282 = vld [vmem:[%s164] sm:$0xe]
      %s283 = scalar_lea.vmem %s1, 64
      %v284 = vld [vmem:[%s283] sm:$0xf]
      %v285 = vld [vmem:[%s283 + $0x4] sm:$0xf]
      %v286 = vld [vmem:[%s283 + $0x8] sm:$0xf]
      %v287 = vld [vmem:[%s283 + $0xc] sm:$0xf]
      %v288 = vld [vmem:[%s283 + $0x10] sm:$0xf]
      %v289 = vld [vmem:[%s283 + $0x14] sm:$0xf]
      %v290 = vld [vmem:[%s283 + $0x18] sm:$0xf]
      %v291 = vld [vmem:[%s283 + $0x1c] sm:$0xf]
      %v293 = vunpack.c.l.b16 %v282
      %v294 = vpack.c.b16 %v192, %v293
      %v295 = vrot.slane %v294, 1
      %v304 = vunpack.c.l.b16 %v284
      %v305 = vunpack.c.l.b16 %v285
      %v306 = vunpack.c.l.b16 %v286
      %v307 = vunpack.c.l.b16 %v287
      %v308 = vunpack.c.l.b16 %v288
      %v309 = vunpack.c.l.b16 %v289
      %v310 = vunpack.c.l.b16 %v290
      %v311 = vunpack.c.l.b16 %v291
      %v312 = vpack.c.b16 %v305, %v304
      %v313 = vpack.c.b16 %v307, %v306
      %v314 = vpack.c.b16 %v309, %v308
      %v315 = vpack.c.b16 %v311, %v310
      %v321 = vsel %vm225, %v295, 0
      %323 = vmatpush.bf16.msra.mxu0 0
      %324 = vmatpush.bf16.msra.mxu0 0
      %325 = vmatpush.bf16.msra.mxu0 0
      %326 = vmatpush.bf16.msra.mxu0 0
      %327 = vmatpush.bf16.msra.mxu0 %v315
      %328 = vmatpush.bf16.msra.mxu0 %v314
      %329 = vmatpush.bf16.msra.mxu0 %v313
      %330 = vmatpush.bf16.msra.mxu0 %v312
      %331 = vmatmul.bf16.gmra.mxu0 %v321
      %v332 = vpop.f32.mrf.mxu0
      %v333 = vadd.f32 0.0, %v332
      %v334 = vpop.f32.mrf.mxu0
      %335 = vdwg.mxu0
      %v336 = vadd.f32 %v279, %v333
      %s337 = scalar_lea.vmem %s164, 8
      %v338 = vld [vmem:[%s337] sm:$0xf]
      %s339 = scalar_lea.vmem %s1, 96
      %v340 = vld [vmem:[%s339] sm:$0xf]
      %v341 = vld [vmem:[%s339 + $0x4] sm:$0xf]
      %v342 = vld [vmem:[%s339 + $0x8] sm:$0xf]
      %v343 = vld [vmem:[%s339 + $0xc] sm:$0xf]
      %v344 = vld [vmem:[%s339 + $0x10] sm:$0xf]
      %v345 = vld [vmem:[%s339 + $0x14] sm:$0xf]
      %v346 = vld [vmem:[%s339 + $0x18] sm:$0xf]
      %v347 = vld [vmem:[%s339 + $0x1c] sm:$0xf]
      %v356 = vunpack.c.l.b16 %v340
      %v357 = vunpack.c.l.b16 %v341
      %v358 = vunpack.c.l.b16 %v342
      %v359 = vunpack.c.l.b16 %v343
      %v360 = vunpack.c.l.b16 %v344
      %v361 = vunpack.c.l.b16 %v345
      %v362 = vunpack.c.l.b16 %v346
      %v363 = vunpack.c.l.b16 %v347
      %v364 = vpack.c.b16 %v357, %v356
      %v365 = vpack.c.b16 %v359, %v358
      %v366 = vpack.c.b16 %v361, %v360
      %v367 = vpack.c.b16 %v363, %v362
      %v373 = vsel %vm225, %v338, 0
      %375 = vmatpush.bf16.msra.mxu0 0
      %376 = vmatpush.bf16.msra.mxu0 0
      %377 = vmatpush.bf16.msra.mxu0 0
      %378 = vmatpush.bf16.msra.mxu0 0
      %379 = vmatpush.bf16.msra.mxu0 %v367
      %380 = vmatpush.bf16.msra.mxu0 %v366
      %381 = vmatpush.bf16.msra.mxu0 %v365
      %382 = vmatpush.bf16.msra.mxu0 %v364
      %383 = vmatmul.bf16.gmra.mxu0 %v373
      %v384 = vpop.f32.mrf.mxu0
      %v385 = vadd.f32 0.0, %v384
      %v386 = vpop.f32.mrf.mxu0
      %387 = vdwg.mxu0
      %v388 = vadd.f32 %v336, %v385
      %v389 = vld [vmem:[%s337] sm:$0xf]
      %v390 = vld [vmem:[%s337 + $0x4] sm:$0x1]
      %s391 = scalar_lea.vmem %s1, 128
      %v392 = vld [vmem:[%s391] sm:$0xf]
      %v393 = vld [vmem:[%s391 + $0x4] sm:$0xf]
      %v394 = vld [vmem:[%s391 + $0x8] sm:$0xf]
      %v395 = vld [vmem:[%s391 + $0xc] sm:$0xf]
      %v396 = vld [vmem:[%s391 + $0x10] sm:$0xf]
      %v397 = vld [vmem:[%s391 + $0x14] sm:$0xf]
      %v398 = vld [vmem:[%s391 + $0x18] sm:$0xf]
      %v399 = vld [vmem:[%s391 + $0x1c] sm:$0xf]
      %v402 = vunpack.c.l.b16 %v389
      %v403 = vunpack.c.l.b16 %v390
      %v404 = vpack.c.b16 %v403, %v402
      %v406 = vshrl.u32 %v404, 16
      %v408 = vshll.u32 %v404, 16
      %v410 = vrot.slane %v408, 1
      %v411 = vor.u32 %v406, %v410
      %v420 = vunpack.c.l.b16 %v392
      %v421 = vunpack.c.l.b16 %v393
      %v422 = vunpack.c.l.b16 %v394
      %v423 = vunpack.c.l.b16 %v395
      %v424 = vunpack.c.l.b16 %v396
      %v425 = vunpack.c.l.b16 %v397
      %v426 = vunpack.c.l.b16 %v398
      %v427 = vunpack.c.l.b16 %v399
      %v428 = vpack.c.b16 %v421, %v420
      %v429 = vpack.c.b16 %v423, %v422
      %v430 = vpack.c.b16 %v425, %v424
      %v431 = vpack.c.b16 %v427, %v426
      %v437 = vsel %vm225, %v411, 0
      %439 = vmatpush.bf16.msra.mxu0 0
      %440 = vmatpush.bf16.msra.mxu0 0
      %441 = vmatpush.bf16.msra.mxu0 0
      %442 = vmatpush.bf16.msra.mxu0 0
      %443 = vmatpush.bf16.msra.mxu0 %v431
      %444 = vmatpush.bf16.msra.mxu0 %v430
      %445 = vmatpush.bf16.msra.mxu0 %v429
      %446 = vmatpush.bf16.msra.mxu0 %v428
      %447 = vmatmul.bf16.gmra.mxu0 %v437
      %v448 = vpop.f32.mrf.mxu0
      %v449 = vadd.f32 0.0, %v448
      %v450 = vpop.f32.mrf.mxu0
      %451 = vdwg.mxu0
      %v452 = vadd.f32 %v388, %v449
      %v453 = vld [vmem:[%s337] sm:$0xe]
      %s454 = scalar_lea.vmem %s1, 160
      %v455 = vld [vmem:[%s454] sm:$0xf]
      %v456 = vld [vmem:[%s454 + $0x4] sm:$0xf]
      %v457 = vld [vmem:[%s454 + $0x8] sm:$0xf]
      %v458 = vld [vmem:[%s454 + $0xc] sm:$0xf]
      %v459 = vld [vmem:[%s454 + $0x10] sm:$0xf]
      %v460 = vld [vmem:[%s454 + $0x14] sm:$0xf]
      %v461 = vld [vmem:[%s454 + $0x18] sm:$0xf]
      %v462 = vld [vmem:[%s454 + $0x1c] sm:$0xf]
      %v464 = vunpack.c.l.b16 %v453
      %v465 = vpack.c.b16 %v403, %v464
      %v466 = vrot.slane %v465, 1
      %v475 = vunpack.c.l.b16 %v455
      %v476 = vunpack.c.l.b16 %v456
      %v477 = vunpack.c.l.b16 %v457
      %v478 = vunpack.c.l.b16 %v458
      %v479 = vunpack.c.l.b16 %v459
      %v480 = vunpack.c.l.b16 %v460
      %v481 = vunpack.c.l.b16 %v461
      %v482 = vunpack.c.l.b16 %v462
      %v483 = vpack.c.b16 %v476, %v475
      %v484 = vpack.c.b16 %v478, %v477
      %v485 = vpack.c.b16 %v480, %v479
      %v486 = vpack.c.b16 %v482, %v481
      %v492 = vsel %vm225, %v466, 0
      %494 = vmatpush.bf16.msra.mxu0 0
      %495 = vmatpush.bf16.msra.mxu0 0
      %496 = vmatpush.bf16.msra.mxu0 0
      %497 = vmatpush.bf16.msra.mxu0 0
      %498 = vmatpush.bf16.msra.mxu0 %v486
      %499 = vmatpush.bf16.msra.mxu0 %v485
      %500 = vmatpush.bf16.msra.mxu0 %v484
      %501 = vmatpush.bf16.msra.mxu0 %v483
      %502 = vmatmul.bf16.gmra.mxu0 %v492
      %v503 = vpop.f32.mrf.mxu0
      %v504 = vadd.f32 0.0, %v503
      %v505 = vpop.f32.mrf.mxu0
      %506 = vdwg.mxu0
      %v507 = vadd.f32 %v452, %v504
      %s508 = scalar_lea.vmem %s164, 16
      %v509 = vld [vmem:[%s508] sm:$0xf]
      %s510 = scalar_lea.vmem %s1, 192
      %v511 = vld [vmem:[%s510] sm:$0xf]
      %v512 = vld [vmem:[%s510 + $0x4] sm:$0xf]
      %v513 = vld [vmem:[%s510 + $0x8] sm:$0xf]
      %v514 = vld [vmem:[%s510 + $0xc] sm:$0xf]
      %v515 = vld [vmem:[%s510 + $0x10] sm:$0xf]
      %v516 = vld [vmem:[%s510 + $0x14] sm:$0xf]
      %v517 = vld [vmem:[%s510 + $0x18] sm:$0xf]
      %v518 = vld [vmem:[%s510 + $0x1c] sm:$0xf]
      %v527 = vunpack.c.l.b16 %v511
      %v528 = vunpack.c.l.b16 %v512
      %v529 = vunpack.c.l.b16 %v513
      %v530 = vunpack.c.l.b16 %v514
      %v531 = vunpack.c.l.b16 %v515
      %v532 = vunpack.c.l.b16 %v516
      %v533 = vunpack.c.l.b16 %v517
      %v534 = vunpack.c.l.b16 %v518
      %v535 = vpack.c.b16 %v528, %v527
      %v536 = vpack.c.b16 %v530, %v529
      %v537 = vpack.c.b16 %v532, %v531
      %v538 = vpack.c.b16 %v534, %v533
      %v544 = vsel %vm225, %v509, 0
      %546 = vmatpush.bf16.msra.mxu0 0
      %547 = vmatpush.bf16.msra.mxu0 0
      %548 = vmatpush.bf16.msra.mxu0 0
      %549 = vmatpush.bf16.msra.mxu0 0
      %550 = vmatpush.bf16.msra.mxu0 %v538
      %551 = vmatpush.bf16.msra.mxu0 %v537
      %552 = vmatpush.bf16.msra.mxu0 %v536
      %553 = vmatpush.bf16.msra.mxu0 %v535
      %554 = vmatmul.bf16.gmra.mxu0 %v544
      %v555 = vpop.f32.mrf.mxu0
      %v556 = vadd.f32 0.0, %v555
      %v557 = vpop.f32.mrf.mxu0
      %558 = vdwg.mxu0
      %v559 = vadd.f32 %v507, %v556
      %v560 = vld [vmem:[%s508] sm:$0xf]
      %v561 = vld [vmem:[%s508 + $0x4] sm:$0x1]
      %s562 = scalar_lea.vmem %s1, 224
      %v563 = vld [vmem:[%s562] sm:$0xf]
      %v564 = vld [vmem:[%s562 + $0x4] sm:$0xf]
      %v565 = vld [vmem:[%s562 + $0x8] sm:$0xf]
      %v566 = vld [vmem:[%s562 + $0xc] sm:$0xf]
      %v567 = vld [vmem:[%s562 + $0x10] sm:$0xf]
      %v568 = vld [vmem:[%s562 + $0x14] sm:$0xf]
      %v569 = vld [vmem:[%s562 + $0x18] sm:$0xf]
      %v570 = vld [vmem:[%s562 + $0x1c] sm:$0xf]
      %v573 = vunpack.c.l.b16 %v560
      %v574 = vunpack.c.l.b16 %v561
      %v575 = vpack.c.b16 %v574, %v573
      %v577 = vshrl.u32 %v575, 16
      %v579 = vshll.u32 %v575, 16
      %v581 = vrot.slane %v579, 1
      %v582 = vor.u32 %v577, %v581
      %v591 = vunpack.c.l.b16 %v563
      %v592 = vunpack.c.l.b16 %v564
      %v593 = vunpack.c.l.b16 %v565
      %v594 = vunpack.c.l.b16 %v566
      %v595 = vunpack.c.l.b16 %v567
      %v596 = vunpack.c.l.b16 %v568
      %v597 = vunpack.c.l.b16 %v569
      %v598 = vunpack.c.l.b16 %v570
      %v599 = vpack.c.b16 %v592, %v591
      %v600 = vpack.c.b16 %v594, %v593
      %v601 = vpack.c.b16 %v596, %v595
      %v602 = vpack.c.b16 %v598, %v597
      %v608 = vsel %vm225, %v582, 0
      %610 = vmatpush.bf16.msra.mxu0 0
      %611 = vmatpush.bf16.msra.mxu0 0
      %612 = vmatpush.bf16.msra.mxu0 0
      %613 = vmatpush.bf16.msra.mxu0 0
      %614 = vmatpush.bf16.msra.mxu0 %v602
      %615 = vmatpush.bf16.msra.mxu0 %v601
      %616 = vmatpush.bf16.msra.mxu0 %v600
      %617 = vmatpush.bf16.msra.mxu0 %v599
      %618 = vmatmul.bf16.gmra.mxu0 %v608
      %v619 = vpop.f32.mrf.mxu0
      %v620 = vadd.f32 0.0, %v619
      %v621 = vpop.f32.mrf.mxu0
      %622 = vdwg.mxu0
      %v623 = vadd.f32 %v559, %v620
      %v624 = vld [vmem:[%s508] sm:$0xe]
      %s625 = scalar_lea.vmem %s1, 256
      %v626 = vld [vmem:[%s625] sm:$0xf]
      %v627 = vld [vmem:[%s625 + $0x4] sm:$0xf]
      %v628 = vld [vmem:[%s625 + $0x8] sm:$0xf]
      %v629 = vld [vmem:[%s625 + $0xc] sm:$0xf]
      %v630 = vld [vmem:[%s625 + $0x10] sm:$0xf]
      %v631 = vld [vmem:[%s625 + $0x14] sm:$0xf]
      %v632 = vld [vmem:[%s625 + $0x18] sm:$0xf]
      %v633 = vld [vmem:[%s625 + $0x1c] sm:$0xf]
      %v635 = vunpack.c.l.b16 %v624
      %v636 = vpack.c.b16 %v574, %v635
      %v637 = vrot.slane %v636, 1
      %v646 = vunpack.c.l.b16 %v626
      %v647 = vunpack.c.l.b16 %v627
      %v648 = vunpack.c.l.b16 %v628
      %v649 = vunpack.c.l.b16 %v629
      %v650 = vunpack.c.l.b16 %v630
      %v651 = vunpack.c.l.b16 %v631
      %v652 = vunpack.c.l.b16 %v632
      %v653 = vunpack.c.l.b16 %v633
      %v654 = vpack.c.b16 %v647, %v646
      %v655 = vpack.c.b16 %v649, %v648
      %v656 = vpack.c.b16 %v651, %v650
      %v657 = vpack.c.b16 %v653, %v652
      %v663 = vsel %vm225, %v637, 0
      %665 = vmatpush.bf16.msra.mxu0 0
      %666 = vmatpush.bf16.msra.mxu0 0
      %667 = vmatpush.bf16.msra.mxu0 0
      %668 = vmatpush.bf16.msra.mxu0 0
      %669 = vmatpush.bf16.msra.mxu0 %v657
      %670 = vmatpush.bf16.msra.mxu0 %v656
      %671 = vmatpush.bf16.msra.mxu0 %v655
      %672 = vmatpush.bf16.msra.mxu0 %v654
      %673 = vmatmul.bf16.gmra.mxu0 %v663
      %v674 = vpop.f32.mrf.mxu0
      %v675 = vadd.f32 0.0, %v674
      %v676 = vpop.f32.mrf.mxu0
      %677 = vdwg.mxu0
      %v678 = vadd.f32 %v623, %v675
      %v679 = vld [vmem:[%s2] sm:$0x1]
      %v681 = vperm.slane %v679, 0
      %v683 = vadd.f32 %v678, %v681
      %v684 = vmax.f32 %v683, 0.0
      %685 = vst.msk [vmem:[%s168] sm:$0xff] %vm225, %v684
      %p686 = scmp.lt.s32.totalorder %s14, 1
      %s687 = scalar_select %p686, %s14, 1
      %s688 = smul.addr %s687, 8
      %s689 = scalar_lea.vmem %s3, %s688
      // Predicated region
      $region33: #{cnn_encoder_forward.5} parent=31 // pred_check
        %p690 = pneg %p100
      $region34: #{cnn_encoder_forward.5} parent=31 // pred_check_branch
        %692 = sbr.rel (%p690) target = $region36
      $region35: #{cnn_encoder_forward.5} parent=31 // pred_region
        _
      $region36: #{cnn_encoder_forward.5} parent=31 // pred_fallthru
        _
    $region32: #{cnn_encoder_forward.5} parent=5 // pred_fallthru
      _
    %p693 = scmp.le.s32.totalorder 2, %s9
    // Predicated region
    $region37: #{cnn_encoder_forward.5} parent=5 // pred_check
      %p694 = pneg %p693
    $region38: #{cnn_encoder_forward.5} parent=5 // pred_check_branch
      %696 = sbr.rel (%p694) target = $region40
    $region39: #{cnn_encoder_forward.5} parent=5 // pred_region
      %s697 = ssub.s32 %s9, 2
      // Predicated region
      $region41: #{cnn_encoder_forward.5} parent=39 // pred_check
        %p698 = pneg %p106
      $region42: #{cnn_encoder_forward.5} parent=39 // pred_check_branch
        %700 = sbr.rel (%p698) target = $region44
      $region43: #{cnn_encoder_forward.5} parent=39 // pred_region
        %p701 = scmp.lt.s32.totalorder %s15, 1
        %s702 = scalar_select %p701, %s15, 1
        %s703 = smul.addr %s702, 8
        %s704 = scalar_lea.vmem %s3, %s703
      $region44: #{cnn_encoder_forward.5} parent=39 // pred_fallthru
        _
    $region40: #{cnn_encoder_forward.5} parent=5 // pred_fallthru
      _
  $region6: #{cnn_encoder_forward.5} parent=0 // loop_footer
    %s13 = sadd.s32 1, %s9
  $region7: #{cnn_encoder_forward.5} parent=0 // loop_footer_branch
    %8 = sbr.rel target = $region3
  $region8: #{cnn_encoder_forward.5} parent=0 // loop_exit
    _

</llo_original>
